<compile_context>
chip_gen: v7x
topology: tpu7x:2x2x1
jax: 0.10.0
libtpu: 0.0.40
codegen_flags: <defaults>
</compile_context>

<pallas_src>
import functools

import jax
import jax.numpy as jnp
from jax.experimental import pallas as pl
from jax.experimental.pallas import tpu as pltpu

EXPANSION = 4
BN_EPS = 1e-5
LANE = 128


def _round_up(n, m):
    return ((n + m - 1) // m) * m


def _vmem_limit_bytes():
    """Physical VMEM minus headroom for Mosaic scratch / double buffers."""
    try:
        cap = int(pltpu.get_tpu_info().vmem_capacity_bytes)
    except Exception:
        cap = 64 << 20           # conservative (v7x-sized) fallback
    return max(cap - (16 << 20), cap // 2)


# --------------------------------------------------------------------------
# Stage kernels (grid over samples; channels on sublanes, L on lanes)
# --------------------------------------------------------------------------

def _stage1_kernel(c1p, x_ref, w_ref, pre1_ref, presc_ref, s_ref, ss_ref):
    """conv1 (1x1) and projection shortcut (1x1) fused into one MXU matmul,
    plus per-channel sum / sum-of-squares accumulation for their BNs."""
    pre = jnp.dot(w_ref[...], x_ref[...], preferred_element_type=jnp.float32)
    pre1_ref[...] = pre[:c1p, :].astype(pre1_ref.dtype)
    presc_ref[...] = pre[c1p:, :].astype(presc_ref.dtype)

    @pl.when(pl.program_id(0) == 0)
    def _():
        s_ref[...] = jnp.zeros_like(s_ref)
        ss_ref[...] = jnp.zeros_like(ss_ref)

    s_ref[...] += jnp.sum(pre, axis=1, keepdims=True)
    ss_ref[...] += jnp.sum(pre * pre, axis=1, keepdims=True)


def _stage2_kernel(pre1_ref, w2_ref, scale1_ref, shift1_ref,
                   pre2_ref, s_ref, ss_ref):
    """bn1 (folded scale/shift) + ReLU, conv2 (k=3, pad=1) as three
    accumulated per-tap matmuls, plus bn2 stats accumulation."""
    h1 = jnp.maximum(
        pre1_ref[...].astype(jnp.float32) * scale1_ref[...] + shift1_ref[...],
        0.0).astype(jnp.bfloat16)
    length = h1.shape[1]
    zcol = jnp.zeros((h1.shape[0], 1), h1.dtype)
    h1p = jnp.concatenate([zcol, h1, zcol], axis=1)   # conv2 zero padding
    left = h1p[:, 0:length]                           # h1 at l-1 (0 at l=0)
    right = h1p[:, 2:length + 2]                      # h1 at l+1 (0 at l=L-1)

    pre2 = jnp.dot(w2_ref[0], left, preferred_element_type=jnp.float32)
    pre2 += jnp.dot(w2_ref[1], h1, preferred_element_type=jnp.float32)
    pre2 += jnp.dot(w2_ref[2], right, preferred_element_type=jnp.float32)
    pre2_ref[...] = pre2.astype(pre2_ref.dtype)

    @pl.when(pl.program_id(0) == 0)
    def _():
        s_ref[...] = jnp.zeros_like(s_ref)
        ss_ref[...] = jnp.zeros_like(ss_ref)

    s_ref[...] += jnp.sum(pre2, axis=1, keepdims=True)
    ss_ref[...] += jnp.sum(pre2 * pre2, axis=1, keepdims=True)


def _stage3_kernel(pre2_ref, w3_ref, scale2_ref, shift2_ref,
                   pre3_ref, s_ref, ss_ref):
    """bn2 + ReLU, conv3 (1x1), plus bn3 stats accumulation."""
    h2 = jnp.maximum(
        pre2_ref[...].astype(jnp.float32) * scale2_ref[...] + shift2_ref[...],
        0.0).astype(jnp.bfloat16)
    pre3 = jnp.dot(w3_ref[...], h2, preferred_element_type=jnp.float32)
    pre3_ref[...] = pre3.astype(pre3_ref.dtype)

    @pl.when(pl.program_id(0) == 0)
    def _():
        s_ref[...] = jnp.zeros_like(s_ref)
        ss_ref[...] = jnp.zeros_like(ss_ref)

    s_ref[...] += jnp.sum(pre3, axis=1, keepdims=True)
    ss_ref[...] += jnp.sum(pre3 * pre3, axis=1, keepdims=True)


def _stage4_kernel(pre3_ref, presc_ref, scale3_ref, shift3_ref,
                   scalesc_ref, shiftsc_ref, o_ref):
    """bn3 + shortcut bn + residual add + final ReLU (pure elementwise)."""
    main = pre3_ref[...].astype(jnp.float32) * scale3_ref[...] + shift3_ref[...]
    sc = presc_ref[...].astype(jnp.float32) * scalesc_ref[...] + shiftsc_ref[...]
    o_ref[...] = jnp.maximum(main + sc, 0.0).astype(o_ref.dtype)


# --------------------------------------------------------------------------
# Wrapper
# --------------------------------------------------------------------------

def _fold_bn(s, ss, gamma, beta, inv_n):
    """Fold training-mode BN stats + affine into per-channel scale/shift."""
    mean = s * inv_n
    var = jnp.maximum(ss * inv_n - mean * mean, 0.0)
    scale = gamma[:, None] * jax.lax.rsqrt(var + BN_EPS)
    shift = beta[:, None] - mean * scale
    return scale, shift


def bottleneck_forward(x_ncl, params):
    """x_ncl: (N, C_in, L) float32 — same layout as the PyTorch module."""
    # TODO(synk): stride != 1 and the identity (non-projection) shortcut paths
    # of the PyTorch module are not implemented (the configuration below uses
    # the projection shortcut with stride=1, as the module would).
    # TODO(synk): very long L would want an L-tile with a 1-column halo; here
    # each grid step processes one whole sample so conv2 neighbours stay local.
    # TODO(synk): per-core partial BN stats (core_parallel) for the stats
    # stages on v7x; the accumulator stages currently use a single "arbitrary"
    # grid axis.
    N, Cin, L = x_ncl.shape
    C1 = params["w1"].shape[0]
    C3 = EXPANSION * C1
    inv_n = 1.0 / float(N * L)

    cin_p = _round_up(Cin, LANE)
    c1_p = _round_up(C1, LANE)
    c3_p = _round_up(C3, LANE)
    c1sc_p = c1_p + c3_p

    def pad2(a, rows, cols):
        return jnp.pad(a, ((0, rows - a.shape[0]), (0, cols - a.shape[1])))

    def pad1(v, n):
        return jnp.pad(v, (0, n - v.shape[0]))

    # Native NCL layout; only the channel axis is zero-padded to a lane
    # multiple (padded gamma/beta are zero so padded channels stay exactly 0).
    x_p = jnp.pad(x_ncl, ((0, 0), (0, cin_p - Cin), (0, 0))).astype(jnp.bfloat16)

    # conv1 || projection-shortcut weights fused along the output-channel rows.
    w1sc = jnp.concatenate(
        [pad2(params["w1"][:, :, 0], c1_p, cin_p),
         pad2(params["wsc"][:, :, 0], c3_p, cin_p)], axis=0).astype(jnp.bfloat16)
    w2 = jnp.stack(
        [pad2(params["w2"][:, :, k], c1_p, c1_p) for k in range(3)],
        axis=0).astype(jnp.bfloat16)
    w3 = pad2(params["w3"][:, :, 0], c3_p, c1_p).astype(jnp.bfloat16)

    vmem_limit = _vmem_limit_bytes()
    cp_acc = pltpu.CompilerParams(dimension_semantics=("arbitrary",),
                                  vmem_limit_bytes=vmem_limit)
    cp_par = pltpu.CompilerParams(dimension_semantics=("parallel",),
                                  vmem_limit_bytes=vmem_limit)

    def per_sample(c):
        return pl.BlockSpec((None, c, L), lambda n: (n, 0, 0))

    def full2(shape):
        return pl.BlockSpec(shape, lambda n: (0, 0))

    def full3(shape):
        return pl.BlockSpec(shape, lambda n: (0, 0, 0))

    # ---- stage 1: conv1 || shortcut matmul + bn1/bn_sc stats ---------------
    pre1, presc, s1sc, ss1sc = pl.pallas_call(
        functools.partial(_stage1_kernel, c1_p),
        grid=(N,),
        in_specs=[per_sample(cin_p), full2((c1sc_p, cin_p))],
        out_specs=[per_sample(c1_p), per_sample(c3_p),
                   full2((c1sc_p, 1)), full2((c1sc_p, 1))],
        out_shape=[jax.ShapeDtypeStruct((N, c1_p, L), jnp.bfloat16),
                   jax.ShapeDtypeStruct((N, c3_p, L), jnp.bfloat16),
                   jax.ShapeDtypeStruct((c1sc_p, 1), jnp.float32),
                   jax.ShapeDtypeStruct((c1sc_p, 1), jnp.float32)],
        compiler_params=cp_acc,
    )(x_p, w1sc)

    scale1, shift1 = _fold_bn(s1sc[:c1_p], ss1sc[:c1_p],
                              pad1(params["g1"], c1_p),
                              pad1(params["b1"], c1_p), inv_n)
    scalesc, shiftsc = _fold_bn(s1sc[c1_p:], ss1sc[c1_p:],
                                pad1(params["gsc"], c3_p),
                                pad1(params["bsc"], c3_p), inv_n)

    # ---- stage 2: bn1 + relu, conv2 (3 taps) + bn2 stats --------------------
    pre2, s2, ss2 = pl.pallas_call(
        _stage2_kernel,
        grid=(N,),
        in_specs=[per_sample(c1_p), full3((3, c1_p, c1_p)),
                  full2((c1_p, 1)), full2((c1_p, 1))],
        out_specs=[per_sample(c1_p), full2((c1_p, 1)), full2((c1_p, 1))],
        out_shape=[jax.ShapeDtypeStruct((N, c1_p, L), jnp.bfloat16),
                   jax.ShapeDtypeStruct((c1_p, 1), jnp.float32),
                   jax.ShapeDtypeStruct((c1_p, 1), jnp.float32)],
        compiler_params=cp_acc,
    )(pre1, w2, scale1, shift1)

    scale2, shift2 = _fold_bn(s2, ss2, pad1(params["g2"], c1_p),
                              pad1(params["b2"], c1_p), inv_n)

    # ---- stage 3: bn2 + relu, conv3 + bn3 stats -----------------------------
    pre3, s3, ss3 = pl.pallas_call(
        _stage3_kernel,
        grid=(N,),
        in_specs=[per_sample(c1_p), full2((c3_p, c1_p)),
                  full2((c1_p, 1)), full2((c1_p, 1))],
        out_specs=[per_sample(c3_p), full2((c3_p, 1)), full2((c3_p, 1))],
        out_shape=[jax.ShapeDtypeStruct((N, c3_p, L), jnp.bfloat16),
                   jax.ShapeDtypeStruct((c3_p, 1), jnp.float32),
                   jax.ShapeDtypeStruct((c3_p, 1), jnp.float32)],
        compiler_params=cp_acc,
    )(pre2, w3, scale2, shift2)

    scale3, shift3 = _fold_bn(s3, ss3, pad1(params["g3"], c3_p),
                              pad1(params["b3"], c3_p), inv_n)

    # ---- stage 4: bn3 + shortcut bn + residual add + relu -------------------
    out_p = pl.pallas_call(
        _stage4_kernel,
        grid=(N,),
        in_specs=[per_sample(c3_p), per_sample(c3_p),
                  full2((c3_p, 1)), full2((c3_p, 1)),
                  full2((c3_p, 1)), full2((c3_p, 1))],
        out_specs=per_sample(c3_p),
        out_shape=jax.ShapeDtypeStruct((N, c3_p, L), jnp.bfloat16),
        compiler_params=cp_par,
    )(pre3, presc, scale3, shift3, scalesc, shiftsc)

    return out_p[:, :C3, :]            # still NCL, bf16


# --------------------------------------------------------------------------
# Params / reference / test
# --------------------------------------------------------------------------

def init_params(key, in_channels, out_channels):
    c3 = EXPANSION * out_channels
    k1, k2, k3, k4 = jax.random.split(key, 4)

    def uinit(k, shape, fan_in):
        bound = 1.0 / jnp.sqrt(jnp.float32(fan_in))
        return jax.random.uniform(k, shape, jnp.float32, -bound, bound)

    return dict(
        w1=uinit(k1, (out_channels, in_channels, 1), in_channels),
        w2=uinit(k2, (out_channels, out_channels, 3), out_channels * 3),
        w3=uinit(k3, (c3, out_channels, 1), out_channels),
        wsc=uinit(k4, (c3, in_channels, 1), in_channels),
        g1=jnp.ones((out_channels,), jnp.float32),
        b1=jnp.zeros((out_channels,), jnp.float32),
        g2=jnp.ones((out_channels,), jnp.float32),
        b2=jnp.zeros((out_channels,), jnp.float32),
        g3=jnp.ones((c3,), jnp.float32),
        b3=jnp.zeros((c3,), jnp.float32),
        gsc=jnp.ones((c3,), jnp.float32),
        bsc=jnp.zeros((c3,), jnp.float32),
    )


def reference_forward(x, p):
    """Pure-JAX f32 reference mirroring the PyTorch forward (training-mode BN)."""
    def conv(x, w, stride=1, pad=0):
        return jax.lax.conv_general_dilated(
            x, w, (stride,), [(pad, pad)],
            dimension_numbers=("NCH", "OIH", "NCH"))

    def bn(y, g, b):
        mean = jnp.mean(y, axis=(0, 2), keepdims=True)
        var = jnp.mean((y - mean) ** 2, axis=(0, 2), keepdims=True)
        return ((y - mean) * jax.lax.rsqrt(var + BN_EPS)
                * g[None, :, None] + b[None, :, None])

    out = jax.nn.relu(bn(conv(x, p["w1"]), p["g1"], p["b1"]))
    out = jax.nn.relu(bn(conv(out, p["w2"], pad=1), p["g2"], p["b2"]))
    out = bn(conv(out, p["w3"]), p["g3"], p["b3"])
    out = out + bn(conv(x, p["wsc"]), p["gsc"], p["bsc"])
    return jax.nn.relu(out)


if __name__ == "__main__":
    key = jax.random.PRNGKey(0)
    kx, kp = jax.random.split(key)

    N, C_IN, L = 2, 4, 16          # batch, in_channels, sequence length
    OUT_CH = 4                     # bottleneck width; output channels = 4*OUT_CH

    x = jax.random.normal(kx, (N, C_IN, L), jnp.float32)
    params = init_params(kp, C_IN, OUT_CH)

    fwd = jax.jit(bottleneck_forward)
    out = jax.block_until_ready(fwd(x, params)).astype(jnp.float32)
    ref = jax.block_until_ready(reference_forward(x, params))

    assert out.shape == (N, EXPANSION * OUT_CH, L), out.shape
    # Tolerance sized for bf16 operands / bf16 intermediates vs. f32 reference.
    assert jnp.allclose(out, ref, rtol=5e-2, atol=5e-2), (
        float(jnp.max(jnp.abs(out - ref))))

    print("KERNEL_OK")
</pallas_src>

<mosaic_0001>
module attributes {stable_mosaic.version = 11 : i64} {
  func.func @_stage1_kernel(%arg0: i32, %arg1: memref<1x128x16xbf16, #tpu.memory_space<vmem>>, %arg2: memref<256x128xbf16, #tpu.memory_space<vmem>>, %arg3: memref<1x128x16xbf16, #tpu.memory_space<vmem>>, %arg4: memref<1x128x16xbf16, #tpu.memory_space<vmem>>, %arg5: memref<256x1xf32, #tpu.memory_space<vmem>>, %arg6: memref<256x1xf32, #tpu.memory_space<vmem>>) attributes {dimension_semantics = [#tpu.dimension_semantics<arbitrary>], iteration_bounds = array<i64: 2>, scalar_prefetch = 0 : i64, scratch_operands = 0 : i64, tpu.core_type = #tpu.core_type<tc>, window_params = [{transform_indices = @transform_0, window_bounds = array<i64: 1, 128, 16>}, {pipeline_mode = #tpu.pipeline_mode<synchronous>, transform_indices = @transform_1, window_bounds = array<i64: 256, 128>}, {transform_indices = @transform_2, window_bounds = array<i64: 1, 128, 16>}, {transform_indices = @transform_3, window_bounds = array<i64: 1, 128, 16>}, {pipeline_mode = #tpu.pipeline_mode<synchronous>, transform_indices = @transform_4, window_bounds = array<i64: 256, 1>}, {pipeline_mode = #tpu.pipeline_mode<synchronous>, transform_indices = @transform_5, window_bounds = array<i64: 256, 1>}]} {
    %c0 = arith.constant 0 : index
    %c0_0 = arith.constant 0 : index
    %0 = vector.load %arg2[%c0, %c0_0] : memref<256x128xbf16, #tpu.memory_space<vmem>>, vector<256x128xbf16>
    %c0_1 = arith.constant 0 : index
    %c0_2 = arith.constant 0 : index
    %c0_3 = arith.constant 0 : index
    %1 = vector.load %arg1[%c0_1, %c0_2, %c0_3] : memref<1x128x16xbf16, #tpu.memory_space<vmem>>, vector<1x128x16xbf16>
    %2 = vector.shape_cast %1 : vector<1x128x16xbf16> to vector<128x16xbf16>
    %cst = arith.constant dense<0.000000e+00> : vector<256x16xf32>
    %3 = tpu.matmul %0, %2, %cst {dimension_numbers = #tpu.dot_dimension_numbers<[1], [0], [0], [1], [0, 0, 1, 1], [], []>} : vector<256x128xbf16>, vector<128x16xbf16>, vector<256x16xf32> -> vector<256x16xf32>
    %4 = vector.extract_strided_slice %3 {offsets = [0, 0], sizes = [128, 16], strides = [1, 1]} : vector<256x16xf32> to vector<128x16xf32>
    %5 = arith.truncf %4 : vector<128x16xf32> to vector<128x16xbf16>
    %c0_4 = arith.constant 0 : index
    %c0_5 = arith.constant 0 : index
    %c0_6 = arith.constant 0 : index
    %6 = vector.load %arg3[%c0_4, %c0_5, %c0_6] : memref<1x128x16xbf16, #tpu.memory_space<vmem>>, vector<1x128x16xbf16>
    %7 = vector.shape_cast %6 : vector<1x128x16xbf16> to vector<128x16xbf16>
    %8 = vector.shape_cast %5 : vector<128x16xbf16> to vector<1x128x16xbf16>
    tpu.vector_store %arg3[%c0_4, %c0_5, %c0_6], %8 {strides = array<i32>} : memref<1x128x16xbf16, #tpu.memory_space<vmem>>, vector<1x128x16xbf16>,
    %9 = vector.extract_strided_slice %3 {offsets = [128, 0], sizes = [128, 16], strides = [1, 1]} : vector<256x16xf32> to vector<128x16xf32>
    %10 = arith.truncf %9 : vector<128x16xf32> to vector<128x16xbf16>
    %c0_7 = arith.constant 0 : index
    %c0_8 = arith.constant 0 : index
    %c0_9 = arith.constant 0 : index
    %11 = vector.load %arg4[%c0_7, %c0_8, %c0_9] : memref<1x128x16xbf16, #tpu.memory_space<vmem>>, vector<1x128x16xbf16>
    %12 = vector.shape_cast %11 : vector<1x128x16xbf16> to vector<128x16xbf16>
    %13 = vector.shape_cast %10 : vector<128x16xbf16> to vector<1x128x16xbf16>
    tpu.vector_store %arg4[%c0_7, %c0_8, %c0_9], %13 {strides = array<i32>} : memref<1x128x16xbf16, #tpu.memory_space<vmem>>, vector<1x128x16xbf16>,
    %c0_i32 = arith.constant 0 : i32
    %14 = arith.cmpi eq, %arg0, %c0_i32 : i32
    %15 = arith.extui %14 : i1 to i32
    %c0_i32_10 = arith.constant 0 : i32
    %16 = arith.cmpi ne, %15, %c0_i32_10 : i32
    scf.if %16 {
      %cst_21 = arith.constant 0.000000e+00 : f32
      %28 = vector.broadcast %cst_21 : f32 to vector<256x1xf32>
      %c0_22 = arith.constant 0 : index
      %c0_23 = arith.constant 0 : index
      %29 = vector.load %arg5[%c0_22, %c0_23] : memref<256x1xf32, #tpu.memory_space<vmem>>, vector<256x1xf32>
      tpu.vector_store %arg5[%c0_22, %c0_23], %28 {strides = array<i32>} : memref<256x1xf32, #tpu.memory_space<vmem>>, vector<256x1xf32>,
      %cst_24 = arith.constant 0.000000e+00 : f32
      %30 = vector.broadcast %cst_24 : f32 to vector<256x1xf32>
      %c0_25 = arith.constant 0 : index
      %c0_26 = arith.constant 0 : index
      %31 = vector.load %arg6[%c0_25, %c0_26] : memref<256x1xf32, #tpu.memory_space<vmem>>, vector<256x1xf32>
      tpu.vector_store %arg6[%c0_25, %c0_26], %30 {strides = array<i32>} : memref<256x1xf32, #tpu.memory_space<vmem>>, vector<256x1xf32>,
    } else {
    }
    %c0_11 = arith.constant 0 : index
    %c0_12 = arith.constant 0 : index
    %17 = vector.load %arg5[%c0_11, %c0_12] : memref<256x1xf32, #tpu.memory_space<vmem>>, vector<256x1xf32>
    %cst_13 = arith.constant dense<0.000000e+00> : vector<256xf32>
    %18 = vector.multi_reduction <add>, %3, %cst_13 [1] : vector<256x16xf32> to vector<256xf32>
    %19 = vector.shape_cast %18 : vector<256xf32> to vector<256x1xf32>
    %20 = arith.addf %17, %19 : vector<256x1xf32>
    %c0_14 = arith.constant 0 : index
    %c0_15 = arith.constant 0 : index
    %21 = vector.load %arg5[%c0_14, %c0_15] : memref<256x1xf32, #tpu.memory_space<vmem>>, vector<256x1xf32>
    tpu.vector_store %arg5[%c0_14, %c0_15], %20 {strides = array<i32>} : memref<256x1xf32, #tpu.memory_space<vmem>>, vector<256x1xf32>,
    %c0_16 = arith.constant 0 : index
    %c0_17 = arith.constant 0 : index
    %22 = vector.load %arg6[%c0_16, %c0_17] : memref<256x1xf32, #tpu.memory_space<vmem>>, vector<256x1xf32>
    %23 = arith.mulf %3, %3 : vector<256x16xf32>
    %cst_18 = arith.constant dense<0.000000e+00> : vector<256xf32>
    %24 = vector.multi_reduction <add>, %23, %cst_18 [1] : vector<256x16xf32> to vector<256xf32>
    %25 = vector.shape_cast %24 : vector<256xf32> to vector<256x1xf32>
    %26 = arith.addf %22, %25 : vector<256x1xf32>
    %c0_19 = arith.constant 0 : index
    %c0_20 = arith.constant 0 : index
    %27 = vector.load %arg6[%c0_19, %c0_20] : memref<256x1xf32, #tpu.memory_space<vmem>>, vector<256x1xf32>
    tpu.vector_store %arg6[%c0_19, %c0_20], %26 {strides = array<i32>} : memref<256x1xf32, #tpu.memory_space<vmem>>, vector<256x1xf32>,
    return
  }
  func.func @transform_0(%arg0: i32) -> (i32, i32, i32) {
    %c0_i32 = arith.constant 0 : i32
    %c0_i32_0 = arith.constant 0 : i32
    %c0_i32_1 = arith.constant 0 : i32
    return %arg0, %c0_i32, %c0_i32_0 : i32, i32, i32
  }
  func.func @transform_1(%arg0: i32) -> (i32, i32) {
    %c0_i32 = arith.constant 0 : i32
    %c0_i32_0 = arith.constant 0 : i32
    %c0_i32_1 = arith.constant 0 : i32
    return %c0_i32, %c0_i32_0 : i32, i32
  }
  func.func @transform_2(%arg0: i32) -> (i32, i32, i32) {
    %c0_i32 = arith.constant 0 : i32
    %c0_i32_0 = arith.constant 0 : i32
    %c0_i32_1 = arith.constant 0 : i32
    return %arg0, %c0_i32, %c0_i32_0 : i32, i32, i32
  }
  func.func @transform_3(%arg0: i32) -> (i32, i32, i32) {
    %c0_i32 = arith.constant 0 : i32
    %c0_i32_0 = arith.constant 0 : i32
    %c0_i32_1 = arith.constant 0 : i32
    return %arg0, %c0_i32, %c0_i32_0 : i32, i32, i32
  }
  func.func @transform_4(%arg0: i32) -> (i32, i32) {
    %c0_i32 = arith.constant 0 : i32
    %c0_i32_0 = arith.constant 0 : i32
    %c0_i32_1 = arith.constant 0 : i32
    return %c0_i32, %c0_i32_0 : i32, i32
  }
  func.func @transform_5(%arg0: i32) -> (i32, i32) {
    %c0_i32 = arith.constant 0 : i32
    %c0_i32_0 = arith.constant 0 : i32
    %c0_i32_1 = arith.constant 0 : i32
    return %c0_i32, %c0_i32_0 : i32, i32
  }
}

module attributes {stable_mosaic.version = 11 : i64} {
  func.func @_stage2_kernel(%arg0: i32, %arg1: memref<1x128x16xbf16, #tpu.memory_space<vmem>>, %arg2: memref<3x128x128xbf16, #tpu.memory_space<vmem>>, %arg3: memref<128x1xf32, #tpu.memory_space<vmem>>, %arg4: memref<128x1xf32, #tpu.memory_space<vmem>>, %arg5: memref<1x128x16xbf16, #tpu.memory_space<vmem>>, %arg6: memref<128x1xf32, #tpu.memory_space<vmem>>, %arg7: memref<128x1xf32, #tpu.memory_space<vmem>>) attributes {dimension_semantics = [#tpu.dimension_semantics<arbitrary>], iteration_bounds = array<i64: 2>, scalar_prefetch = 0 : i64, scratch_operands = 0 : i64, tpu.core_type = #tpu.core_type<tc>, window_params = [{transform_indices = @transform_0, window_bounds = array<i64: 1, 128, 16>}, {pipeline_mode = #tpu.pipeline_mode<synchronous>, transform_indices = @transform_1, window_bounds = array<i64: 3, 128, 128>}, {pipeline_mode = #tpu.pipeline_mode<synchronous>, transform_indices = @transform_2, window_bounds = array<i64: 128, 1>}, {pipeline_mode = #tpu.pipeline_mode<synchronous>, transform_indices = @transform_3, window_bounds = array<i64: 128, 1>}, {transform_indices = @transform_4, window_bounds = array<i64: 1, 128, 16>}, {pipeline_mode = #tpu.pipeline_mode<synchronous>, transform_indices = @transform_5, window_bounds = array<i64: 128, 1>}, {pipeline_mode = #tpu.pipeline_mode<synchronous>, transform_indices = @transform_6, window_bounds = array<i64: 128, 1>}]} {
    %c0 = arith.constant 0 : index
    %c0_0 = arith.constant 0 : index
    %c0_1 = arith.constant 0 : index
    %0 = vector.load %arg1[%c0, %c0_0, %c0_1] : memref<1x128x16xbf16, #tpu.memory_space<vmem>>, vector<1x128x16xbf16>
    %1 = vector.shape_cast %0 : vector<1x128x16xbf16> to vector<128x16xbf16>
    %2 = arith.extf %1 : vector<128x16xbf16> to vector<128x16xf32>
    %c0_2 = arith.constant 0 : index
    %c0_3 = arith.constant 0 : index
    %3 = vector.load %arg3[%c0_2, %c0_3] : memref<128x1xf32, #tpu.memory_space<vmem>>, vector<128x1xf32>
    %4 = vector.broadcast %3 : vector<128x1xf32> to vector<128x16xf32>
    %5 = arith.mulf %2, %4 : vector<128x16xf32>
    %c0_4 = arith.constant 0 : index
    %c0_5 = arith.constant 0 : index
    %6 = vector.load %arg4[%c0_4, %c0_5] : memref<128x1xf32, #tpu.memory_space<vmem>>, vector<128x1xf32>
    %7 = vector.broadcast %6 : vector<128x1xf32> to vector<128x16xf32>
    %8 = arith.addf %5, %7 : vector<128x16xf32>
    %cst = arith.constant 0.000000e+00 : f32
    %9 = vector.broadcast %cst : f32 to vector<128x16xf32>
    %10 = arith.maximumf %8, %9 : vector<128x16xf32>
    %11 = arith.truncf %10 : vector<128x16xf32> to vector<128x16xbf16>
    %cst_6 = arith.constant 0.000000e+00 : bf16
    %12 = vector.broadcast %cst_6 : bf16 to vector<128x1xbf16>
    %13 = tpu.concatenate %12, %11, %12 in 1 : vector<128x1xbf16>, vector<128x16xbf16>, vector<128x1xbf16> -> vector<128x18xbf16>
    %14 = vector.extract_strided_slice %13 {offsets = [0, 0], sizes = [128, 16], strides = [1, 1]} : vector<128x18xbf16> to vector<128x16xbf16>
    %15 = vector.extract_strided_slice %13 {offsets = [0, 2], sizes = [128, 16], strides = [1, 1]} : vector<128x18xbf16> to vector<128x16xbf16>
    %c0_7 = arith.constant 0 : index
    %c0_8 = arith.constant 0 : index
    %c0_9 = arith.constant 0 : index
    %16 = vector.load %arg2[%c0_7, %c0_8, %c0_9] : memref<3x128x128xbf16, #tpu.memory_space<vmem>>, vector<1x128x128xbf16>
    %17 = vector.shape_cast %16 : vector<1x128x128xbf16> to vector<128x128xbf16>
    %cst_10 = arith.constant dense<0.000000e+00> : vector<128x16xf32>
    %18 = tpu.matmul %17, %14, %cst_10 {dimension_numbers = #tpu.dot_dimension_numbers<[1], [0], [0], [1], [0, 0, 1, 1], [], []>} : vector<128x128xbf16>, vector<128x16xbf16>, vector<128x16xf32> -> vector<128x16xf32>
    %c1 = arith.constant 1 : index
    %c0_11 = arith.constant 0 : index
    %c0_12 = arith.constant 0 : index
    %19 = vector.load %arg2[%c1, %c0_11, %c0_12] : memref<3x128x128xbf16, #tpu.memory_space<vmem>>, vector<1x128x128xbf16>
    %20 = vector.shape_cast %19 : vector<1x128x128xbf16> to vector<128x128xbf16>
    %cst_13 = arith.constant dense<0.000000e+00> : vector<128x16xf32>
    %21 = tpu.matmul %20, %11, %cst_13 {dimension_numbers = #tpu.dot_dimension_numbers<[1], [0], [0], [1], [0, 0, 1, 1], [], []>} : vector<128x128xbf16>, vector<128x16xbf16>, vector<128x16xf32> -> vector<128x16xf32>
    %22 = arith.addf %18, %21 : vector<128x16xf32>
    %c2 = arith.constant 2 : index
    %c0_14 = arith.constant 0 : index
    %c0_15 = arith.constant 0 : index
    %23 = vector.load %arg2[%c2, %c0_14, %c0_15] : memref<3x128x128xbf16, #tpu.memory_space<vmem>>, vector<1x128x128xbf16>
    %24 = vector.shape_cast %23 : vector<1x128x128xbf16> to vector<128x128xbf16>
    %cst_16 = arith.constant dense<0.000000e+00> : vector<128x16xf32>
    %25 = tpu.matmul %24, %15, %cst_16 {dimension_numbers = #tpu.dot_dimension_numbers<[1], [0], [0], [1], [0, 0, 1, 1], [], []>} : vector<128x128xbf16>, vector<128x16xbf16>, vector<128x16xf32> -> vector<128x16xf32>
    %26 = arith.addf %22, %25 : vector<128x16xf32>
    %27 = arith.truncf %26 : vector<128x16xf32> to vector<128x16xbf16>
    %c0_17 = arith.constant 0 : index
    %c0_18 = arith.constant 0 : index
    %c0_19 = arith.constant 0 : index
    %28 = vector.load %arg5[%c0_17, %c0_18, %c0_19] : memref<1x128x16xbf16, #tpu.memory_space<vmem>>, vector<1x128x16xbf16>
    %29 = vector.shape_cast %28 : vector<1x128x16xbf16> to vector<128x16xbf16>
    %30 = vector.shape_cast %27 : vector<128x16xbf16> to vector<1x128x16xbf16>
    tpu.vector_store %arg5[%c0_17, %c0_18, %c0_19], %30 {strides = array<i32>} : memref<1x128x16xbf16, #tpu.memory_space<vmem>>, vector<1x128x16xbf16>,
    %c0_i32 = arith.constant 0 : i32
    %31 = arith.cmpi eq, %arg0, %c0_i32 : i32
    %32 = arith.extui %31 : i1 to i32
    %c0_i32_20 = arith.constant 0 : i32
    %33 = arith.cmpi ne, %32, %c0_i32_20 : i32
    scf.if %33 {
      %cst_31 = arith.constant 0.000000e+00 : f32
      %45 = vector.broadcast %cst_31 : f32 to vector<128x1xf32>
      %c0_32 = arith.constant 0 : index
      %c0_33 = arith.constant 0 : index
      %46 = vector.load %arg6[%c0_32, %c0_33] : memref<128x1xf32, #tpu.memory_space<vmem>>, vector<128x1xf32>
      tpu.vector_store %arg6[%c0_32, %c0_33], %45 {strides = array<i32>} : memref<128x1xf32, #tpu.memory_space<vmem>>, vector<128x1xf32>,
      %cst_34 = arith.constant 0.000000e+00 : f32
      %47 = vector.broadcast %cst_34 : f32 to vector<128x1xf32>
      %c0_35 = arith.constant 0 : index
      %c0_36 = arith.constant 0 : index
      %48 = vector.load %arg7[%c0_35, %c0_36] : memref<128x1xf32, #tpu.memory_space<vmem>>, vector<128x1xf32>
      tpu.vector_store %arg7[%c0_35, %c0_36], %47 {strides = array<i32>} : memref<128x1xf32, #tpu.memory_space<vmem>>, vector<128x1xf32>,
    } else {
    }
    %c0_21 = arith.constant 0 : index
    %c0_22 = arith.constant 0 : index
    %34 = vector.load %arg6[%c0_21, %c0_22] : memref<128x1xf32, #tpu.memory_space<vmem>>, vector<128x1xf32>
    %cst_23 = arith.constant dense<0.000000e+00> : vector<128xf32>
    %35 = vector.multi_reduction <add>, %26, %cst_23 [1] : vector<128x16xf32> to vector<128xf32>
    %36 = vector.shape_cast %35 : vector<128xf32> to vector<128x1xf32>
    %37 = arith.addf %34, %36 : vector<128x1xf32>
    %c0_24 = arith.constant 0 : index
    %c0_25 = arith.constant 0 : index
    %38 = vector.load %arg6[%c0_24, %c0_25] : memref<128x1xf32, #tpu.memory_space<vmem>>, vector<128x1xf32>
    tpu.vector_store %arg6[%c0_24, %c0_25], %37 {strides = array<i32>} : memref<128x1xf32, #tpu.memory_space<vmem>>, vector<128x1xf32>,
    %c0_26 = arith.constant 0 : index
    %c0_27 = arith.constant 0 : index
    %39 = vector.load %arg7[%c0_26, %c0_27] : memref<128x1xf32, #tpu.memory_space<vmem>>, vector<128x1xf32>
    %40 = arith.mulf %26, %26 : vector<128x16xf32>
    %cst_28 = arith.constant dense<0.000000e+00> : vector<128xf32>
    %41 = vector.multi_reduction <add>, %40, %cst_28 [1] : vector<128x16xf32> to vector<128xf32>
    %42 = vector.shape_cast %41 : vector<128xf32> to vector<128x1xf32>
    %43 = arith.addf %39, %42 : vector<128x1xf32>
    %c0_29 = arith.constant 0 : index
    %c0_30 = arith.constant 0 : index
    %44 = vector.load %arg7[%c0_29, %c0_30] : memref<128x1xf32, #tpu.memory_space<vmem>>, vector<128x1xf32>
    tpu.vector_store %arg7[%c0_29, %c0_30], %43 {strides = array<i32>} : memref<128x1xf32, #tpu.memory_space<vmem>>, vector<128x1xf32>,
    return
  }
  func.func @transform_0(%arg0: i32) -> (i32, i32, i32) {
    %c0_i32 = arith.constant 0 : i32
    %c0_i32_0 = arith.constant 0 : i32
    %c0_i32_1 = arith.constant 0 : i32
    return %arg0, %c0_i32, %c0_i32_0 : i32, i32, i32
  }
  func.func @transform_1(%arg0: i32) -> (i32, i32, i32) {
    %c0_i32 = arith.constant 0 : i32
    %c0_i32_0 = arith.constant 0 : i32
    %c0_i32_1 = arith.constant 0 : i32
    %c0_i32_2 = arith.constant 0 : i32
    return %c0_i32, %c0_i32_0, %c0_i32_1 : i32, i32, i32
  }
  func.func @transform_2(%arg0: i32) -> (i32, i32) {
    %c0_i32 = arith.constant 0 : i32
    %c0_i32_0 = arith.constant 0 : i32
    %c0_i32_1 = arith.constant 0 : i32
    return %c0_i32, %c0_i32_0 : i32, i32
  }
  func.func @transform_3(%arg0: i32) -> (i32, i32) {
    %c0_i32 = arith.constant 0 : i32
    %c0_i32_0 = arith.constant 0 : i32
    %c0_i32_1 = arith.constant 0 : i32
    return %c0_i32, %c0_i32_0 : i32, i32
  }
  func.func @transform_4(%arg0: i32) -> (i32, i32, i32) {
    %c0_i32 = arith.constant 0 : i32
    %c0_i32_0 = arith.constant 0 : i32
    %c0_i32_1 = arith.constant 0 : i32
    return %arg0, %c0_i32, %c0_i32_0 : i32, i32, i32
  }
  func.func @transform_5(%arg0: i32) -> (i32, i32) {
    %c0_i32 = arith.constant 0 : i32
    %c0_i32_0 = arith.constant 0 : i32
    %c0_i32_1 = arith.constant 0 : i32
    return %c0_i32, %c0_i32_0 : i32, i32
  }
  func.func @transform_6(%arg0: i32) -> (i32, i32) {
    %c0_i32 = arith.constant 0 : i32
    %c0_i32_0 = arith.constant 0 : i32
    %c0_i32_1 = arith.constant 0 : i32
    return %c0_i32, %c0_i32_0 : i32, i32
  }
}

module attributes {stable_mosaic.version = 11 : i64} {
  func.func @_stage3_kernel(%arg0: i32, %arg1: memref<1x128x16xbf16, #tpu.memory_space<vmem>>, %arg2: memref<128x128xbf16, #tpu.memory_space<vmem>>, %arg3: memref<128x1xf32, #tpu.memory_space<vmem>>, %arg4: memref<128x1xf32, #tpu.memory_space<vmem>>, %arg5: memref<1x128x16xbf16, #tpu.memory_space<vmem>>, %arg6: memref<128x1xf32, #tpu.memory_space<vmem>>, %arg7: memref<128x1xf32, #tpu.memory_space<vmem>>) attributes {dimension_semantics = [#tpu.dimension_semantics<arbitrary>], iteration_bounds = array<i64: 2>, scalar_prefetch = 0 : i64, scratch_operands = 0 : i64, tpu.core_type = #tpu.core_type<tc>, window_params = [{transform_indices = @transform_0, window_bounds = array<i64: 1, 128, 16>}, {pipeline_mode = #tpu.pipeline_mode<synchronous>, transform_indices = @transform_1, window_bounds = array<i64: 128, 128>}, {pipeline_mode = #tpu.pipeline_mode<synchronous>, transform_indices = @transform_2, window_bounds = array<i64: 128, 1>}, {pipeline_mode = #tpu.pipeline_mode<synchronous>, transform_indices = @transform_3, window_bounds = array<i64: 128, 1>}, {transform_indices = @transform_4, window_bounds = array<i64: 1, 128, 16>}, {pipeline_mode = #tpu.pipeline_mode<synchronous>, transform_indices = @transform_5, window_bounds = array<i64: 128, 1>}, {pipeline_mode = #tpu.pipeline_mode<synchronous>, transform_indices = @transform_6, window_bounds = array<i64: 128, 1>}]} {
    %c0 = arith.constant 0 : index
    %c0_0 = arith.constant 0 : index
    %c0_1 = arith.constant 0 : index
    %0 = vector.load %arg1[%c0, %c0_0, %c0_1] : memref<1x128x16xbf16, #tpu.memory_space<vmem>>, vector<1x128x16xbf16>
    %1 = vector.shape_cast %0 : vector<1x128x16xbf16> to vector<128x16xbf16>
    %2 = arith.extf %1 : vector<128x16xbf16> to vector<128x16xf32>
    %c0_2 = arith.constant 0 : index
    %c0_3 = arith.constant 0 : index
    %3 = vector.load %arg3[%c0_2, %c0_3] : memref<128x1xf32, #tpu.memory_space<vmem>>, vector<128x1xf32>
    %4 = vector.broadcast %3 : vector<128x1xf32> to vector<128x16xf32>
    %5 = arith.mulf %2, %4 : vector<128x16xf32>
    %c0_4 = arith.constant 0 : index
    %c0_5 = arith.constant 0 : index
    %6 = vector.load %arg4[%c0_4, %c0_5] : memref<128x1xf32, #tpu.memory_space<vmem>>, vector<128x1xf32>
    %7 = vector.broadcast %6 : vector<128x1xf32> to vector<128x16xf32>
    %8 = arith.addf %5, %7 : vector<128x16xf32>
    %cst = arith.constant 0.000000e+00 : f32
    %9 = vector.broadcast %cst : f32 to vector<128x16xf32>
    %10 = arith.maximumf %8, %9 : vector<128x16xf32>
    %11 = arith.truncf %10 : vector<128x16xf32> to vector<128x16xbf16>
    %c0_6 = arith.constant 0 : index
    %c0_7 = arith.constant 0 : index
    %12 = vector.load %arg2[%c0_6, %c0_7] : memref<128x128xbf16, #tpu.memory_space<vmem>>, vector<128x128xbf16>
    %cst_8 = arith.constant dense<0.000000e+00> : vector<128x16xf32>
    %13 = tpu.matmul %12, %11, %cst_8 {dimension_numbers = #tpu.dot_dimension_numbers<[1], [0], [0], [1], [0, 0, 1, 1], [], []>} : vector<128x128xbf16>, vector<128x16xbf16>, vector<128x16xf32> -> vector<128x16xf32>
    %14 = arith.truncf %13 : vector<128x16xf32> to vector<128x16xbf16>
    %c0_9 = arith.constant 0 : index
    %c0_10 = arith.constant 0 : index
    %c0_11 = arith.constant 0 : index
    %15 = vector.load %arg5[%c0_9, %c0_10, %c0_11] : memref<1x128x16xbf16, #tpu.memory_space<vmem>>, vector<1x128x16xbf16>
    %16 = vector.shape_cast %15 : vector<1x128x16xbf16> to vector<128x16xbf16>
    %17 = vector.shape_cast %14 : vector<128x16xbf16> to vector<1x128x16xbf16>
    tpu.vector_store %arg5[%c0_9, %c0_10, %c0_11], %17 {strides = array<i32>} : memref<1x128x16xbf16, #tpu.memory_space<vmem>>, vector<1x128x16xbf16>,
    %c0_i32 = arith.constant 0 : i32
    %18 = arith.cmpi eq, %arg0, %c0_i32 : i32
    %19 = arith.extui %18 : i1 to i32
    %c0_i32_12 = arith.constant 0 : i32
    %20 = arith.cmpi ne, %19, %c0_i32_12 : i32
    scf.if %20 {
      %cst_23 = arith.constant 0.000000e+00 : f32
      %32 = vector.broadcast %cst_23 : f32 to vector<128x1xf32>
      %c0_24 = arith.constant 0 : index
      %c0_25 = arith.constant 0 : index
      %33 = vector.load %arg6[%c0_24, %c0_25] : memref<128x1xf32, #tpu.memory_space<vmem>>, vector<128x1xf32>
      tpu.vector_store %arg6[%c0_24, %c0_25], %32 {strides = array<i32>} : memref<128x1xf32, #tpu.memory_space<vmem>>, vector<128x1xf32>,
      %cst_26 = arith.constant 0.000000e+00 : f32
      %34 = vector.broadcast %cst_26 : f32 to vector<128x1xf32>
      %c0_27 = arith.constant 0 : index
      %c0_28 = arith.constant 0 : index
      %35 = vector.load %arg7[%c0_27, %c0_28] : memref<128x1xf32, #tpu.memory_space<vmem>>, vector<128x1xf32>
      tpu.vector_store %arg7[%c0_27, %c0_28], %34 {strides = array<i32>} : memref<128x1xf32, #tpu.memory_space<vmem>>, vector<128x1xf32>,
    } else {
    }
    %c0_13 = arith.constant 0 : index
    %c0_14 = arith.constant 0 : index
    %21 = vector.load %arg6[%c0_13, %c0_14] : memref<128x1xf32, #tpu.memory_space<vmem>>, vector<128x1xf32>
    %cst_15 = arith.constant dense<0.000000e+00> : vector<128xf32>
    %22 = vector.multi_reduction <add>, %13, %cst_15 [1] : vector<128x16xf32> to vector<128xf32>
    %23 = vector.shape_cast %22 : vector<128xf32> to vector<128x1xf32>
    %24 = arith.addf %21, %23 : vector<128x1xf32>
    %c0_16 = arith.constant 0 : index
    %c0_17 = arith.constant 0 : index
    %25 = vector.load %arg6[%c0_16, %c0_17] : memref<128x1xf32, #tpu.memory_space<vmem>>, vector<128x1xf32>
    tpu.vector_store %arg6[%c0_16, %c0_17], %24 {strides = array<i32>} : memref<128x1xf32, #tpu.memory_space<vmem>>, vector<128x1xf32>,
    %c0_18 = arith.constant 0 : index
    %c0_19 = arith.constant 0 : index
    %26 = vector.load %arg7[%c0_18, %c0_19] : memref<128x1xf32, #tpu.memory_space<vmem>>, vector<128x1xf32>
    %27 = arith.mulf %13, %13 : vector<128x16xf32>
    %cst_20 = arith.constant dense<0.000000e+00> : vector<128xf32>
    %28 = vector.multi_reduction <add>, %27, %cst_20 [1] : vector<128x16xf32> to vector<128xf32>
    %29 = vector.shape_cast %28 : vector<128xf32> to vector<128x1xf32>
    %30 = arith.addf %26, %29 : vector<128x1xf32>
    %c0_21 = arith.constant 0 : index
    %c0_22 = arith.constant 0 : index
    %31 = vector.load %arg7[%c0_21, %c0_22] : memref<128x1xf32, #tpu.memory_space<vmem>>, vector<128x1xf32>
    tpu.vector_store %arg7[%c0_21, %c0_22], %30 {strides = array<i32>} : memref<128x1xf32, #tpu.memory_space<vmem>>, vector<128x1xf32>,
    return
  }
  func.func @transform_0(%arg0: i32) -> (i32, i32, i32) {
    %c0_i32 = arith.constant 0 : i32
    %c0_i32_0 = arith.constant 0 : i32
    %c0_i32_1 = arith.constant 0 : i32
    return %arg0, %c0_i32, %c0_i32_0 : i32, i32, i32
  }
  func.func @transform_1(%arg0: i32) -> (i32, i32) {
    %c0_i32 = arith.constant 0 : i32
    %c0_i32_0 = arith.constant 0 : i32
    %c0_i32_1 = arith.constant 0 : i32
    return %c0_i32, %c0_i32_0 : i32, i32
  }
  func.func @transform_2(%arg0: i32) -> (i32, i32) {
    %c0_i32 = arith.constant 0 : i32
    %c0_i32_0 = arith.constant 0 : i32
    %c0_i32_1 = arith.constant 0 : i32
    return %c0_i32, %c0_i32_0 : i32, i32
  }
  func.func @transform_3(%arg0: i32) -> (i32, i32) {
    %c0_i32 = arith.constant 0 : i32
    %c0_i32_0 = arith.constant 0 : i32
    %c0_i32_1 = arith.constant 0 : i32
    return %c0_i32, %c0_i32_0 : i32, i32
  }
  func.func @transform_4(%arg0: i32) -> (i32, i32, i32) {
    %c0_i32 = arith.constant 0 : i32
    %c0_i32_0 = arith.constant 0 : i32
    %c0_i32_1 = arith.constant 0 : i32
    return %arg0, %c0_i32, %c0_i32_0 : i32, i32, i32
  }
  func.func @transform_5(%arg0: i32) -> (i32, i32) {
    %c0_i32 = arith.constant 0 : i32
    %c0_i32_0 = arith.constant 0 : i32
    %c0_i32_1 = arith.constant 0 : i32
    return %c0_i32, %c0_i32_0 : i32, i32
  }
  func.func @transform_6(%arg0: i32) -> (i32, i32) {
    %c0_i32 = arith.constant 0 : i32
    %c0_i32_0 = arith.constant 0 : i32
    %c0_i32_1 = arith.constant 0 : i32
    return %c0_i32, %c0_i32_0 : i32, i32
  }
}

module attributes {stable_mosaic.version = 11 : i64} {
  func.func @_stage4_kernel(%arg0: i32, %arg1: memref<1x128x16xbf16, #tpu.memory_space<vmem>>, %arg2: memref<1x128x16xbf16, #tpu.memory_space<vmem>>, %arg3: memref<128x1xf32, #tpu.memory_space<vmem>>, %arg4: memref<128x1xf32, #tpu.memory_space<vmem>>, %arg5: memref<128x1xf32, #tpu.memory_space<vmem>>, %arg6: memref<128x1xf32, #tpu.memory_space<vmem>>, %arg7: memref<1x128x16xbf16, #tpu.memory_space<vmem>>) attributes {dimension_semantics = [#tpu.dimension_semantics<parallel>], iteration_bounds = array<i64: 2>, scalar_prefetch = 0 : i64, scratch_operands = 0 : i64, tpu.core_type = #tpu.core_type<tc>, window_params = [{transform_indices = @transform_0, window_bounds = array<i64: 1, 128, 16>}, {transform_indices = @transform_1, window_bounds = array<i64: 1, 128, 16>}, {pipeline_mode = #tpu.pipeline_mode<synchronous>, transform_indices = @transform_2, window_bounds = array<i64: 128, 1>}, {pipeline_mode = #tpu.pipeline_mode<synchronous>, transform_indices = @transform_3, window_bounds = array<i64: 128, 1>}, {pipeline_mode = #tpu.pipeline_mode<synchronous>, transform_indices = @transform_4, window_bounds = array<i64: 128, 1>}, {pipeline_mode = #tpu.pipeline_mode<synchronous>, transform_indices = @transform_5, window_bounds = array<i64: 128, 1>}, {transform_indices = @transform_6, window_bounds = array<i64: 1, 128, 16>}]} {
    %c0 = arith.constant 0 : index
    %c0_0 = arith.constant 0 : index
    %c0_1 = arith.constant 0 : index
    %0 = vector.load %arg1[%c0, %c0_0, %c0_1] : memref<1x128x16xbf16, #tpu.memory_space<vmem>>, vector<1x128x16xbf16>
    %1 = vector.shape_cast %0 : vector<1x128x16xbf16> to vector<128x16xbf16>
    %2 = arith.extf %1 : vector<128x16xbf16> to vector<128x16xf32>
    %c0_2 = arith.constant 0 : index
    %c0_3 = arith.constant 0 : index
    %3 = vector.load %arg3[%c0_2, %c0_3] : memref<128x1xf32, #tpu.memory_space<vmem>>, vector<128x1xf32>
    %4 = vector.broadcast %3 : vector<128x1xf32> to vector<128x16xf32>
    %5 = arith.mulf %2, %4 : vector<128x16xf32>
    %c0_4 = arith.constant 0 : index
    %c0_5 = arith.constant 0 : index
    %6 = vector.load %arg4[%c0_4, %c0_5] : memref<128x1xf32, #tpu.memory_space<vmem>>, vector<128x1xf32>
    %7 = vector.broadcast %6 : vector<128x1xf32> to vector<128x16xf32>
    %8 = arith.addf %5, %7 : vector<128x16xf32>
    %c0_6 = arith.constant 0 : index
    %c0_7 = arith.constant 0 : index
    %c0_8 = arith.constant 0 : index
    %9 = vector.load %arg2[%c0_6, %c0_7, %c0_8] : memref<1x128x16xbf16, #tpu.memory_space<vmem>>, vector<1x128x16xbf16>
    %10 = vector.shape_cast %9 : vector<1x128x16xbf16> to vector<128x16xbf16>
    %11 = arith.extf %10 : vector<128x16xbf16> to vector<128x16xf32>
    %c0_9 = arith.constant 0 : index
    %c0_10 = arith.constant 0 : index
    %12 = vector.load %arg5[%c0_9, %c0_10] : memref<128x1xf32, #tpu.memory_space<vmem>>, vector<128x1xf32>
    %13 = vector.broadcast %12 : vector<128x1xf32> to vector<128x16xf32>
    %14 = arith.mulf %11, %13 : vector<128x16xf32>
    %c0_11 = arith.constant 0 : index
    %c0_12 = arith.constant 0 : index
    %15 = vector.load %arg6[%c0_11, %c0_12] : memref<128x1xf32, #tpu.memory_space<vmem>>, vector<128x1xf32>
    %16 = vector.broadcast %15 : vector<128x1xf32> to vector<128x16xf32>
    %17 = arith.addf %14, %16 : vector<128x16xf32>
    %18 = arith.addf %8, %17 : vector<128x16xf32>
    %cst = arith.constant 0.000000e+00 : f32
    %19 = vector.broadcast %cst : f32 to vector<128x16xf32>
    %20 = arith.maximumf %18, %19 : vector<128x16xf32>
    %21 = arith.truncf %20 : vector<128x16xf32> to vector<128x16xbf16>
    %c0_13 = arith.constant 0 : index
    %c0_14 = arith.constant 0 : index
    %c0_15 = arith.constant 0 : index
    %22 = vector.load %arg7[%c0_13, %c0_14, %c0_15] : memref<1x128x16xbf16, #tpu.memory_space<vmem>>, vector<1x128x16xbf16>
    %23 = vector.shape_cast %22 : vector<1x128x16xbf16> to vector<128x16xbf16>
    %24 = vector.shape_cast %21 : vector<128x16xbf16> to vector<1x128x16xbf16>
    tpu.vector_store %arg7[%c0_13, %c0_14, %c0_15], %24 {strides = array<i32>} : memref<1x128x16xbf16, #tpu.memory_space<vmem>>, vector<1x128x16xbf16>,
    return
  }
  func.func @transform_0(%arg0: i32) -> (i32, i32, i32) {
    %c0_i32 = arith.constant 0 : i32
    %c0_i32_0 = arith.constant 0 : i32
    %c0_i32_1 = arith.constant 0 : i32
    return %arg0, %c0_i32, %c0_i32_0 : i32, i32, i32
  }
  func.func @transform_1(%arg0: i32) -> (i32, i32, i32) {
    %c0_i32 = arith.constant 0 : i32
    %c0_i32_0 = arith.constant 0 : i32
    %c0_i32_1 = arith.constant 0 : i32
    return %arg0, %c0_i32, %c0_i32_0 : i32, i32, i32
  }
  func.func @transform_2(%arg0: i32) -> (i32, i32) {
    %c0_i32 = arith.constant 0 : i32
    %c0_i32_0 = arith.constant 0 : i32
    %c0_i32_1 = arith.constant 0 : i32
    return %c0_i32, %c0_i32_0 : i32, i32
  }
  func.func @transform_3(%arg0: i32) -> (i32, i32) {
    %c0_i32 = arith.constant 0 : i32
    %c0_i32_0 = arith.constant 0 : i32
    %c0_i32_1 = arith.constant 0 : i32
    return %c0_i32, %c0_i32_0 : i32, i32
  }
  func.func @transform_4(%arg0: i32) -> (i32, i32) {
    %c0_i32 = arith.constant 0 : i32
    %c0_i32_0 = arith.constant 0 : i32
    %c0_i32_1 = arith.constant 0 : i32
    return %c0_i32, %c0_i32_0 : i32, i32
  }
  func.func @transform_5(%arg0: i32) -> (i32, i32) {
    %c0_i32 = arith.constant 0 : i32
    %c0_i32_0 = arith.constant 0 : i32
    %c0_i32_1 = arith.constant 0 : i32
    return %c0_i32, %c0_i32_0 : i32, i32
  }
  func.func @transform_6(%arg0: i32) -> (i32, i32, i32) {
    %c0_i32 = arith.constant 0 : i32
    %c0_i32_0 = arith.constant 0 : i32
    %c0_i32_1 = arith.constant 0 : i32
    return %arg0, %c0_i32, %c0_i32_0 : i32, i32, i32
  }
}

</mosaic_0001>

<llo_original>
// kernel: bottleneck_forward.4
$region0: #{bottleneck_forward.4}
  #allocation0 [shape = 'u32[]', space=smem, size = 0x4, offset = 0x4, fixed_abs, tag = 'smem constant byte address 0x4 - core index']
  #allocation1 [shape = 'u32[144,128]{1,0:T(1,128)}', space=vmem, size = 0x12000, scoped, tag = 'internal scratch']
  %s0 = inlined_call_operand.vmem [shape: bf16[2,128,16], index: 0, kind: input, shape index: {}]
  %s1 = inlined_call_operand.vmem [shape: bf16[256,128], index: 1, kind: input, shape index: {}]
  %s2 = inlined_call_operand.vmem [shape: bf16[2,128,16], index: 2, kind: output, shape index: {0}]
  %s3 = inlined_call_operand.vmem [shape: bf16[2,128,16], index: 3, kind: output, shape index: {1}]
  %s4 = inlined_call_operand.vmem [shape: f32[256,1], index: 4, kind: output, shape index: {2}]
  %s5 = inlined_call_operand.vmem [shape: f32[256,1], index: 5, kind: output, shape index: {3}]
  %6 = xla_tuple %s2, %s3, %s4, %s5
  %s7 = sld [smem:[#allocation0]]
  $region69: #{bottleneck_forward.4} parent=0
    _
  %s9 = ssub.s32 1, %s7
  %s10 = scalar_select 0, %s9, %s7
  loop: start=0, step=1, limit=4
  $region2: #{bottleneck_forward.4} parent=0 // loop_pre_header
    _
  $region3: #{bottleneck_forward.4} parent=0 // loop_header
    %s12 = sphi 0, %s16
    %p13 = scmp.ge.s32.totalorder %s12, 4
    %s22 = sphi 0, %s24
    %s25 = sphi 0, %s22
    %s26 = sphi 0, %s25
    %s42 = sphi 0, %s26
    %s46 = sphi 0, %s46
    %s48 = sphi 0, %s46
    %s49 = sphi 0, %s48
    %s63 = sphi 0, %s49
    %s69 = sphi 0, %s71
    %s72 = sphi 0, %s69
    %s73 = sphi 0, %s72
    %s89 = sphi 0, %s73
    %s95 = sphi 0, %s97
    %s98 = sphi 0, %s95
    %s99 = sphi 0, %s98
    %s115 = sphi 0, %s99
    %s119 = sphi 0, %s119
    %s121 = sphi 0, %s119
    %s122 = sphi 0, %s121
    %s136 = sphi 0, %s122
    %s140 = sphi 0, %s140
    %s142 = sphi 0, %s140
    %s143 = sphi 0, %s142
    %s157 = sphi 0, %s143
  $region4: #{bottleneck_forward.4} parent=0 // loop_header_branch
    %15 = sbr.rel (%p13) target = $region8
  $region5: #{bottleneck_forward.4} parent=0 // loop_body
    %s17 = ssub.s32 %s12, 1
    %s18 = ssub.s32 %s12, 2
    %s19 = sadd.s32 %s12, 1
    %s20 = ssub.s32 %s12, %s19
    %p21 = scmp.eq.s32.totalorder %s20, 0
    %s23 = sadd.s32 %s22, 1
    %s24 = scalar_select %p21, %s22, %s23
    %p27 = pneg %p21
    %p28 = scmp.eq.s32.totalorder %s12, 1
    %p29 = por %p27, %p28
    %p30 = scmp.ne.s32.totalorder %s22, %s25
    %p31 = scmp.eq.s32.totalorder %s12, 0
    %p32 = por %p30, %p31
    %p33 = scmp.ne.s32.totalorder %s22, %s25
    %p34 = scmp.eq.s32.totalorder %s17, 1
    %p35 = por %p33, %p34
    %p36 = scmp.ne.s32.totalorder %s25, %s26
    %p37 = scmp.eq.s32.totalorder %s17, 0
    %p38 = por %p36, %p37
    %p39 = scmp.ne.s32.totalorder %s25, %s26
    %p40 = scmp.eq.s32.totalorder %s18, 1
    %p41 = por %p39, %p40
    %p43 = scmp.ne.s32.totalorder %s26, %s42
    %p44 = scmp.eq.s32.totalorder %s18, 0
    %p45 = por %p43, %p44
    %s47 = sadd.s32 %s46, 1
    %p50 = scmp.eq.s32.totalorder %s12, 1
    %p51 = scmp.ne.s32.totalorder %s46, %s48
    %p52 = scmp.eq.s32.totalorder %s12, 0
    %p53 = por %p51, %p52
    %p54 = scmp.ne.s32.totalorder %s46, %s48
    %p55 = scmp.eq.s32.totalorder %s17, 1
    %p56 = por %p54, %p55
    %p57 = scmp.ne.s32.totalorder %s48, %s49
    %p58 = scmp.eq.s32.totalorder %s17, 0
    %p59 = por %p57, %p58
    %p60 = scmp.ne.s32.totalorder %s48, %s49
    %p61 = scmp.eq.s32.totalorder %s18, 1
    %p62 = por %p60, %p61
    %p64 = scmp.ne.s32.totalorder %s49, %s63
    %p65 = scmp.eq.s32.totalorder %s18, 0
    %p66 = por %p64, %p65
    %s67 = ssub.s32 %s12, %s19
    %p68 = scmp.eq.s32.totalorder %s67, 0
    %s70 = sadd.s32 %s69, 1
    %s71 = scalar_select %p68, %s69, %s70
    %p74 = pneg %p68
    %p75 = scmp.eq.s32.totalorder %s12, 1
    %p76 = por %p74, %p75
    %p77 = scmp.ne.s32.totalorder %s69, %s72
    %p78 = scmp.eq.s32.totalorder %s12, 0
    %p79 = por %p77, %p78
    %p80 = scmp.ne.s32.totalorder %s69, %s72
    %p81 = scmp.eq.s32.totalorder %s17, 1
    %p82 = por %p80, %p81
    %p83 = scmp.ne.s32.totalorder %s72, %s73
    %p84 = scmp.eq.s32.totalorder %s17, 0
    %p85 = por %p83, %p84
    %p86 = scmp.ne.s32.totalorder %s72, %s73
    %p87 = scmp.eq.s32.totalorder %s18, 1
    %p88 = por %p86, %p87
    %p90 = scmp.ne.s32.totalorder %s73, %s89
    %p91 = scmp.eq.s32.totalorder %s18, 0
    %p92 = por %p90, %p91
    %s93 = ssub.s32 %s12, %s19
    %p94 = scmp.eq.s32.totalorder %s93, 0
    %s96 = sadd.s32 %s95, 1
    %s97 = scalar_select %p94, %s95, %s96
    %p100 = pneg %p94
    %p101 = scmp.eq.s32.totalorder %s12, 1
    %p102 = por %p100, %p101
    %p103 = scmp.ne.s32.totalorder %s95, %s98
    %p104 = scmp.eq.s32.totalorder %s12, 0
    %p105 = por %p103, %p104
    %p106 = scmp.ne.s32.totalorder %s95, %s98
    %p107 = scmp.eq.s32.totalorder %s17, 1
    %p108 = por %p106, %p107
    %p109 = scmp.ne.s32.totalorder %s98, %s99
    %p110 = scmp.eq.s32.totalorder %s17, 0
    %p111 = por %p109, %p110
    %p112 = scmp.ne.s32.totalorder %s98, %s99
    %p113 = scmp.eq.s32.totalorder %s18, 1
    %p114 = por %p112, %p113
    %p116 = scmp.ne.s32.totalorder %s99, %s115
    %p117 = scmp.eq.s32.totalorder %s18, 0
    %p118 = por %p116, %p117
    %s120 = sadd.s32 %s119, 1
    %p123 = scmp.eq.s32.totalorder %s12, 1
    %p124 = scmp.ne.s32.totalorder %s119, %s121
    %p125 = scmp.eq.s32.totalorder %s12, 0
    %p126 = por %p124, %p125
    %p127 = scmp.ne.s32.totalorder %s119, %s121
    %p128 = scmp.eq.s32.totalorder %s17, 1
    %p129 = por %p127, %p128
    %p130 = scmp.ne.s32.totalorder %s121, %s122
    %p131 = scmp.eq.s32.totalorder %s17, 0
    %p132 = por %p130, %p131
    %p133 = scmp.ne.s32.totalorder %s121, %s122
    %p134 = scmp.eq.s32.totalorder %s18, 1
    %p135 = por %p133, %p134
    %p137 = scmp.ne.s32.totalorder %s122, %s136
    %p138 = scmp.eq.s32.totalorder %s18, 0
    %p139 = por %p137, %p138
    %s141 = sadd.s32 %s140, 1
    %p144 = scmp.eq.s32.totalorder %s12, 1
    %p145 = scmp.ne.s32.totalorder %s140, %s142
    %p146 = scmp.eq.s32.totalorder %s12, 0
    %p147 = por %p145, %p146
    %p148 = scmp.ne.s32.totalorder %s140, %s142
    %p149 = scmp.eq.s32.totalorder %s17, 1
    %p150 = por %p148, %p149
    %p151 = scmp.ne.s32.totalorder %s142, %s143
    %p152 = scmp.eq.s32.totalorder %s17, 0
    %p153 = por %p151, %p152
    %p154 = scmp.ne.s32.totalorder %s142, %s143
    %p155 = scmp.eq.s32.totalorder %s18, 1
    %p156 = por %p154, %p155
    %p158 = scmp.ne.s32.totalorder %s143, %s157
    %p159 = scmp.eq.s32.totalorder %s18, 0
    %p160 = por %p158, %p159
    %p161 = scmp.le.s32.totalorder 1, %s12
    %p162 = scmp.lt.s32.totalorder %s12, 3
    %p163 = pnand %p161, %p162
    %p164 = pneg %p163
    // Predicated region
    $region9: #{bottleneck_forward.4} parent=5 // pred_check
      _
    $region10: #{bottleneck_forward.4} parent=5 // pred_check_branch
      %166 = sbr.rel (%p163) target = $region12
    $region11: #{bottleneck_forward.4} parent=5 // pred_region
      %s167 = ssub.s32 %s12, 1
      // Predicated region
      $region13: #{bottleneck_forward.4} parent=11 // pred_check
        %p168 = pneg %p59
      $region14: #{bottleneck_forward.4} parent=11 // pred_check_branch
        %170 = sbr.rel (%p168) target = $region16
      $region15: #{bottleneck_forward.4} parent=11 // pred_region
        _
      $region16: #{bottleneck_forward.4} parent=11 // pred_fallthru
        _
    $region12: #{bottleneck_forward.4} parent=5 // pred_fallthru
      _
    %p171 = scmp.lt.s32.totalorder %s12, 2
    // Predicated region
    $region17: #{bottleneck_forward.4} parent=5 // pred_check
      %p172 = pneg %p171
    $region18: #{bottleneck_forward.4} parent=5 // pred_check_branch
      %174 = sbr.rel (%p172) target = $region20
    $region19: #{bottleneck_forward.4} parent=5 // pred_region
      // Predicated region
      $region21: #{bottleneck_forward.4} parent=19 // pred_check
        %p175 = pneg %p32
      $region22: #{bottleneck_forward.4} parent=19 // pred_check_branch
        %177 = sbr.rel (%p175) target = $region24
      $region23: #{bottleneck_forward.4} parent=19 // pred_region
        %p178 = scmp.lt.s32.totalorder %s12, 1
        %s179 = scalar_select %p178, %s12, 1
        %s180 = smul.addr %s179, 16
        %s181 = smul.addr %s180, 4
        %s182 = scalar_lea.vmem %s0, %s181
      $region24: #{bottleneck_forward.4} parent=19 // pred_fallthru
        _
    $region20: #{bottleneck_forward.4} parent=5 // pred_fallthru
      _
    %p183 = scmp.le.s32.totalorder 1, %s12
    %p184 = scmp.lt.s32.totalorder %s12, 3
    %p185 = pnand %p183, %p184
    %p186 = pneg %p185
    // Predicated region
    $region25: #{bottleneck_forward.4} parent=5 // pred_check
      _
    $region26: #{bottleneck_forward.4} parent=5 // pred_check_branch
      %188 = sbr.rel (%p185) target = $region28
    $region27: #{bottleneck_forward.4} parent=5 // pred_region
      %s189 = ssub.s32 %s12, 1
      %p190 = scmp.lt.s32.totalorder %s17, 1
      %s191 = scalar_select %p190, %s17, 1
      %s192 = smul.addr %s191, 16
      %s193 = smul.addr %s192, 4
      %s194 = scalar_lea.vmem %s0, %s193
      %p195 = pneg %p38
      %p196 = pneg %p35
      %p197 = pneg %p59
      %p198 = pneg %p56
      %p199 = pneg %p85
      %p200 = pneg %p82
      %p201 = scmp.lt.s32.totalorder %s17, 1
      %s202 = scalar_select %p201, %s17, 1
      %s203 = smul.addr %s202, 16
      %s204 = smul.addr %s203, 4
      %s205 = scalar_lea.vmem %s2, %s204
      %p206 = pneg %p111
      %p207 = pneg %p108
      %p208 = scmp.lt.s32.totalorder %s17, 1
      %s209 = scalar_select %p208, %s17, 1
      %s210 = smul.addr %s209, 16
      %s211 = smul.addr %s210, 4
      %s212 = scalar_lea.vmem %s3, %s211
      %p213 = pneg %p132
      %p214 = pneg %p129
      %p215 = pneg %p153
      %p216 = pneg %p150
      %p217 = scmp.lt.s32.totalorder %s17, 1
      %s218 = scalar_select %p217, %s17, 1
      %s219 = smul.addr %s218, 16
      %s220 = smul.addr %s219, 4
      %s221 = scalar_lea.vmem %s0, %s220
      %p222 = scmp.lt.s32.totalorder %s17, 1
      %s223 = scalar_select %p222, %s17, 1
      %s224 = smul.addr %s223, 16
      %s225 = smul.addr %s224, 4
      %s226 = scalar_lea.vmem %s2, %s225
      %p227 = scmp.lt.s32.totalorder %s17, 1
      %s228 = scalar_select %p227, %s17, 1
      %s229 = smul.addr %s228, 16
      %s230 = smul.addr %s229, 4
      %s231 = scalar_lea.vmem %s3, %s230
      %v233 = vld [vmem:[%s1] sm:$0xf]
      %v234 = vld [vmem:[%s1 + $0x4] sm:$0xf]
      %v235 = vld [vmem:[%s1 + $0x8] sm:$0xf]
      %v236 = vld [vmem:[%s1 + $0xc] sm:$0xf]
      %v237 = vld [vmem:[%s1 + $0x10] sm:$0xf]
      %v238 = vld [vmem:[%s1 + $0x14] sm:$0xf]
      %v239 = vld [vmem:[%s1 + $0x18] sm:$0xf]
      %v240 = vld [vmem:[%s1 + $0x1c] sm:$0xf]
      %v241 = vld [vmem:[%s1 + $0x20] sm:$0xf]
      %v242 = vld [vmem:[%s1 + $0x24] sm:$0xf]
      %v243 = vld [vmem:[%s1 + $0x28] sm:$0xf]
      %v244 = vld [vmem:[%s1 + $0x2c] sm:$0xf]
      %v245 = vld [vmem:[%s1 + $0x30] sm:$0xf]
      %v246 = vld [vmem:[%s1 + $0x34] sm:$0xf]
      %v247 = vld [vmem:[%s1 + $0x38] sm:$0xf]
      %v248 = vld [vmem:[%s1 + $0x3c] sm:$0xf]
      %v249 = vld [vmem:[%s1 + $0x40] sm:$0xf]
      %v250 = vld [vmem:[%s1 + $0x44] sm:$0xf]
      %v251 = vld [vmem:[%s1 + $0x48] sm:$0xf]
      %v252 = vld [vmem:[%s1 + $0x4c] sm:$0xf]
      %v253 = vld [vmem:[%s1 + $0x50] sm:$0xf]
      %v254 = vld [vmem:[%s1 + $0x54] sm:$0xf]
      %v255 = vld [vmem:[%s1 + $0x58] sm:$0xf]
      %v256 = vld [vmem:[%s1 + $0x5c] sm:$0xf]
      %v257 = vld [vmem:[%s1 + $0x60] sm:$0xf]
      %v258 = vld [vmem:[%s1 + $0x64] sm:$0xf]
      %v259 = vld [vmem:[%s1 + $0x68] sm:$0xf]
      %v260 = vld [vmem:[%s1 + $0x6c] sm:$0xf]
      %v261 = vld [vmem:[%s1 + $0x70] sm:$0xf]
      %v262 = vld [vmem:[%s1 + $0x74] sm:$0xf]
      %v263 = vld [vmem:[%s1 + $0x78] sm:$0xf]
      %v264 = vld [vmem:[%s1 + $0x7c] sm:$0xf]
      %v265 = vld [vmem:[%s221] sm:$0xf]
      %v266 = vld [vmem:[%s221 + $0x4] sm:$0xf]
      %v267 = vld [vmem:[%s221 + $0x8] sm:$0xf]
      %v268 = vld [vmem:[%s221 + $0xc] sm:$0xf]
      %v269 = vld [vmem:[%s221 + $0x10] sm:$0xf]
      %v270 = vld [vmem:[%s221 + $0x14] sm:$0xf]
      %v271 = vld [vmem:[%s221 + $0x18] sm:$0xf]
      %v272 = vld [vmem:[%s221 + $0x1c] sm:$0xf]
      %v273 = vld [vmem:[%s221 + $0x20] sm:$0xf]
      %v274 = vld [vmem:[%s221 + $0x24] sm:$0xf]
      %v275 = vld [vmem:[%s221 + $0x28] sm:$0xf]
      %v276 = vld [vmem:[%s221 + $0x2c] sm:$0xf]
      %v277 = vld [vmem:[%s221 + $0x30] sm:$0xf]
      %v278 = vld [vmem:[%s221 + $0x34] sm:$0xf]
      %v279 = vld [vmem:[%s221 + $0x38] sm:$0xf]
      %v280 = vld [vmem:[%s221 + $0x3c] sm:$0xf]
      %v313 = vunpack.c.l.b16 %v233
      %v314 = vunpack.c.l.b16 %v234
      %v315 = vunpack.c.l.b16 %v235
      %v316 = vunpack.c.l.b16 %v236
      %v317 = vunpack.c.l.b16 %v237
      %v318 = vunpack.c.l.b16 %v238
      %v319 = vunpack.c.l.b16 %v239
      %v320 = vunpack.c.l.b16 %v240
      %v321 = vunpack.c.l.b16 %v241
      %v322 = vunpack.c.l.b16 %v242
      %v323 = vunpack.c.l.b16 %v243
      %v324 = vunpack.c.l.b16 %v244
      %v325 = vunpack.c.l.b16 %v245
      %v326 = vunpack.c.l.b16 %v246
      %v327 = vunpack.c.l.b16 %v247
      %v328 = vunpack.c.l.b16 %v248
      %v329 = vunpack.c.l.b16 %v249
      %v330 = vunpack.c.l.b16 %v250
      %v331 = vunpack.c.l.b16 %v251
      %v332 = vunpack.c.l.b16 %v252
      %v333 = vunpack.c.l.b16 %v253
      %v334 = vunpack.c.l.b16 %v254
      %v335 = vunpack.c.l.b16 %v255
      %v336 = vunpack.c.l.b16 %v256
      %v337 = vunpack.c.l.b16 %v257
      %v338 = vunpack.c.l.b16 %v258
      %v339 = vunpack.c.l.b16 %v259
      %v340 = vunpack.c.l.b16 %v260
      %v341 = vunpack.c.l.b16 %v261
      %v342 = vunpack.c.l.b16 %v262
      %v343 = vunpack.c.l.b16 %v263
      %v344 = vunpack.c.l.b16 %v264
      %v345 = vpack.c.b16 %v314, %v313
      %v346 = vpack.c.b16 %v316, %v315
      %v347 = vpack.c.b16 %v318, %v317
      %v348 = vpack.c.b16 %v320, %v319
      %v349 = vpack.c.b16 %v322, %v321
      %v350 = vpack.c.b16 %v324, %v323
      %v351 = vpack.c.b16 %v326, %v325
      %v352 = vpack.c.b16 %v328, %v327
      %v353 = vpack.c.b16 %v330, %v329
      %v354 = vpack.c.b16 %v332, %v331
      %v355 = vpack.c.b16 %v334, %v333
      %v356 = vpack.c.b16 %v336, %v335
      %v357 = vpack.c.b16 %v338, %v337
      %v358 = vpack.c.b16 %v340, %v339
      %v359 = vpack.c.b16 %v342, %v341
      %v360 = vpack.c.b16 %v344, %v343
      %v393 = vunpack.c.l.b16 %v265
      %v394 = vunpack.c.l.b16 %v266
      %v395 = vunpack.c.l.b16 %v267
      %v396 = vunpack.c.l.b16 %v268
      %v397 = vunpack.c.l.b16 %v269
      %v398 = vunpack.c.l.b16 %v270
      %v399 = vunpack.c.l.b16 %v271
      %v400 = vunpack.c.l.b16 %v272
      %v401 = vunpack.c.l.b16 %v273
      %v402 = vunpack.c.l.b16 %v274
      %v403 = vunpack.c.l.b16 %v275
      %v404 = vunpack.c.l.b16 %v276
      %v405 = vunpack.c.l.b16 %v277
      %v406 = vunpack.c.l.b16 %v278
      %v407 = vunpack.c.l.b16 %v279
      %v408 = vunpack.c.l.b16 %v280
      %v409 = vpack.c.b16 %v394, %v393
      %v410 = vpack.c.b16 %v396, %v395
      %v411 = vpack.c.b16 %v398, %v397
      %v412 = vpack.c.b16 %v400, %v399
      %v413 = vpack.c.b16 %v402, %v401
      %v414 = vpack.c.b16 %v404, %v403
      %v415 = vpack.c.b16 %v406, %v405
      %v416 = vpack.c.b16 %v408, %v407
      %425 = vmatprep.subr.bf16.mxu0 0
      %426 = vmatpush1.bf16.msra.mxu0 %v409
      %427 = vmatprep.subr.bf16.mxu0 0
      %428 = vmatpush1.bf16.msra.mxu0 %v410
      %429 = vmatprep.subr.bf16.mxu0 0
      %430 = vmatpush1.bf16.msra.mxu0 %v411
      %431 = vmatprep.subr.bf16.mxu0 0
      %432 = vmatpush1.bf16.msra.mxu0 %v412
      %433 = vmatprep.subr.bf16.mxu0 0
      %434 = vmatpush1.bf16.msra.mxu0 %v413
      %435 = vmatprep.subr.bf16.mxu0 0
      %436 = vmatpush1.bf16.msra.mxu0 %v414
      %437 = vmatprep.subr.bf16.mxu0 0
      %438 = vmatpush1.bf16.msra.mxu0 %v415
      %439 = vmatprep.subr.bf16.mxu0 0
      %440 = vmatpush1.bf16.msra.mxu0 %v416
      %441 = vmatprep.subr.bf16.mxu0 0
      %442 = vmatpush1.bf16.msra.mxu0 0
      %443 = vmatprep.subr.bf16.mxu0 0
      %444 = vmatpush1.bf16.msra.mxu0 0
      %445 = vmatprep.subr.bf16.mxu0 0
      %446 = vmatpush1.bf16.msra.mxu0 0
      %447 = vmatprep.subr.bf16.mxu0 0
      %448 = vmatpush1.bf16.msra.mxu0 0
      %449 = vmatprep.subr.bf16.mxu0 0
      %450 = vmatpush1.bf16.msra.mxu0 0
      %451 = vmatprep.subr.bf16.mxu0 0
      %452 = vmatpush1.bf16.msra.mxu0 0
      %453 = vmatprep.subr.bf16.mxu0 0
      %454 = vmatpush1.bf16.msra.mxu0 0
      %455 = vmatprep.subr.bf16.mxu0 0
      %456 = vmatpush1.bf16.msra.mxu0 0
      %457 = vmatprep.mubr.bf16.mxu0 0
      %458 = vmatmul.mubr.bf16.gmra.mrb[0].mxu0 %v345
      %v459 = vpop.f32.mrb[0].mxu0
      %v460 = vadd.f32 0.0, %v459
      %v461 = vpop.f32.mrb[0].mxu0
      %v462 = vpop.f32.mrb[0].mxu0
      %v463 = vadd.f32 0.0, %v462
      %v464 = vpop.f32.mrb[0].mxu0
      %465 = vmatprep.mubr.bf16.mxu0 0
      %466 = vmatmul.mubr.bf16.gmra.mrb[0].mxu0 %v346
      %v467 = vpop.f32.mrb[0].mxu0
      %v468 = vadd.f32 0.0, %v467
      %v469 = vpop.f32.mrb[0].mxu0
      %v470 = vpop.f32.mrb[0].mxu0
      %v471 = vadd.f32 0.0, %v470
      %v472 = vpop.f32.mrb[0].mxu0
      %473 = vmatprep.mubr.bf16.mxu0 0
      %474 = vmatmul.mubr.bf16.gmra.mrb[0].mxu0 %v347
      %v475 = vpop.f32.mrb[0].mxu0
      %v476 = vadd.f32 0.0, %v475
      %v477 = vpop.f32.mrb[0].mxu0
      %v478 = vpop.f32.mrb[0].mxu0
      %v479 = vadd.f32 0.0, %v478
      %v480 = vpop.f32.mrb[0].mxu0
      %481 = vmatprep.mubr.bf16.mxu0 0
      %482 = vmatmul.mubr.bf16.gmra.mrb[0].mxu0 %v348
      %v483 = vpop.f32.mrb[0].mxu0
      %v484 = vadd.f32 0.0, %v483
      %v485 = vpop.f32.mrb[0].mxu0
      %v486 = vpop.f32.mrb[0].mxu0
      %v487 = vadd.f32 0.0, %v486
      %v488 = vpop.f32.mrb[0].mxu0
      %489 = vmatprep.mubr.bf16.mxu0 0
      %490 = vmatmul.mubr.bf16.gmra.mrb[0].mxu0 %v349
      %v491 = vpop.f32.mrb[0].mxu0
      %v492 = vadd.f32 0.0, %v491
      %v493 = vpop.f32.mrb[0].mxu0
      %v494 = vpop.f32.mrb[0].mxu0
      %v495 = vadd.f32 0.0, %v494
      %v496 = vpop.f32.mrb[0].mxu0
      %497 = vmatprep.mubr.bf16.mxu0 0
      %498 = vmatmul.mubr.bf16.gmra.mrb[0].mxu0 %v350
      %v499 = vpop.f32.mrb[0].mxu0
      %v500 = vadd.f32 0.0, %v499
      %v501 = vpop.f32.mrb[0].mxu0
      %v502 = vpop.f32.mrb[0].mxu0
      %v503 = vadd.f32 0.0, %v502
      %v504 = vpop.f32.mrb[0].mxu0
      %505 = vmatprep.mubr.bf16.mxu0 0
      %506 = vmatmul.mubr.bf16.gmra.mrb[0].mxu0 %v351
      %v507 = vpop.f32.mrb[0].mxu0
      %v508 = vadd.f32 0.0, %v507
      %v509 = vpop.f32.mrb[0].mxu0
      %v510 = vpop.f32.mrb[0].mxu0
      %v511 = vadd.f32 0.0, %v510
      %v512 = vpop.f32.mrb[0].mxu0
      %513 = vmatprep.mubr.bf16.mxu0 0
      %514 = vmatmul.mubr.bf16.gmra.mrb[0].mxu0 %v352
      %v515 = vpop.f32.mrb[0].mxu0
      %v516 = vadd.f32 0.0, %v515
      %v517 = vpop.f32.mrb[0].mxu0
      %v518 = vpop.f32.mrb[0].mxu0
      %v519 = vadd.f32 0.0, %v518
      %v520 = vpop.f32.mrb[0].mxu0
      %521 = vmatprep.mubr.bf16.mxu0 0
      %522 = vmatmul.mubr.bf16.gmra.mrb[0].mxu0 %v353
      %v523 = vpop.f32.mrb[0].mxu0
      %v524 = vadd.f32 0.0, %v523
      %v525 = vpop.f32.mrb[0].mxu0
      %v526 = vpop.f32.mrb[0].mxu0
      %v527 = vadd.f32 0.0, %v526
      %v528 = vpop.f32.mrb[0].mxu0
      %529 = vmatprep.mubr.bf16.mxu0 0
      %530 = vmatmul.mubr.bf16.gmra.mrb[0].mxu0 %v354
      %v531 = vpop.f32.mrb[0].mxu0
      %v532 = vadd.f32 0.0, %v531
      %v533 = vpop.f32.mrb[0].mxu0
      %v534 = vpop.f32.mrb[0].mxu0
      %v535 = vadd.f32 0.0, %v534
      %v536 = vpop.f32.mrb[0].mxu0
      %537 = vmatprep.mubr.bf16.mxu0 0
      %538 = vmatmul.mubr.bf16.gmra.mrb[0].mxu0 %v355
      %v539 = vpop.f32.mrb[0].mxu0
      %v540 = vadd.f32 0.0, %v539
      %v541 = vpop.f32.mrb[0].mxu0
      %v542 = vpop.f32.mrb[0].mxu0
      %v543 = vadd.f32 0.0, %v542
      %v544 = vpop.f32.mrb[0].mxu0
      %545 = vmatprep.mubr.bf16.mxu0 0
      %546 = vmatmul.mubr.bf16.gmra.mrb[0].mxu0 %v356
      %v547 = vpop.f32.mrb[0].mxu0
      %v548 = vadd.f32 0.0, %v547
      %v549 = vpop.f32.mrb[0].mxu0
      %v550 = vpop.f32.mrb[0].mxu0
      %v551 = vadd.f32 0.0, %v550
      %v552 = vpop.f32.mrb[0].mxu0
      %553 = vmatprep.mubr.bf16.mxu0 0
      %554 = vmatmul.mubr.bf16.gmra.mrb[0].mxu0 %v357
      %v555 = vpop.f32.mrb[0].mxu0
      %v556 = vadd.f32 0.0, %v555
      %v557 = vpop.f32.mrb[0].mxu0
      %v558 = vpop.f32.mrb[0].mxu0
      %v559 = vadd.f32 0.0, %v558
      %v560 = vpop.f32.mrb[0].mxu0
      %561 = vmatprep.mubr.bf16.mxu0 0
      %562 = vmatmul.mubr.bf16.gmra.mrb[0].mxu0 %v358
      %v563 = vpop.f32.mrb[0].mxu0
      %v564 = vadd.f32 0.0, %v563
      %v565 = vpop.f32.mrb[0].mxu0
      %v566 = vpop.f32.mrb[0].mxu0
      %v567 = vadd.f32 0.0, %v566
      %v568 = vpop.f32.mrb[0].mxu0
      %569 = vmatprep.mubr.bf16.mxu0 0
      %570 = vmatmul.mubr.bf16.gmra.mrb[0].mxu0 %v359
      %v571 = vpop.f32.mrb[0].mxu0
      %v572 = vadd.f32 0.0, %v571
      %v573 = vpop.f32.mrb[0].mxu0
      %v574 = vpop.f32.mrb[0].mxu0
      %v575 = vadd.f32 0.0, %v574
      %v576 = vpop.f32.mrb[0].mxu0
      %577 = vmatprep.mubr.bf16.mxu0 0
      %578 = vmatmul.mubr.bf16.gmra.mrb[0].mxu0 %v360
      %v579 = vpop.f32.mrb[0].mxu0
      %v580 = vadd.f32 0.0, %v579
      %v581 = vpop.f32.mrb[0].mxu0
      %v582 = vpop.f32.mrb[0].mxu0
      %v583 = vadd.f32 0.0, %v582
      %v584 = vpop.f32.mrb[0].mxu0
      %585 = vdwg.mxu0
      %v586 = vpack.c.bf16 %v463, %v460
      %v587 = vpack.c.bf16 %v471, %v468
      %v588 = vpack.c.bf16 %v479, %v476
      %v589 = vpack.c.bf16 %v487, %v484
      %v590 = vpack.c.bf16 %v495, %v492
      %v591 = vpack.c.bf16 %v503, %v500
      %v592 = vpack.c.bf16 %v511, %v508
      %v593 = vpack.c.bf16 %v519, %v516
      %v602 = vunpack.c.l.b16 %v586
      %v603 = vunpack.c.h.b16 %v586
      %v604 = vunpack.c.l.b16 %v587
      %v605 = vunpack.c.h.b16 %v587
      %v606 = vunpack.c.l.b16 %v588
      %v607 = vunpack.c.h.b16 %v588
      %v608 = vunpack.c.l.b16 %v589
      %v609 = vunpack.c.h.b16 %v589
      %v610 = vunpack.c.l.b16 %v590
      %v611 = vunpack.c.h.b16 %v590
      %v612 = vunpack.c.l.b16 %v591
      %v613 = vunpack.c.h.b16 %v591
      %v614 = vunpack.c.l.b16 %v592
      %v615 = vunpack.c.h.b16 %v592
      %v616 = vunpack.c.l.b16 %v593
      %v617 = vunpack.c.h.b16 %v593
      %v618 = vpack.c.b16 %v602, %v602
      %v619 = vpack.c.b16 %v603, %v603
      %v620 = vpack.c.b16 %v604, %v604
      %v621 = vpack.c.b16 %v605, %v605
      %v622 = vpack.c.b16 %v606, %v606
      %v623 = vpack.c.b16 %v607, %v607
      %v624 = vpack.c.b16 %v608, %v608
      %v625 = vpack.c.b16 %v609, %v609
      %v626 = vpack.c.b16 %v610, %v610
      %v627 = vpack.c.b16 %v611, %v611
      %v628 = vpack.c.b16 %v612, %v612
      %v629 = vpack.c.b16 %v613, %v613
      %v630 = vpack.c.b16 %v614, %v614
      %v631 = vpack.c.b16 %v615, %v615
      %v632 = vpack.c.b16 %v616, %v616
      %v633 = vpack.c.b16 %v617, %v617
      %vm650 = vcmask 125952
      %651 = vst.msk [vmem:[%s226] sm:$0xf] %vm650, %v618
      %652 = vst.msk [vmem:[%s226 + $0x4] sm:$0xf] %vm650, %v619
      %653 = vst.msk [vmem:[%s226 + $0x8] sm:$0xf] %vm650, %v620
      %654 = vst.msk [vmem:[%s226 + $0xc] sm:$0xf] %vm650, %v621
      %655 = vst.msk [vmem:[%s226 + $0x10] sm:$0xf] %vm650, %v622
      %656 = vst.msk [vmem:[%s226 + $0x14] sm:$0xf] %vm650, %v623
      %657 = vst.msk [vmem:[%s226 + $0x18] sm:$0xf] %vm650, %v624
      %658 = vst.msk [vmem:[%s226 + $0x1c] sm:$0xf] %vm650, %v625
      %659 = vst.msk [vmem:[%s226 + $0x20] sm:$0xf] %vm650, %v626
      %660 = vst.msk [vmem:[%s226 + $0x24] sm:$0xf] %vm650, %v627
      %661 = vst.msk [vmem:[%s226 + $0x28] sm:$0xf] %vm650, %v628
      %662 = vst.msk [vmem:[%s226 + $0x2c] sm:$0xf] %vm650, %v629
      %663 = vst.msk [vmem:[%s226 + $0x30] sm:$0xf] %vm650, %v630
      %664 = vst.msk [vmem:[%s226 + $0x34] sm:$0xf] %vm650, %v631
      %665 = vst.msk [vmem:[%s226 + $0x38] sm:$0xf] %vm650, %v632
      %666 = vst.msk [vmem:[%s226 + $0x3c] sm:$0xf] %vm650, %v633
      %v667 = vpack.c.bf16 %v527, %v524
      %v668 = vpack.c.bf16 %v535, %v532
      %v669 = vpack.c.bf16 %v543, %v540
      %v670 = vpack.c.bf16 %v551, %v548
      %v671 = vpack.c.bf16 %v559, %v556
      %v672 = vpack.c.bf16 %v567, %v564
      %v673 = vpack.c.bf16 %v575, %v572
      %v674 = vpack.c.bf16 %v583, %v580
      %v683 = vunpack.c.l.b16 %v667
      %v684 = vunpack.c.h.b16 %v667
      %v685 = vunpack.c.l.b16 %v668
      %v686 = vunpack.c.h.b16 %v668
      %v687 = vunpack.c.l.b16 %v669
      %v688 = vunpack.c.h.b16 %v669
      %v689 = vunpack.c.l.b16 %v670
      %v690 = vunpack.c.h.b16 %v670
      %v691 = vunpack.c.l.b16 %v671
      %v692 = vunpack.c.h.b16 %v671
      %v693 = vunpack.c.l.b16 %v672
      %v694 = vunpack.c.h.b16 %v672
      %v695 = vunpack.c.l.b16 %v673
      %v696 = vunpack.c.h.b16 %v673
      %v697 = vunpack.c.l.b16 %v674
      %v698 = vunpack.c.h.b16 %v674
      %v699 = vpack.c.b16 %v683, %v683
      %v700 = vpack.c.b16 %v684, %v684
      %v701 = vpack.c.b16 %v685, %v685
      %v702 = vpack.c.b16 %v686, %v686
      %v703 = vpack.c.b16 %v687, %v687
      %v704 = vpack.c.b16 %v688, %v688
      %v705 = vpack.c.b16 %v689, %v689
      %v706 = vpack.c.b16 %v690, %v690
      %v707 = vpack.c.b16 %v691, %v691
      %v708 = vpack.c.b16 %v692, %v692
      %v709 = vpack.c.b16 %v693, %v693
      %v710 = vpack.c.b16 %v694, %v694
      %v711 = vpack.c.b16 %v695, %v695
      %v712 = vpack.c.b16 %v696, %v696
      %v713 = vpack.c.b16 %v697, %v697
      %v714 = vpack.c.b16 %v698, %v698
      %731 = vst.msk [vmem:[%s231] sm:$0xf] %vm650, %v699
      %732 = vst.msk [vmem:[%s231 + $0x4] sm:$0xf] %vm650, %v700
      %733 = vst.msk [vmem:[%s231 + $0x8] sm:$0xf] %vm650, %v701
      %734 = vst.msk [vmem:[%s231 + $0xc] sm:$0xf] %vm650, %v702
      %735 = vst.msk [vmem:[%s231 + $0x10] sm:$0xf] %vm650, %v703
      %736 = vst.msk [vmem:[%s231 + $0x14] sm:$0xf] %vm650, %v704
      %737 = vst.msk [vmem:[%s231 + $0x18] sm:$0xf] %vm650, %v705
      %738 = vst.msk [vmem:[%s231 + $0x1c] sm:$0xf] %vm650, %v706
      %739 = vst.msk [vmem:[%s231 + $0x20] sm:$0xf] %vm650, %v707
      %740 = vst.msk [vmem:[%s231 + $0x24] sm:$0xf] %vm650, %v708
      %741 = vst.msk [vmem:[%s231 + $0x28] sm:$0xf] %vm650, %v709
      %742 = vst.msk [vmem:[%s231 + $0x2c] sm:$0xf] %vm650, %v710
      %743 = vst.msk [vmem:[%s231 + $0x30] sm:$0xf] %vm650, %v711
      %744 = vst.msk [vmem:[%s231 + $0x34] sm:$0xf] %vm650, %v712
      %745 = vst.msk [vmem:[%s231 + $0x38] sm:$0xf] %vm650, %v713
      %746 = vst.msk [vmem:[%s231 + $0x3c] sm:$0xf] %vm650, %v714
      %p747 = scmp.eq.s32.totalorder %s17, 0
      // Predicated region
      $region29: #{bottleneck_forward.4} parent=27 // pred_check
        %p748 = pneg %p747
      $region30: #{bottleneck_forward.4} parent=27 // pred_check_branch
        %750 = sbr.rel (%p748) target = $region32
      $region31: #{bottleneck_forward.4} parent=27 // pred_region
        %vm751 = vcmask 7168
        %752 = vst.msk [vmem:[%s4] sm:$0xff] %vm751, 0.0
        %753 = vst.msk [vmem:[%s4 + $0x8] sm:$0xff] %vm751, 0.0
        %754 = vst.msk [vmem:[%s4 + $0x10] sm:$0xff] %vm751, 0.0
        %755 = vst.msk [vmem:[%s4 + $0x18] sm:$0xff] %vm751, 0.0
        %756 = vst.msk [vmem:[%s4 + $0x20] sm:$0xff] %vm751, 0.0
        %757 = vst.msk [vmem:[%s4 + $0x28] sm:$0xff] %vm751, 0.0
        %758 = vst.msk [vmem:[%s4 + $0x30] sm:$0xff] %vm751, 0.0
        %759 = vst.msk [vmem:[%s4 + $0x38] sm:$0xff] %vm751, 0.0
        %760 = vst.msk [vmem:[%s4 + $0x40] sm:$0xff] %vm751, 0.0
        %761 = vst.msk [vmem:[%s4 + $0x48] sm:$0xff] %vm751, 0.0
        %762 = vst.msk [vmem:[%s4 + $0x50] sm:$0xff] %vm751, 0.0
        %763 = vst.msk [vmem:[%s4 + $0x58] sm:$0xff] %vm751, 0.0
        %764 = vst.msk [vmem:[%s4 + $0x60] sm:$0xff] %vm751, 0.0
        %765 = vst.msk [vmem:[%s4 + $0x68] sm:$0xff] %vm751, 0.0
        %766 = vst.msk [vmem:[%s4 + $0x70] sm:$0xff] %vm751, 0.0
        %767 = vst.msk [vmem:[%s4 + $0x78] sm:$0xff] %vm751, 0.0
        %768 = vst.msk [vmem:[%s4 + $0x80] sm:$0xff] %vm751, 0.0
        %769 = vst.msk [vmem:[%s4 + $0x88] sm:$0xff] %vm751, 0.0
        %770 = vst.msk [vmem:[%s4 + $0x90] sm:$0xff] %vm751, 0.0
        %771 = vst.msk [vmem:[%s4 + $0x98] sm:$0xff] %vm751, 0.0
        %772 = vst.msk [vmem:[%s4 + $0xa0] sm:$0xff] %vm751, 0.0
        %773 = vst.msk [vmem:[%s4 + $0xa8] sm:$0xff] %vm751, 0.0
        %774 = vst.msk [vmem:[%s4 + $0xb0] sm:$0xff] %vm751, 0.0
        %775 = vst.msk [vmem:[%s4 + $0xb8] sm:$0xff] %vm751, 0.0
        %776 = vst.msk [vmem:[%s4 + $0xc0] sm:$0xff] %vm751, 0.0
        %777 = vst.msk [vmem:[%s4 + $0xc8] sm:$0xff] %vm751, 0.0
        %778 = vst.msk [vmem:[%s4 + $0xd0] sm:$0xff] %vm751, 0.0
        %779 = vst.msk [vmem:[%s4 + $0xd8] sm:$0xff] %vm751, 0.0
        %780 = vst.msk [vmem:[%s4 + $0xe0] sm:$0xff] %vm751, 0.0
        %781 = vst.msk [vmem:[%s4 + $0xe8] sm:$0xff] %vm751, 0.0
        %782 = vst.msk [vmem:[%s4 + $0xf0] sm:$0xff] %vm751, 0.0
        %783 = vst.msk [vmem:[%s4 + $0xf8] sm:$0xff] %vm751, 0.0
        %784 = vst.msk [vmem:[%s5] sm:$0xff] %vm751, 0.0
        %785 = vst.msk [vmem:[%s5 + $0x8] sm:$0xff] %vm751, 0.0
        %786 = vst.msk [vmem:[%s5 + $0x10] sm:$0xff] %vm751, 0.0
        %787 = vst.msk [vmem:[%s5 + $0x18] sm:$0xff] %vm751, 0.0
        %788 = vst.msk [vmem:[%s5 + $0x20] sm:$0xff] %vm751, 0.0
        %789 = vst.msk [vmem:[%s5 + $0x28] sm:$0xff] %vm751, 0.0
        %790 = vst.msk [vmem:[%s5 + $0x30] sm:$0xff] %vm751, 0.0
        %791 = vst.msk [vmem:[%s5 + $0x38] sm:$0xff] %vm751, 0.0
        %792 = vst.msk [vmem:[%s5 + $0x40] sm:$0xff] %vm751, 0.0
        %793 = vst.msk [vmem:[%s5 + $0x48] sm:$0xff] %vm751, 0.0
        %794 = vst.msk [vmem:[%s5 + $0x50] sm:$0xff] %vm751, 0.0
        %795 = vst.msk [vmem:[%s5 + $0x58] sm:$0xff] %vm751, 0.0
        %796 = vst.msk [vmem:[%s5 + $0x60] sm:$0xff] %vm751, 0.0
        %797 = vst.msk [vmem:[%s5 + $0x68] sm:$0xff] %vm751, 0.0
        %798 = vst.msk [vmem:[%s5 + $0x70] sm:$0xff] %vm751, 0.0
        %799 = vst.msk [vmem:[%s5 + $0x78] sm:$0xff] %vm751, 0.0
        %800 = vst.msk [vmem:[%s5 + $0x80] sm:$0xff] %vm751, 0.0
        %801 = vst.msk [vmem:[%s5 + $0x88] sm:$0xff] %vm751, 0.0
        %802 = vst.msk [vmem:[%s5 + $0x90] sm:$0xff] %vm751, 0.0
        %803 = vst.msk [vmem:[%s5 + $0x98] sm:$0xff] %vm751, 0.0
        %804 = vst.msk [vmem:[%s5 + $0xa0] sm:$0xff] %vm751, 0.0
        %805 = vst.msk [vmem:[%s5 + $0xa8] sm:$0xff] %vm751, 0.0
        %806 = vst.msk [vmem:[%s5 + $0xb0] sm:$0xff] %vm751, 0.0
        %807 = vst.msk [vmem:[%s5 + $0xb8] sm:$0xff] %vm751, 0.0
        %808 = vst.msk [vmem:[%s5 + $0xc0] sm:$0xff] %vm751, 0.0
        %809 = vst.msk [vmem:[%s5 + $0xc8] sm:$0xff] %vm751, 0.0
        %810 = vst.msk [vmem:[%s5 + $0xd0] sm:$0xff] %vm751, 0.0
        %811 = vst.msk [vmem:[%s5 + $0xd8] sm:$0xff] %vm751, 0.0
        %812 = vst.msk [vmem:[%s5 + $0xe0] sm:$0xff] %vm751, 0.0
        %813 = vst.msk [vmem:[%s5 + $0xe8] sm:$0xff] %vm751, 0.0
        %814 = vst.msk [vmem:[%s5 + $0xf0] sm:$0xff] %vm751, 0.0
        %815 = vst.msk [vmem:[%s5 + $0xf8] sm:$0xff] %vm751, 0.0
      $region32: #{bottleneck_forward.4} parent=27 // pred_fallthru
        _
      %v816 = vld [vmem:[%s4] sm:$0xff]
      %v817 = vld [vmem:[%s4 + $0x8] sm:$0xff]
      %v818 = vld [vmem:[%s4 + $0x10] sm:$0xff]
      %v819 = vld [vmem:[%s4 + $0x18] sm:$0xff]
      %v820 = vld [vmem:[%s4 + $0x20] sm:$0xff]
      %v821 = vld [vmem:[%s4 + $0x28] sm:$0xff]
      %v822 = vld [vmem:[%s4 + $0x30] sm:$0xff]
      %v823 = vld [vmem:[%s4 + $0x38] sm:$0xff]
      %v824 = vld [vmem:[%s4 + $0x40] sm:$0xff]
      %v825 = vld [vmem:[%s4 + $0x48] sm:$0xff]
      %v826 = vld [vmem:[%s4 + $0x50] sm:$0xff]
      %v827 = vld [vmem:[%s4 + $0x58] sm:$0xff]
      %v828 = vld [vmem:[%s4 + $0x60] sm:$0xff]
      %v829 = vld [vmem:[%s4 + $0x68] sm:$0xff]
      %v830 = vld [vmem:[%s4 + $0x70] sm:$0xff]
      %v831 = vld [vmem:[%s4 + $0x78] sm:$0xff]
      %v832 = vld [vmem:[%s4 + $0x80] sm:$0xff]
      %v833 = vld [vmem:[%s4 + $0x88] sm:$0xff]
      %v834 = vld [vmem:[%s4 + $0x90] sm:$0xff]
      %v835 = vld [vmem:[%s4 + $0x98] sm:$0xff]
      %v836 = vld [vmem:[%s4 + $0xa0] sm:$0xff]
      %v837 = vld [vmem:[%s4 + $0xa8] sm:$0xff]
      %v838 = vld [vmem:[%s4 + $0xb0] sm:$0xff]
      %v839 = vld [vmem:[%s4 + $0xb8] sm:$0xff]
      %v840 = vld [vmem:[%s4 + $0xc0] sm:$0xff]
      %v841 = vld [vmem:[%s4 + $0xc8] sm:$0xff]
      %v842 = vld [vmem:[%s4 + $0xd0] sm:$0xff]
      %v843 = vld [vmem:[%s4 + $0xd8] sm:$0xff]
      %v844 = vld [vmem:[%s4 + $0xe0] sm:$0xff]
      %v845 = vld [vmem:[%s4 + $0xe8] sm:$0xff]
      %v846 = vld [vmem:[%s4 + $0xf0] sm:$0xff]
      %v847 = vld [vmem:[%s4 + $0xf8] sm:$0xff]
      %vm848 = vcmask 130048
      %v849 = vsel %vm848, %v460, 0.0
      %850 = vadd.xlane.f32.xlu0 %v849
      %v851 = vpop.xlane.xlu0 %850
      %v852 = vsel %vm848, %v463, 0.0
      %853 = vadd.xlane.f32.xlu0 %v852
      %v854 = vpop.xlane.xlu0 %853
      %v855 = vsel %vm848, %v468, 0.0
      %856 = vadd.xlane.f32.xlu0 %v855
      %v857 = vpop.xlane.xlu0 %856
      %v858 = vsel %vm848, %v471, 0.0
      %859 = vadd.xlane.f32.xlu0 %v858
      %v860 = vpop.xlane.xlu0 %859
      %v861 = vsel %vm848, %v476, 0.0
      %862 = vadd.xlane.f32.xlu0 %v861
      %v863 = vpop.xlane.xlu0 %862
      %v864 = vsel %vm848, %v479, 0.0
      %865 = vadd.xlane.f32.xlu0 %v864
      %v866 = vpop.xlane.xlu0 %865
      %v867 = vsel %vm848, %v484, 0.0
      %868 = vadd.xlane.f32.xlu0 %v867
      %v869 = vpop.xlane.xlu0 %868
      %v870 = vsel %vm848, %v487, 0.0
      %871 = vadd.xlane.f32.xlu0 %v870
      %v872 = vpop.xlane.xlu0 %871
      %v873 = vsel %vm848, %v492, 0.0
      %874 = vadd.xlane.f32.xlu0 %v873
      %v875 = vpop.xlane.xlu0 %874
      %v876 = vsel %vm848, %v495, 0.0
      %877 = vadd.xlane.f32.xlu0 %v876
      %v878 = vpop.xlane.xlu0 %877
      %v879 = vsel %vm848, %v500, 0.0
      %880 = vadd.xlane.f32.xlu0 %v879
      %v881 = vpop.xlane.xlu0 %880
      %v882 = vsel %vm848, %v503, 0.0
      %883 = vadd.xlane.f32.xlu0 %v882
      %v884 = vpop.xlane.xlu0 %883
      %v885 = vsel %vm848, %v508, 0.0
      %886 = vadd.xlane.f32.xlu0 %v885
      %v887 = vpop.xlane.xlu0 %886
      %v888 = vsel %vm848, %v511, 0.0
      %889 = vadd.xlane.f32.xlu0 %v888
      %v890 = vpop.xlane.xlu0 %889
      %v891 = vsel %vm848, %v516, 0.0
      %892 = vadd.xlane.f32.xlu0 %v891
      %v893 = vpop.xlane.xlu0 %892
      %v894 = vsel %vm848, %v519, 0.0
      %895 = vadd.xlane.f32.xlu0 %v894
      %v896 = vpop.xlane.xlu0 %895
      %v897 = vsel %vm848, %v524, 0.0
      %898 = vadd.xlane.f32.xlu0 %v897
      %v899 = vpop.xlane.xlu0 %898
      %v900 = vsel %vm848, %v527, 0.0
      %901 = vadd.xlane.f32.xlu0 %v900
      %v902 = vpop.xlane.xlu0 %901
      %v903 = vsel %vm848, %v532, 0.0
      %904 = vadd.xlane.f32.xlu0 %v903
      %v905 = vpop.xlane.xlu0 %904
      %v906 = vsel %vm848, %v535, 0.0
      %907 = vadd.xlane.f32.xlu0 %v906
      %v908 = vpop.xlane.xlu0 %907
      %v909 = vsel %vm848, %v540, 0.0
      %910 = vadd.xlane.f32.xlu0 %v909
      %v911 = vpop.xlane.xlu0 %910
      %v912 = vsel %vm848, %v543, 0.0
      %913 = vadd.xlane.f32.xlu0 %v912
      %v914 = vpop.xlane.xlu0 %913
      %v915 = vsel %vm848, %v548, 0.0
      %916 = vadd.xlane.f32.xlu0 %v915
      %v917 = vpop.xlane.xlu0 %916
      %v918 = vsel %vm848, %v551, 0.0
      %919 = vadd.xlane.f32.xlu0 %v918
      %v920 = vpop.xlane.xlu0 %919
      %v921 = vsel %vm848, %v556, 0.0
      %922 = vadd.xlane.f32.xlu0 %v921
      %v923 = vpop.xlane.xlu0 %922
      %v924 = vsel %vm848, %v559, 0.0
      %925 = vadd.xlane.f32.xlu0 %v924
      %v926 = vpop.xlane.xlu0 %925
      %v927 = vsel %vm848, %v564, 0.0
      %928 = vadd.xlane.f32.xlu0 %v927
      %v929 = vpop.xlane.xlu0 %928
      %v930 = vsel %vm848, %v567, 0.0
      %931 = vadd.xlane.f32.xlu0 %v930
      %v932 = vpop.xlane.xlu0 %931
      %v933 = vsel %vm848, %v572, 0.0
      %934 = vadd.xlane.f32.xlu0 %v933
      %v935 = vpop.xlane.xlu0 %934
      %v936 = vsel %vm848, %v575, 0.0
      %937 = vadd.xlane.f32.xlu0 %v936
      %v938 = vpop.xlane.xlu0 %937
      %v939 = vsel %vm848, %v580, 0.0
      %940 = vadd.xlane.f32.xlu0 %v939
      %v941 = vpop.xlane.xlu0 %940
      %v942 = vsel %vm848, %v583, 0.0
      %943 = vadd.xlane.f32.xlu0 %v942
      %v944 = vpop.xlane.xlu0 %943
      %v945 = vadd.f32 %v816, %v851
      %v946 = vadd.f32 %v817, %v854
      %v947 = vadd.f32 %v818, %v857
      %v948 = vadd.f32 %v819, %v860
      %v949 = vadd.f32 %v820, %v863
      %v950 = vadd.f32 %v821, %v866
      %v951 = vadd.f32 %v822, %v869
      %v952 = vadd.f32 %v823, %v872
      %v953 = vadd.f32 %v824, %v875
      %v954 = vadd.f32 %v825, %v878
      %v955 = vadd.f32 %v826, %v881
      %v956 = vadd.f32 %v827, %v884
      %v957 = vadd.f32 %v828, %v887
      %v958 = vadd.f32 %v829, %v890
      %v959 = vadd.f32 %v830, %v893
      %v960 = vadd.f32 %v831, %v896
      %v961 = vadd.f32 %v832, %v899
      %v962 = vadd.f32 %v833, %v902
      %v963 = vadd.f32 %v834, %v905
      %v964 = vadd.f32 %v835, %v908
      %v965 = vadd.f32 %v836, %v911
      %v966 = vadd.f32 %v837, %v914
      %v967 = vadd.f32 %v838, %v917
      %v968 = vadd.f32 %v839, %v920
      %v969 = vadd.f32 %v840, %v923
      %v970 = vadd.f32 %v841, %v926
      %v971 = vadd.f32 %v842, %v929
      %v972 = vadd.f32 %v843, %v932
      %v973 = vadd.f32 %v844, %v935
      %v974 = vadd.f32 %v845, %v938
      %v975 = vadd.f32 %v846, %v941
      %v976 = vadd.f32 %v847, %v944
      %vm977 = vcmask 7168
      %978 = vst.msk [vmem:[%s4] sm:$0xff] %vm977, %v945
      %979 = vst.msk [vmem:[%s4 + $0x8] sm:$0xff] %vm977, %v946
      %980 = vst.msk [vmem:[%s4 + $0x10] sm:$0xff] %vm977, %v947
      %981 = vst.msk [vmem:[%s4 + $0x18] sm:$0xff] %vm977, %v948
      %982 = vst.msk [vmem:[%s4 + $0x20] sm:$0xff] %vm977, %v949
      %983 = vst.msk [vmem:[%s4 + $0x28] sm:$0xff] %vm977, %v950
      %984 = vst.msk [vmem:[%s4 + $0x30] sm:$0xff] %vm977, %v951
      %985 = vst.msk [vmem:[%s4 + $0x38] sm:$0xff] %vm977, %v952
      %986 = vst.msk [vmem:[%s4 + $0x40] sm:$0xff] %vm977, %v953
      %987 = vst.msk [vmem:[%s4 + $0x48] sm:$0xff] %vm977, %v954
      %988 = vst.msk [vmem:[%s4 + $0x50] sm:$0xff] %vm977, %v955
      %989 = vst.msk [vmem:[%s4 + $0x58] sm:$0xff] %vm977, %v956
      %990 = vst.msk [vmem:[%s4 + $0x60] sm:$0xff] %vm977, %v957
      %991 = vst.msk [vmem:[%s4 + $0x68] sm:$0xff] %vm977, %v958
      %992 = vst.msk [vmem:[%s4 + $0x70] sm:$0xff] %vm977, %v959
      %993 = vst.msk [vmem:[%s4 + $0x78] sm:$0xff] %vm977, %v960
      %994 = vst.msk [vmem:[%s4 + $0x80] sm:$0xff] %vm977, %v961
      %995 = vst.msk [vmem:[%s4 + $0x88] sm:$0xff] %vm977, %v962
      %996 = vst.msk [vmem:[%s4 + $0x90] sm:$0xff] %vm977, %v963
      %997 = vst.msk [vmem:[%s4 + $0x98] sm:$0xff] %vm977, %v964
      %998 = vst.msk [vmem:[%s4 + $0xa0] sm:$0xff] %vm977, %v965
      %999 = vst.msk [vmem:[%s4 + $0xa8] sm:$0xff] %vm977, %v966
      %1000 = vst.msk [vmem:[%s4 + $0xb0] sm:$0xff] %vm977, %v967
      %1001 = vst.msk [vmem:[%s4 + $0xb8] sm:$0xff] %vm977, %v968
      %1002 = vst.msk [vmem:[%s4 + $0xc0] sm:$0xff] %vm977, %v969
      %1003 = vst.msk [vmem:[%s4 + $0xc8] sm:$0xff] %vm977, %v970
      %1004 = vst.msk [vmem:[%s4 + $0xd0] sm:$0xff] %vm977, %v971
      %1005 = vst.msk [vmem:[%s4 + $0xd8] sm:$0xff] %vm977, %v972
      %1006 = vst.msk [vmem:[%s4 + $0xe0] sm:$0xff] %vm977, %v973
      %1007 = vst.msk [vmem:[%s4 + $0xe8] sm:$0xff] %vm977, %v974
      %1008 = vst.msk [vmem:[%s4 + $0xf0] sm:$0xff] %vm977, %v975
      %1009 = vst.msk [vmem:[%s4 + $0xf8] sm:$0xff] %vm977, %v976
      %v1010 = vld [vmem:[%s5] sm:$0xff]
      %v1011 = vld [vmem:[%s5 + $0x8] sm:$0xff]
      %v1012 = vld [vmem:[%s5 + $0x10] sm:$0xff]
      %v1013 = vld [vmem:[%s5 + $0x18] sm:$0xff]
      %v1014 = vld [vmem:[%s5 + $0x20] sm:$0xff]
      %v1015 = vld [vmem:[%s5 + $0x28] sm:$0xff]
      %v1016 = vld [vmem:[%s5 + $0x30] sm:$0xff]
      %v1017 = vld [vmem:[%s5 + $0x38] sm:$0xff]
      %v1018 = vld [vmem:[%s5 + $0x40] sm:$0xff]
      %v1019 = vld [vmem:[%s5 + $0x48] sm:$0xff]
      %v1020 = vld [vmem:[%s5 + $0x50] sm:$0xff]
      %v1021 = vld [vmem:[%s5 + $0x58] sm:$0xff]
      %v1022 = vld [vmem:[%s5 + $0x60] sm:$0xff]
      %v1023 = vld [vmem:[%s5 + $0x68] sm:$0xff]
      %v1024 = vld [vmem:[%s5 + $0x70] sm:$0xff]
      %v1025 = vld [vmem:[%s5 + $0x78] sm:$0xff]
      %v1026 = vld [vmem:[%s5 + $0x80] sm:$0xff]
      %v1027 = vld [vmem:[%s5 + $0x88] sm:$0xff]
      %v1028 = vld [vmem:[%s5 + $0x90] sm:$0xff]
      %v1029 = vld [vmem:[%s5 + $0x98] sm:$0xff]
      %v1030 = vld [vmem:[%s5 + $0xa0] sm:$0xff]
      %v1031 = vld [vmem:[%s5 + $0xa8] sm:$0xff]
      %v1032 = vld [vmem:[%s5 + $0xb0] sm:$0xff]
      %v1033 = vld [vmem:[%s5 + $0xb8] sm:$0xff]
      %v1034 = vld [vmem:[%s5 + $0xc0] sm:$0xff]
      %v1035 = vld [vmem:[%s5 + $0xc8] sm:$0xff]
      %v1036 = vld [vmem:[%s5 + $0xd0] sm:$0xff]
      %v1037 = vld [vmem:[%s5 + $0xd8] sm:$0xff]
      %v1038 = vld [vmem:[%s5 + $0xe0] sm:$0xff]
      %v1039 = vld [vmem:[%s5 + $0xe8] sm:$0xff]
      %v1040 = vld [vmem:[%s5 + $0xf0] sm:$0xff]
      %v1041 = vld [vmem:[%s5 + $0xf8] sm:$0xff]
      %v1042 = vmul.f32 %v460, %v460
      %v1043 = vmul.f32 %v463, %v463
      %v1044 = vmul.f32 %v468, %v468
      %v1045 = vmul.f32 %v471, %v471
      %v1046 = vmul.f32 %v476, %v476
      %v1047 = vmul.f32 %v479, %v479
      %v1048 = vmul.f32 %v484, %v484
      %v1049 = vmul.f32 %v487, %v487
      %v1050 = vmul.f32 %v492, %v492
      %v1051 = vmul.f32 %v495, %v495
      %v1052 = vmul.f32 %v500, %v500
      %v1053 = vmul.f32 %v503, %v503
      %v1054 = vmul.f32 %v508, %v508
      %v1055 = vmul.f32 %v511, %v511
      %v1056 = vmul.f32 %v516, %v516
      %v1057 = vmul.f32 %v519, %v519
      %v1058 = vmul.f32 %v524, %v524
      %v1059 = vmul.f32 %v527, %v527
      %v1060 = vmul.f32 %v532, %v532
      %v1061 = vmul.f32 %v535, %v535
      %v1062 = vmul.f32 %v540, %v540
      %v1063 = vmul.f32 %v543, %v543
      %v1064 = vmul.f32 %v548, %v548
      %v1065 = vmul.f32 %v551, %v551
      %v1066 = vmul.f32 %v556, %v556
      %v1067 = vmul.f32 %v559, %v559
      %v1068 = vmul.f32 %v564, %v564
      %v1069 = vmul.f32 %v567, %v567
      %v1070 = vmul.f32 %v572, %v572
      %v1071 = vmul.f32 %v575, %v575
      %v1072 = vmul.f32 %v580, %v580
      %v1073 = vmul.f32 %v583, %v583
      %v1074 = vsel %vm848, %v1042, 0.0
      %1075 = vadd.xlane.f32.xlu0 %v1074
      %v1076 = vpop.xlane.xlu0 %1075
      %v1077 = vsel %vm848, %v1043, 0.0
      %1078 = vadd.xlane.f32.xlu0 %v1077
      %v1079 = vpop.xlane.xlu0 %1078
      %v1080 = vsel %vm848, %v1044, 0.0
      %1081 = vadd.xlane.f32.xlu0 %v1080
      %v1082 = vpop.xlane.xlu0 %1081
      %v1083 = vsel %vm848, %v1045, 0.0
      %1084 = vadd.xlane.f32.xlu0 %v1083
      %v1085 = vpop.xlane.xlu0 %1084
      %v1086 = vsel %vm848, %v1046, 0.0
      %1087 = vadd.xlane.f32.xlu0 %v1086
      %v1088 = vpop.xlane.xlu0 %1087
      %v1089 = vsel %vm848, %v1047, 0.0
      %1090 = vadd.xlane.f32.xlu0 %v1089
      %v1091 = vpop.xlane.xlu0 %1090
      %v1092 = vsel %vm848, %v1048, 0.0
      %1093 = vadd.xlane.f32.xlu0 %v1092
      %v1094 = vpop.xlane.xlu0 %1093
      %v1095 = vsel %vm848, %v1049, 0.0
      %1096 = vadd.xlane.f32.xlu0 %v1095
      %v1097 = vpop.xlane.xlu0 %1096
      %v1098 = vsel %vm848, %v1050, 0.0
      %1099 = vadd.xlane.f32.xlu0 %v1098
      %v1100 = vpop.xlane.xlu0 %1099
      %v1101 = vsel %vm848, %v1051, 0.0
      %1102 = vadd.xlane.f32.xlu0 %v1101
      %v1103 = vpop.xlane.xlu0 %1102
      %v1104 = vsel %vm848, %v1052, 0.0
      %1105 = vadd.xlane.f32.xlu0 %v1104
      %v1106 = vpop.xlane.xlu0 %1105
      %v1107 = vsel %vm848, %v1053, 0.0
      %1108 = vadd.xlane.f32.xlu0 %v1107
      %v1109 = vpop.xlane.xlu0 %1108
      %v1110 = vsel %vm848, %v1054, 0.0
      %1111 = vadd.xlane.f32.xlu0 %v1110
      %v1112 = vpop.xlane.xlu0 %1111
      %v1113 = vsel %vm848, %v1055, 0.0
      %1114 = vadd.xlane.f32.xlu0 %v1113
      %v1115 = vpop.xlane.xlu0 %1114
      %v1116 = vsel %vm848, %v1056, 0.0
      %1117 = vadd.xlane.f32.xlu0 %v1116
      %v1118 = vpop.xlane.xlu0 %1117
      %v1119 = vsel %vm848, %v1057, 0.0
      %1120 = vadd.xlane.f32.xlu0 %v1119
      %v1121 = vpop.xlane.xlu0 %1120
      %v1122 = vsel %vm848, %v1058, 0.0
      %1123 = vadd.xlane.f32.xlu0 %v1122
      %v1124 = vpop.xlane.xlu0 %1123
      %v1125 = vsel %vm848, %v1059, 0.0
      %1126 = vadd.xlane.f32.xlu0 %v1125
      %v1127 = vpop.xlane.xlu0 %1126
      %v1128 = vsel %vm848, %v1060, 0.0
      %1129 = vadd.xlane.f32.xlu0 %v1128
      %v1130 = vpop.xlane.xlu0 %1129
      %v1131 = vsel %vm848, %v1061, 0.0
      %1132 = vadd.xlane.f32.xlu0 %v1131
      %v1133 = vpop.xlane.xlu0 %1132
      %v1134 = vsel %vm848, %v1062, 0.0
      %1135 = vadd.xlane.f32.xlu0 %v1134
      %v1136 = vpop.xlane.xlu0 %1135
      %v1137 = vsel %vm848, %v1063, 0.0
      %1138 = vadd.xlane.f32.xlu0 %v1137
      %v1139 = vpop.xlane.xlu0 %1138
      %v1140 = vsel %vm848, %v1064, 0.0
      %1141 = vadd.xlane.f32.xlu0 %v1140
      %v1142 = vpop.xlane.xlu0 %1141
      %v1143 = vsel %vm848, %v1065, 0.0
      %1144 = vadd.xlane.f32.xlu0 %v1143
      %v1145 = vpop.xlane.xlu0 %1144
      %v1146 = vsel %vm848, %v1066, 0.0
      %1147 = vadd.xlane.f32.xlu0 %v1146
      %v1148 = vpop.xlane.xlu0 %1147
      %v1149 = vsel %vm848, %v1067, 0.0
      %1150 = vadd.xlane.f32.xlu0 %v1149
      %v1151 = vpop.xlane.xlu0 %1150
      %v1152 = vsel %vm848, %v1068, 0.0
      %1153 = vadd.xlane.f32.xlu0 %v1152
      %v1154 = vpop.xlane.xlu0 %1153
      %v1155 = vsel %vm848, %v1069, 0.0
      %1156 = vadd.xlane.f32.xlu0 %v1155
      %v1157 = vpop.xlane.xlu0 %1156
      %v1158 = vsel %vm848, %v1070, 0.0
      %1159 = vadd.xlane.f32.xlu0 %v1158
      %v1160 = vpop.xlane.xlu0 %1159
      %v1161 = vsel %vm848, %v1071, 0.0
      %1162 = vadd.xlane.f32.xlu0 %v1161
      %v1163 = vpop.xlane.xlu0 %1162
      %v1164 = vsel %vm848, %v1072, 0.0
      %1165 = vadd.xlane.f32.xlu0 %v1164
      %v1166 = vpop.xlane.xlu0 %1165
      %v1167 = vsel %vm848, %v1073, 0.0
      %1168 = vadd.xlane.f32.xlu0 %v1167
      %v1169 = vpop.xlane.xlu0 %1168
      %v1170 = vadd.f32 %v1010, %v1076
      %v1171 = vadd.f32 %v1011, %v1079
      %v1172 = vadd.f32 %v1012, %v1082
      %v1173 = vadd.f32 %v1013, %v1085
      %v1174 = vadd.f32 %v1014, %v1088
      %v1175 = vadd.f32 %v1015, %v1091
      %v1176 = vadd.f32 %v1016, %v1094
      %v1177 = vadd.f32 %v1017, %v1097
      %v1178 = vadd.f32 %v1018, %v1100
      %v1179 = vadd.f32 %v1019, %v1103
      %v1180 = vadd.f32 %v1020, %v1106
      %v1181 = vadd.f32 %v1021, %v1109
      %v1182 = vadd.f32 %v1022, %v1112
      %v1183 = vadd.f32 %v1023, %v1115
      %v1184 = vadd.f32 %v1024, %v1118
      %v1185 = vadd.f32 %v1025, %v1121
      %v1186 = vadd.f32 %v1026, %v1124
      %v1187 = vadd.f32 %v1027, %v1127
      %v1188 = vadd.f32 %v1028, %v1130
      %v1189 = vadd.f32 %v1029, %v1133
      %v1190 = vadd.f32 %v1030, %v1136
      %v1191 = vadd.f32 %v1031, %v1139
      %v1192 = vadd.f32 %v1032, %v1142
      %v1193 = vadd.f32 %v1033, %v1145
      %v1194 = vadd.f32 %v1034, %v1148
      %v1195 = vadd.f32 %v1035, %v1151
      %v1196 = vadd.f32 %v1036, %v1154
      %v1197 = vadd.f32 %v1037, %v1157
      %v1198 = vadd.f32 %v1038, %v1160
      %v1199 = vadd.f32 %v1039, %v1163
      %v1200 = vadd.f32 %v1040, %v1166
      %v1201 = vadd.f32 %v1041, %v1169
      %1202 = vst.msk [vmem:[%s5] sm:$0xff] %vm977, %v1170
      %1203 = vst.msk [vmem:[%s5 + $0x8] sm:$0xff] %vm977, %v1171
      %1204 = vst.msk [vmem:[%s5 + $0x10] sm:$0xff] %vm977, %v1172
      %1205 = vst.msk [vmem:[%s5 + $0x18] sm:$0xff] %vm977, %v1173
      %1206 = vst.msk [vmem:[%s5 + $0x20] sm:$0xff] %vm977, %v1174
      %1207 = vst.msk [vmem:[%s5 + $0x28] sm:$0xff] %vm977, %v1175
      %1208 = vst.msk [vmem:[%s5 + $0x30] sm:$0xff] %vm977, %v1176
      %1209 = vst.msk [vmem:[%s5 + $0x38] sm:$0xff] %vm977, %v1177
      %1210 = vst.msk [vmem:[%s5 + $0x40] sm:$0xff] %vm977, %v1178
      %1211 = vst.msk [vmem:[%s5 + $0x48] sm:$0xff] %vm977, %v1179
      %1212 = vst.msk [vmem:[%s5 + $0x50] sm:$0xff] %vm977, %v1180
      %1213 = vst.msk [vmem:[%s5 + $0x58] sm:$0xff] %vm977, %v1181
      %1214 = vst.msk [vmem:[%s5 + $0x60] sm:$0xff] %vm977, %v1182
      %1215 = vst.msk [vmem:[%s5 + $0x68] sm:$0xff] %vm977, %v1183
      %1216 = vst.msk [vmem:[%s5 + $0x70] sm:$0xff] %vm977, %v1184
      %1217 = vst.msk [vmem:[%s5 + $0x78] sm:$0xff] %vm977, %v1185
      %1218 = vst.msk [vmem:[%s5 + $0x80] sm:$0xff] %vm977, %v1186
      %1219 = vst.msk [vmem:[%s5 + $0x88] sm:$0xff] %vm977, %v1187
      %1220 = vst.msk [vmem:[%s5 + $0x90] sm:$0xff] %vm977, %v1188
      %1221 = vst.msk [vmem:[%s5 + $0x98] sm:$0xff] %vm977, %v1189
      %1222 = vst.msk [vmem:[%s5 + $0xa0] sm:$0xff] %vm977, %v1190
      %1223 = vst.msk [vmem:[%s5 + $0xa8] sm:$0xff] %vm977, %v1191
      %1224 = vst.msk [vmem:[%s5 + $0xb0] sm:$0xff] %vm977, %v1192
      %1225 = vst.msk [vmem:[%s5 + $0xb8] sm:$0xff] %vm977, %v1193
      %1226 = vst.msk [vmem:[%s5 + $0xc0] sm:$0xff] %vm977, %v1194
      %1227 = vst.msk [vmem:[%s5 + $0xc8] sm:$0xff] %vm977, %v1195
      %1228 = vst.msk [vmem:[%s5 + $0xd0] sm:$0xff] %vm977, %v1196
      %1229 = vst.msk [vmem:[%s5 + $0xd8] sm:$0xff] %vm977, %v1197
      %1230 = vst.msk [vmem:[%s5 + $0xe0] sm:$0xff] %vm977, %v1198
      %1231 = vst.msk [vmem:[%s5 + $0xe8] sm:$0xff] %vm977, %v1199
      %1232 = vst.msk [vmem:[%s5 + $0xf0] sm:$0xff] %vm977, %v1200
      %1233 = vst.msk [vmem:[%s5 + $0xf8] sm:$0xff] %vm977, %v1201
      %p1234 = scmp.lt.s32.totalorder %s17, 1
      %s1235 = scalar_select %p1234, %s17, 1
      %s1236 = smul.addr %s1235, 16
      %s1237 = smul.addr %s1236, 4
      %s1238 = scalar_lea.vmem %s2, %s1237
      %p1239 = scmp.lt.s32.totalorder %s17, 1
      %s1240 = scalar_select %p1239, %s17, 1
      %s1241 = smul.addr %s1240, 16
      %s1242 = smul.addr %s1241, 4
      %s1243 = scalar_lea.vmem %s3, %s1242
      // Predicated region
      $region33: #{bottleneck_forward.4} parent=27 // pred_check
        %p1244 = pneg %p82
      $region34: #{bottleneck_forward.4} parent=27 // pred_check_branch
        %1246 = sbr.rel (%p1244) target = $region36
      $region35: #{bottleneck_forward.4} parent=27 // pred_region
        _
      $region36: #{bottleneck_forward.4} parent=27 // pred_fallthru
        _
      // Predicated region
      $region37: #{bottleneck_forward.4} parent=27 // pred_check
        %p1247 = pneg %p108
      $region38: #{bottleneck_forward.4} parent=27 // pred_check_branch
        %1249 = sbr.rel (%p1247) target = $region40
      $region39: #{bottleneck_forward.4} parent=27 // pred_region
        _
      $region40: #{bottleneck_forward.4} parent=27 // pred_fallthru
        _
      // Predicated region
      $region41: #{bottleneck_forward.4} parent=27 // pred_check
        %p1250 = pneg %p129
      $region42: #{bottleneck_forward.4} parent=27 // pred_check_branch
        %1252 = sbr.rel (%p1250) target = $region44
      $region43: #{bottleneck_forward.4} parent=27 // pred_region
        _
      $region44: #{bottleneck_forward.4} parent=27 // pred_fallthru
        _
      // Predicated region
      $region45: #{bottleneck_forward.4} parent=27 // pred_check
        %p1253 = pneg %p150
      $region46: #{bottleneck_forward.4} parent=27 // pred_check_branch
        %1255 = sbr.rel (%p1253) target = $region48
      $region47: #{bottleneck_forward.4} parent=27 // pred_region
        _
      $region48: #{bottleneck_forward.4} parent=27 // pred_fallthru
        _
      // Predicated region
      $region49: #{bottleneck_forward.4} parent=27 // pred_check
        %p1256 = pneg %p129
      $region50: #{bottleneck_forward.4} parent=27 // pred_check_branch
        %1258 = sbr.rel (%p1256) target = $region52
      $region51: #{bottleneck_forward.4} parent=27 // pred_region
        _
      $region52: #{bottleneck_forward.4} parent=27 // pred_fallthru
        _
      // Predicated region
      $region53: #{bottleneck_forward.4} parent=27 // pred_check
        %p1259 = pneg %p150
      $region54: #{bottleneck_forward.4} parent=27 // pred_check_branch
        %1261 = sbr.rel (%p1259) target = $region56
      $region55: #{bottleneck_forward.4} parent=27 // pred_region
        _
      $region56: #{bottleneck_forward.4} parent=27 // pred_fallthru
        _
    $region28: #{bottleneck_forward.4} parent=5 // pred_fallthru
      _
    %p1262 = scmp.le.s32.totalorder 2, %s12
    // Predicated region
    $region57: #{bottleneck_forward.4} parent=5 // pred_check
      %p1263 = pneg %p1262
    $region58: #{bottleneck_forward.4} parent=5 // pred_check_branch
      %1265 = sbr.rel (%p1263) target = $region60
    $region59: #{bottleneck_forward.4} parent=5 // pred_region
      %s1266 = ssub.s32 %s12, 2
      // Predicated region
      $region61: #{bottleneck_forward.4} parent=59 // pred_check
        %p1267 = pneg %p88
      $region62: #{bottleneck_forward.4} parent=59 // pred_check_branch
        %1269 = sbr.rel (%p1267) target = $region64
      $region63: #{bottleneck_forward.4} parent=59 // pred_region
        %p1270 = scmp.lt.s32.totalorder %s18, 1
        %s1271 = scalar_select %p1270, %s18, 1
        %s1272 = smul.addr %s1271, 16
        %s1273 = smul.addr %s1272, 4
        %s1274 = scalar_lea.vmem %s2, %s1273
      $region64: #{bottleneck_forward.4} parent=59 // pred_fallthru
        _
      // Predicated region
      $region65: #{bottleneck_forward.4} parent=59 // pred_check
        %p1275 = pneg %p114
      $region66: #{bottleneck_forward.4} parent=59 // pred_check_branch
        %1277 = sbr.rel (%p1275) target = $region68
      $region67: #{bottleneck_forward.4} parent=59 // pred_region
        %p1278 = scmp.lt.s32.totalorder %s18, 1
        %s1279 = scalar_select %p1278, %s18, 1
        %s1280 = smul.addr %s1279, 16
        %s1281 = smul.addr %s1280, 4
        %s1282 = scalar_lea.vmem %s3, %s1281
      $region68: #{bottleneck_forward.4} parent=59 // pred_fallthru
        _
    $region60: #{bottleneck_forward.4} parent=5 // pred_fallthru
      _
  $region6: #{bottleneck_forward.4} parent=0 // loop_footer
    %s16 = sadd.s32 1, %s12
  $region7: #{bottleneck_forward.4} parent=0 // loop_footer_branch
    %11 = sbr.rel target = $region3
  $region8: #{bottleneck_forward.4} parent=0 // loop_exit
    _

// kernel: bottleneck_forward.7
$region0: #{bottleneck_forward.7}
  #allocation0 [shape = 'u32[]', space=smem, size = 0x4, offset = 0x4, fixed_abs, tag = 'smem constant byte address 0x4 - core index']
  #allocation1 [shape = 'u32[144,128]{1,0:T(1,128)}', space=vmem, size = 0x12000, scoped, tag = 'internal scratch']
  %s0 = inlined_call_operand.vmem [shape: bf16[2,128,16], index: 0, kind: input, shape index: {}]
  %s1 = inlined_call_operand.vmem [shape: bf16[2,128,16], index: 1, kind: input, shape index: {}]
  %s2 = inlined_call_operand.vmem [shape: f32[128,1], index: 2, kind: input, shape index: {}]
  %s3 = inlined_call_operand.vmem [shape: f32[128,1], index: 3, kind: input, shape index: {}]
  %s4 = inlined_call_operand.vmem [shape: f32[128,1], index: 4, kind: input, shape index: {}]
  %s5 = inlined_call_operand.vmem [shape: f32[128,1], index: 5, kind: input, shape index: {}]
  %s6 = inlined_call_operand.vmem [shape: bf16[2,128,16], index: 6, kind: output, shape index: {}]
  %s7 = sld [smem:[#allocation0]]
  $region57: #{bottleneck_forward.7} parent=0
    _
  %s9 = ssub.s32 1, %s7
  %s10 = scalar_select 0, %s9, %s7
  loop: start=0, step=1, limit=4
  $region2: #{bottleneck_forward.7} parent=0 // loop_pre_header
    _
  $region3: #{bottleneck_forward.7} parent=0 // loop_header
    %s12 = sphi 0, %s16
    %p13 = scmp.ge.s32.totalorder %s12, 4
    %s22 = sphi 0, %s24
    %s25 = sphi 0, %s22
    %s26 = sphi 0, %s25
    %s42 = sphi 0, %s26
    %s48 = sphi 0, %s50
    %s51 = sphi 0, %s48
    %s52 = sphi 0, %s51
    %s68 = sphi 0, %s52
    %s72 = sphi 0, %s72
    %s74 = sphi 0, %s72
    %s75 = sphi 0, %s74
    %s89 = sphi 0, %s75
    %s93 = sphi 0, %s93
    %s95 = sphi 0, %s93
    %s96 = sphi 0, %s95
    %s110 = sphi 0, %s96
    %s114 = sphi 0, %s114
    %s116 = sphi 0, %s114
    %s117 = sphi 0, %s116
    %s131 = sphi 0, %s117
    %s135 = sphi 0, %s135
    %s137 = sphi 0, %s135
    %s138 = sphi 0, %s137
    %s152 = sphi 0, %s138
    %s158 = sphi 0, %s160
    %s161 = sphi 0, %s158
    %s162 = sphi 0, %s161
    %s178 = sphi 0, %s162
  $region4: #{bottleneck_forward.7} parent=0 // loop_header_branch
    %15 = sbr.rel (%p13) target = $region8
  $region5: #{bottleneck_forward.7} parent=0 // loop_body
    %s17 = ssub.s32 %s12, 1
    %s18 = ssub.s32 %s12, 2
    %s19 = sadd.s32 %s12, 1
    %s20 = ssub.s32 %s12, %s19
    %p21 = scmp.eq.s32.totalorder %s20, 0
    %s23 = sadd.s32 %s22, 1
    %s24 = scalar_select %p21, %s22, %s23
    %p27 = pneg %p21
    %p28 = scmp.eq.s32.totalorder %s12, 1
    %p29 = por %p27, %p28
    %p30 = scmp.ne.s32.totalorder %s22, %s25
    %p31 = scmp.eq.s32.totalorder %s12, 0
    %p32 = por %p30, %p31
    %p33 = scmp.ne.s32.totalorder %s22, %s25
    %p34 = scmp.eq.s32.totalorder %s17, 1
    %p35 = por %p33, %p34
    %p36 = scmp.ne.s32.totalorder %s25, %s26
    %p37 = scmp.eq.s32.totalorder %s17, 0
    %p38 = por %p36, %p37
    %p39 = scmp.ne.s32.totalorder %s25, %s26
    %p40 = scmp.eq.s32.totalorder %s18, 1
    %p41 = por %p39, %p40
    %p43 = scmp.ne.s32.totalorder %s26, %s42
    %p44 = scmp.eq.s32.totalorder %s18, 0
    %p45 = por %p43, %p44
    %s46 = ssub.s32 %s12, %s19
    %p47 = scmp.eq.s32.totalorder %s46, 0
    %s49 = sadd.s32 %s48, 1
    %s50 = scalar_select %p47, %s48, %s49
    %p53 = pneg %p47
    %p54 = scmp.eq.s32.totalorder %s12, 1
    %p55 = por %p53, %p54
    %p56 = scmp.ne.s32.totalorder %s48, %s51
    %p57 = scmp.eq.s32.totalorder %s12, 0
    %p58 = por %p56, %p57
    %p59 = scmp.ne.s32.totalorder %s48, %s51
    %p60 = scmp.eq.s32.totalorder %s17, 1
    %p61 = por %p59, %p60
    %p62 = scmp.ne.s32.totalorder %s51, %s52
    %p63 = scmp.eq.s32.totalorder %s17, 0
    %p64 = por %p62, %p63
    %p65 = scmp.ne.s32.totalorder %s51, %s52
    %p66 = scmp.eq.s32.totalorder %s18, 1
    %p67 = por %p65, %p66
    %p69 = scmp.ne.s32.totalorder %s52, %s68
    %p70 = scmp.eq.s32.totalorder %s18, 0
    %p71 = por %p69, %p70
    %s73 = sadd.s32 %s72, 1
    %p76 = scmp.eq.s32.totalorder %s12, 1
    %p77 = scmp.ne.s32.totalorder %s72, %s74
    %p78 = scmp.eq.s32.totalorder %s12, 0
    %p79 = por %p77, %p78
    %p80 = scmp.ne.s32.totalorder %s72, %s74
    %p81 = scmp.eq.s32.totalorder %s17, 1
    %p82 = por %p80, %p81
    %p83 = scmp.ne.s32.totalorder %s74, %s75
    %p84 = scmp.eq.s32.totalorder %s17, 0
    %p85 = por %p83, %p84
    %p86 = scmp.ne.s32.totalorder %s74, %s75
    %p87 = scmp.eq.s32.totalorder %s18, 1
    %p88 = por %p86, %p87
    %p90 = scmp.ne.s32.totalorder %s75, %s89
    %p91 = scmp.eq.s32.totalorder %s18, 0
    %p92 = por %p90, %p91
    %s94 = sadd.s32 %s93, 1
    %p97 = scmp.eq.s32.totalorder %s12, 1
    %p98 = scmp.ne.s32.totalorder %s93, %s95
    %p99 = scmp.eq.s32.totalorder %s12, 0
    %p100 = por %p98, %p99
    %p101 = scmp.ne.s32.totalorder %s93, %s95
    %p102 = scmp.eq.s32.totalorder %s17, 1
    %p103 = por %p101, %p102
    %p104 = scmp.ne.s32.totalorder %s95, %s96
    %p105 = scmp.eq.s32.totalorder %s17, 0
    %p106 = por %p104, %p105
    %p107 = scmp.ne.s32.totalorder %s95, %s96
    %p108 = scmp.eq.s32.totalorder %s18, 1
    %p109 = por %p107, %p108
    %p111 = scmp.ne.s32.totalorder %s96, %s110
    %p112 = scmp.eq.s32.totalorder %s18, 0
    %p113 = por %p111, %p112
    %s115 = sadd.s32 %s114, 1
    %p118 = scmp.eq.s32.totalorder %s12, 1
    %p119 = scmp.ne.s32.totalorder %s114, %s116
    %p120 = scmp.eq.s32.totalorder %s12, 0
    %p121 = por %p119, %p120
    %p122 = scmp.ne.s32.totalorder %s114, %s116
    %p123 = scmp.eq.s32.totalorder %s17, 1
    %p124 = por %p122, %p123
    %p125 = scmp.ne.s32.totalorder %s116, %s117
    %p126 = scmp.eq.s32.totalorder %s17, 0
    %p127 = por %p125, %p126
    %p128 = scmp.ne.s32.totalorder %s116, %s117
    %p129 = scmp.eq.s32.totalorder %s18, 1
    %p130 = por %p128, %p129
    %p132 = scmp.ne.s32.totalorder %s117, %s131
    %p133 = scmp.eq.s32.totalorder %s18, 0
    %p134 = por %p132, %p133
    %s136 = sadd.s32 %s135, 1
    %p139 = scmp.eq.s32.totalorder %s12, 1
    %p140 = scmp.ne.s32.totalorder %s135, %s137
    %p141 = scmp.eq.s32.totalorder %s12, 0
    %p142 = por %p140, %p141
    %p143 = scmp.ne.s32.totalorder %s135, %s137
    %p144 = scmp.eq.s32.totalorder %s17, 1
    %p145 = por %p143, %p144
    %p146 = scmp.ne.s32.totalorder %s137, %s138
    %p147 = scmp.eq.s32.totalorder %s17, 0
    %p148 = por %p146, %p147
    %p149 = scmp.ne.s32.totalorder %s137, %s138
    %p150 = scmp.eq.s32.totalorder %s18, 1
    %p151 = por %p149, %p150
    %p153 = scmp.ne.s32.totalorder %s138, %s152
    %p154 = scmp.eq.s32.totalorder %s18, 0
    %p155 = por %p153, %p154
    %s156 = ssub.s32 %s12, %s19
    %p157 = scmp.eq.s32.totalorder %s156, 0
    %s159 = sadd.s32 %s158, 1
    %s160 = scalar_select %p157, %s158, %s159
    %p163 = pneg %p157
    %p164 = scmp.eq.s32.totalorder %s12, 1
    %p165 = por %p163, %p164
    %p166 = scmp.ne.s32.totalorder %s158, %s161
    %p167 = scmp.eq.s32.totalorder %s12, 0
    %p168 = por %p166, %p167
    %p169 = scmp.ne.s32.totalorder %s158, %s161
    %p170 = scmp.eq.s32.totalorder %s17, 1
    %p171 = por %p169, %p170
    %p172 = scmp.ne.s32.totalorder %s161, %s162
    %p173 = scmp.eq.s32.totalorder %s17, 0
    %p174 = por %p172, %p173
    %p175 = scmp.ne.s32.totalorder %s161, %s162
    %p176 = scmp.eq.s32.totalorder %s18, 1
    %p177 = por %p175, %p176
    %p179 = scmp.ne.s32.totalorder %s162, %s178
    %p180 = scmp.eq.s32.totalorder %s18, 0
    %p181 = por %p179, %p180
    %p182 = scmp.le.s32.totalorder 1, %s12
    %p183 = scmp.lt.s32.totalorder %s12, 3
    %p184 = pnand %p182, %p183
    %p185 = pneg %p184
    // Predicated region
    $region9: #{bottleneck_forward.7} parent=5 // pred_check
      _
    $region10: #{bottleneck_forward.7} parent=5 // pred_check_branch
      %187 = sbr.rel (%p184) target = $region12
    $region11: #{bottleneck_forward.7} parent=5 // pred_region
      %s188 = ssub.s32 %s12, 1
      // Predicated region
      $region13: #{bottleneck_forward.7} parent=11 // pred_check
        %p189 = pneg %p85
      $region14: #{bottleneck_forward.7} parent=11 // pred_check_branch
        %191 = sbr.rel (%p189) target = $region16
      $region15: #{bottleneck_forward.7} parent=11 // pred_region
        _
      $region16: #{bottleneck_forward.7} parent=11 // pred_fallthru
        _
      // Predicated region
      $region17: #{bottleneck_forward.7} parent=11 // pred_check
        %p192 = pneg %p106
      $region18: #{bottleneck_forward.7} parent=11 // pred_check_branch
        %194 = sbr.rel (%p192) target = $region20
      $region19: #{bottleneck_forward.7} parent=11 // pred_region
        _
      $region20: #{bottleneck_forward.7} parent=11 // pred_fallthru
        _
      // Predicated region
      $region21: #{bottleneck_forward.7} parent=11 // pred_check
        %p195 = pneg %p127
      $region22: #{bottleneck_forward.7} parent=11 // pred_check_branch
        %197 = sbr.rel (%p195) target = $region24
      $region23: #{bottleneck_forward.7} parent=11 // pred_region
        _
      $region24: #{bottleneck_forward.7} parent=11 // pred_fallthru
        _
      // Predicated region
      $region25: #{bottleneck_forward.7} parent=11 // pred_check
        %p198 = pneg %p148
      $region26: #{bottleneck_forward.7} parent=11 // pred_check_branch
        %200 = sbr.rel (%p198) target = $region28
      $region27: #{bottleneck_forward.7} parent=11 // pred_region
        _
      $region28: #{bottleneck_forward.7} parent=11 // pred_fallthru
        _
    $region12: #{bottleneck_forward.7} parent=5 // pred_fallthru
      _
    %p201 = scmp.lt.s32.totalorder %s12, 2
    // Predicated region
    $region29: #{bottleneck_forward.7} parent=5 // pred_check
      %p202 = pneg %p201
    $region30: #{bottleneck_forward.7} parent=5 // pred_check_branch
      %204 = sbr.rel (%p202) target = $region32
    $region31: #{bottleneck_forward.7} parent=5 // pred_region
      // Predicated region
      $region33: #{bottleneck_forward.7} parent=31 // pred_check
        %p205 = pneg %p32
      $region34: #{bottleneck_forward.7} parent=31 // pred_check_branch
        %207 = sbr.rel (%p205) target = $region36
      $region35: #{bottleneck_forward.7} parent=31 // pred_region
        %p208 = scmp.lt.s32.totalorder %s12, 1
        %s209 = scalar_select %p208, %s12, 1
        %s210 = smul.addr %s209, 16
        %s211 = smul.addr %s210, 4
        %s212 = scalar_lea.vmem %s0, %s211
      $region36: #{bottleneck_forward.7} parent=31 // pred_fallthru
        _
      // Predicated region
      $region37: #{bottleneck_forward.7} parent=31 // pred_check
        %p213 = pneg %p58
      $region38: #{bottleneck_forward.7} parent=31 // pred_check_branch
        %215 = sbr.rel (%p213) target = $region40
      $region39: #{bottleneck_forward.7} parent=31 // pred_region
        %p216 = scmp.lt.s32.totalorder %s12, 1
        %s217 = scalar_select %p216, %s12, 1
        %s218 = smul.addr %s217, 16
        %s219 = smul.addr %s218, 4
        %s220 = scalar_lea.vmem %s1, %s219
      $region40: #{bottleneck_forward.7} parent=31 // pred_fallthru
        _
    $region32: #{bottleneck_forward.7} parent=5 // pred_fallthru
      _
    %p221 = scmp.le.s32.totalorder 1, %s12
    %p222 = scmp.lt.s32.totalorder %s12, 3
    %p223 = pnand %p221, %p222
    %p224 = pneg %p223
    // Predicated region
    $region41: #{bottleneck_forward.7} parent=5 // pred_check
      _
    $region42: #{bottleneck_forward.7} parent=5 // pred_check_branch
      %226 = sbr.rel (%p223) target = $region44
    $region43: #{bottleneck_forward.7} parent=5 // pred_region
      %s227 = ssub.s32 %s12, 1
      %p228 = scmp.lt.s32.totalorder %s17, 1
      %s229 = scalar_select %p228, %s17, 1
      %s230 = smul.addr %s229, 16
      %s231 = smul.addr %s230, 4
      %s232 = scalar_lea.vmem %s0, %s231
      %p233 = pneg %p38
      %p234 = pneg %p35
      %p235 = scmp.lt.s32.totalorder %s17, 1
      %s236 = scalar_select %p235, %s17, 1
      %s237 = smul.addr %s236, 16
      %s238 = smul.addr %s237, 4
      %s239 = scalar_lea.vmem %s1, %s238
      %p240 = pneg %p64
      %p241 = pneg %p61
      %p242 = pneg %p85
      %p243 = pneg %p82
      %p244 = pneg %p106
      %p245 = pneg %p103
      %p246 = pneg %p127
      %p247 = pneg %p124
      %p248 = pneg %p148
      %p249 = pneg %p145
      %p250 = pneg %p174
      %p251 = pneg %p171
      %p252 = scmp.lt.s32.totalorder %s17, 1
      %s253 = scalar_select %p252, %s17, 1
      %s254 = smul.addr %s253, 16
      %s255 = smul.addr %s254, 4
      %s256 = scalar_lea.vmem %s6, %s255
      %p257 = scmp.lt.s32.totalorder %s17, 1
      %s258 = scalar_select %p257, %s17, 1
      %s259 = smul.addr %s258, 16
      %s260 = smul.addr %s259, 4
      %s261 = scalar_lea.vmem %s0, %s260
      %p262 = scmp.lt.s32.totalorder %s17, 1
      %s263 = scalar_select %p262, %s17, 1
      %s264 = smul.addr %s263, 16
      %s265 = smul.addr %s264, 4
      %s266 = scalar_lea.vmem %s1, %s265
      %p267 = scmp.lt.s32.totalorder %s17, 1
      %s268 = scalar_select %p267, %s17, 1
      %s269 = smul.addr %s268, 16
      %s270 = smul.addr %s269, 4
      %s271 = scalar_lea.vmem %s6, %s270
      %v272 = vld [vmem:[%s261] sm:$0xf]
      %v273 = vld [vmem:[%s261 + $0x4] sm:$0xf]
      %v274 = vld [vmem:[%s261 + $0x8] sm:$0xf]
      %v275 = vld [vmem:[%s261 + $0xc] sm:$0xf]
      %v276 = vld [vmem:[%s261 + $0x10] sm:$0xf]
      %v277 = vld [vmem:[%s261 + $0x14] sm:$0xf]
      %v278 = vld [vmem:[%s261 + $0x18] sm:$0xf]
      %v279 = vld [vmem:[%s261 + $0x1c] sm:$0xf]
      %v280 = vld [vmem:[%s261 + $0x20] sm:$0xf]
      %v281 = vld [vmem:[%s261 + $0x24] sm:$0xf]
      %v282 = vld [vmem:[%s261 + $0x28] sm:$0xf]
      %v283 = vld [vmem:[%s261 + $0x2c] sm:$0xf]
      %v284 = vld [vmem:[%s261 + $0x30] sm:$0xf]
      %v285 = vld [vmem:[%s261 + $0x34] sm:$0xf]
      %v286 = vld [vmem:[%s261 + $0x38] sm:$0xf]
      %v287 = vld [vmem:[%s261 + $0x3c] sm:$0xf]
      %v288 = vunpack.c.l.bf16 %v272
      %v289 = vunpack.c.l.bf16 %v273
      %v290 = vunpack.c.l.bf16 %v274
      %v291 = vunpack.c.l.bf16 %v275
      %v292 = vunpack.c.l.bf16 %v276
      %v293 = vunpack.c.l.bf16 %v277
      %v294 = vunpack.c.l.bf16 %v278
      %v295 = vunpack.c.l.bf16 %v279
      %v296 = vunpack.c.l.bf16 %v280
      %v297 = vunpack.c.l.bf16 %v281
      %v298 = vunpack.c.l.bf16 %v282
      %v299 = vunpack.c.l.bf16 %v283
      %v300 = vunpack.c.l.bf16 %v284
      %v301 = vunpack.c.l.bf16 %v285
      %v302 = vunpack.c.l.bf16 %v286
      %v303 = vunpack.c.l.bf16 %v287
      %v304 = vld [vmem:[%s2] sm:$0xff]
      %v305 = vld [vmem:[%s2 + $0x8] sm:$0xff]
      %v306 = vld [vmem:[%s2 + $0x10] sm:$0xff]
      %v307 = vld [vmem:[%s2 + $0x18] sm:$0xff]
      %v308 = vld [vmem:[%s2 + $0x20] sm:$0xff]
      %v309 = vld [vmem:[%s2 + $0x28] sm:$0xff]
      %v310 = vld [vmem:[%s2 + $0x30] sm:$0xff]
      %v311 = vld [vmem:[%s2 + $0x38] sm:$0xff]
      %v312 = vld [vmem:[%s2 + $0x40] sm:$0xff]
      %v313 = vld [vmem:[%s2 + $0x48] sm:$0xff]
      %v314 = vld [vmem:[%s2 + $0x50] sm:$0xff]
      %v315 = vld [vmem:[%s2 + $0x58] sm:$0xff]
      %v316 = vld [vmem:[%s2 + $0x60] sm:$0xff]
      %v317 = vld [vmem:[%s2 + $0x68] sm:$0xff]
      %v318 = vld [vmem:[%s2 + $0x70] sm:$0xff]
      %v319 = vld [vmem:[%s2 + $0x78] sm:$0xff]
      %321 = vset.pattern.permute.xlu0 0
      %322 = vperm.xlu0 %321, %v304
      %v323 = vpop.permute.xlu0 %322
      %326 = vset.pattern.permute.xlu0 0
      %327 = vperm.xlu0 %326, %v305
      %v328 = vpop.permute.xlu0 %327
      %331 = vset.pattern.permute.xlu0 0
      %332 = vperm.xlu0 %331, %v306
      %v333 = vpop.permute.xlu0 %332
      %336 = vset.pattern.permute.xlu0 0
      %337 = vperm.xlu0 %336, %v307
      %v338 = vpop.permute.xlu0 %337
      %341 = vset.pattern.permute.xlu0 0
      %342 = vperm.xlu0 %341, %v308
      %v343 = vpop.permute.xlu0 %342
      %346 = vset.pattern.permute.xlu0 0
      %347 = vperm.xlu0 %346, %v309
      %v348 = vpop.permute.xlu0 %347
      %351 = vset.pattern.permute.xlu0 0
      %352 = vperm.xlu0 %351, %v310
      %v353 = vpop.permute.xlu0 %352
      %356 = vset.pattern.permute.xlu0 0
      %357 = vperm.xlu0 %356, %v311
      %v358 = vpop.permute.xlu0 %357
      %361 = vset.pattern.permute.xlu0 0
      %362 = vperm.xlu0 %361, %v312
      %v363 = vpop.permute.xlu0 %362
      %366 = vset.pattern.permute.xlu0 0
      %367 = vperm.xlu0 %366, %v313
      %v368 = vpop.permute.xlu0 %367
      %371 = vset.pattern.permute.xlu0 0
      %372 = vperm.xlu0 %371, %v314
      %v373 = vpop.permute.xlu0 %372
      %376 = vset.pattern.permute.xlu0 0
      %377 = vperm.xlu0 %376, %v315
      %v378 = vpop.permute.xlu0 %377
      %381 = vset.pattern.permute.xlu0 0
      %382 = vperm.xlu0 %381, %v316
      %v383 = vpop.permute.xlu0 %382
      %386 = vset.pattern.permute.xlu0 0
      %387 = vperm.xlu0 %386, %v317
      %v388 = vpop.permute.xlu0 %387
      %391 = vset.pattern.permute.xlu0 0
      %392 = vperm.xlu0 %391, %v318
      %v393 = vpop.permute.xlu0 %392
      %396 = vset.pattern.permute.xlu0 0
      %397 = vperm.xlu0 %396, %v319
      %v398 = vpop.permute.xlu0 %397
      %v400 = vmul.f32 %v288, %v323
      %v401 = vmul.f32 %v289, %v328
      %v402 = vmul.f32 %v290, %v333
      %v403 = vmul.f32 %v291, %v338
      %v404 = vmul.f32 %v292, %v343
      %v405 = vmul.f32 %v293, %v348
      %v406 = vmul.f32 %v294, %v353
      %v407 = vmul.f32 %v295, %v358
      %v408 = vmul.f32 %v296, %v363
      %v409 = vmul.f32 %v297, %v368
      %v410 = vmul.f32 %v298, %v373
      %v411 = vmul.f32 %v299, %v378
      %v412 = vmul.f32 %v300, %v383
      %v413 = vmul.f32 %v301, %v388
      %v414 = vmul.f32 %v302, %v393
      %v415 = vmul.f32 %v303, %v398
      %v416 = vld [vmem:[%s3] sm:$0xff]
      %v417 = vld [vmem:[%s3 + $0x8] sm:$0xff]
      %v418 = vld [vmem:[%s3 + $0x10] sm:$0xff]
      %v419 = vld [vmem:[%s3 + $0x18] sm:$0xff]
      %v420 = vld [vmem:[%s3 + $0x20] sm:$0xff]
      %v421 = vld [vmem:[%s3 + $0x28] sm:$0xff]
      %v422 = vld [vmem:[%s3 + $0x30] sm:$0xff]
      %v423 = vld [vmem:[%s3 + $0x38] sm:$0xff]
      %v424 = vld [vmem:[%s3 + $0x40] sm:$0xff]
      %v425 = vld [vmem:[%s3 + $0x48] sm:$0xff]
      %v426 = vld [vmem:[%s3 + $0x50] sm:$0xff]
      %v427 = vld [vmem:[%s3 + $0x58] sm:$0xff]
      %v428 = vld [vmem:[%s3 + $0x60] sm:$0xff]
      %v429 = vld [vmem:[%s3 + $0x68] sm:$0xff]
      %v430 = vld [vmem:[%s3 + $0x70] sm:$0xff]
      %v431 = vld [vmem:[%s3 + $0x78] sm:$0xff]
      %433 = vset.pattern.permute.xlu0 0
      %434 = vperm.xlu0 %433, %v416
      %v435 = vpop.permute.xlu0 %434
      %438 = vset.pattern.permute.xlu0 0
      %439 = vperm.xlu0 %438, %v417
      %v440 = vpop.permute.xlu0 %439
      %443 = vset.pattern.permute.xlu0 0
      %444 = vperm.xlu0 %443, %v418
      %v445 = vpop.permute.xlu0 %444
      %448 = vset.pattern.permute.xlu0 0
      %449 = vperm.xlu0 %448, %v419
      %v450 = vpop.permute.xlu0 %449
      %453 = vset.pattern.permute.xlu0 0
      %454 = vperm.xlu0 %453, %v420
      %v455 = vpop.permute.xlu0 %454
      %458 = vset.pattern.permute.xlu0 0
      %459 = vperm.xlu0 %458, %v421
      %v460 = vpop.permute.xlu0 %459
      %463 = vset.pattern.permute.xlu0 0
      %464 = vperm.xlu0 %463, %v422
      %v465 = vpop.permute.xlu0 %464
      %468 = vset.pattern.permute.xlu0 0
      %469 = vperm.xlu0 %468, %v423
      %v470 = vpop.permute.xlu0 %469
      %473 = vset.pattern.permute.xlu0 0
      %474 = vperm.xlu0 %473, %v424
      %v475 = vpop.permute.xlu0 %474
      %478 = vset.pattern.permute.xlu0 0
      %479 = vperm.xlu0 %478, %v425
      %v480 = vpop.permute.xlu0 %479
      %483 = vset.pattern.permute.xlu0 0
      %484 = vperm.xlu0 %483, %v426
      %v485 = vpop.permute.xlu0 %484
      %488 = vset.pattern.permute.xlu0 0
      %489 = vperm.xlu0 %488, %v427
      %v490 = vpop.permute.xlu0 %489
      %493 = vset.pattern.permute.xlu0 0
      %494 = vperm.xlu0 %493, %v428
      %v495 = vpop.permute.xlu0 %494
      %498 = vset.pattern.permute.xlu0 0
      %499 = vperm.xlu0 %498, %v429
      %v500 = vpop.permute.xlu0 %499
      %503 = vset.pattern.permute.xlu0 0
      %504 = vperm.xlu0 %503, %v430
      %v505 = vpop.permute.xlu0 %504
      %508 = vset.pattern.permute.xlu0 0
      %509 = vperm.xlu0 %508, %v431
      %v510 = vpop.permute.xlu0 %509
      %v512 = vadd.f32 %v400, %v435
      %v513 = vadd.f32 %v401, %v440
      %v514 = vadd.f32 %v402, %v445
      %v515 = vadd.f32 %v403, %v450
      %v516 = vadd.f32 %v404, %v455
      %v517 = vadd.f32 %v405, %v460
      %v518 = vadd.f32 %v406, %v465
      %v519 = vadd.f32 %v407, %v470
      %v520 = vadd.f32 %v408, %v475
      %v521 = vadd.f32 %v409, %v480
      %v522 = vadd.f32 %v410, %v485
      %v523 = vadd.f32 %v411, %v490
      %v524 = vadd.f32 %v412, %v495
      %v525 = vadd.f32 %v413, %v500
      %v526 = vadd.f32 %v414, %v505
      %v527 = vadd.f32 %v415, %v510
      %v528 = vld [vmem:[%s266] sm:$0xf]
      %v529 = vld [vmem:[%s266 + $0x4] sm:$0xf]
      %v530 = vld [vmem:[%s266 + $0x8] sm:$0xf]
      %v531 = vld [vmem:[%s266 + $0xc] sm:$0xf]
      %v532 = vld [vmem:[%s266 + $0x10] sm:$0xf]
      %v533 = vld [vmem:[%s266 + $0x14] sm:$0xf]
      %v534 = vld [vmem:[%s266 + $0x18] sm:$0xf]
      %v535 = vld [vmem:[%s266 + $0x1c] sm:$0xf]
      %v536 = vld [vmem:[%s266 + $0x20] sm:$0xf]
      %v537 = vld [vmem:[%s266 + $0x24] sm:$0xf]
      %v538 = vld [vmem:[%s266 + $0x28] sm:$0xf]
      %v539 = vld [vmem:[%s266 + $0x2c] sm:$0xf]
      %v540 = vld [vmem:[%s266 + $0x30] sm:$0xf]
      %v541 = vld [vmem:[%s266 + $0x34] sm:$0xf]
      %v542 = vld [vmem:[%s266 + $0x38] sm:$0xf]
      %v543 = vld [vmem:[%s266 + $0x3c] sm:$0xf]
      %v544 = vunpack.c.l.bf16 %v528
      %v545 = vunpack.c.l.bf16 %v529
      %v546 = vunpack.c.l.bf16 %v530
      %v547 = vunpack.c.l.bf16 %v531
      %v548 = vunpack.c.l.bf16 %v532
      %v549 = vunpack.c.l.bf16 %v533
      %v550 = vunpack.c.l.bf16 %v534
      %v551 = vunpack.c.l.bf16 %v535
      %v552 = vunpack.c.l.bf16 %v536
      %v553 = vunpack.c.l.bf16 %v537
      %v554 = vunpack.c.l.bf16 %v538
      %v555 = vunpack.c.l.bf16 %v539
      %v556 = vunpack.c.l.bf16 %v540
      %v557 = vunpack.c.l.bf16 %v541
      %v558 = vunpack.c.l.bf16 %v542
      %v559 = vunpack.c.l.bf16 %v543
      %v560 = vld [vmem:[%s4] sm:$0xff]
      %v561 = vld [vmem:[%s4 + $0x8] sm:$0xff]
      %v562 = vld [vmem:[%s4 + $0x10] sm:$0xff]
      %v563 = vld [vmem:[%s4 + $0x18] sm:$0xff]
      %v564 = vld [vmem:[%s4 + $0x20] sm:$0xff]
      %v565 = vld [vmem:[%s4 + $0x28] sm:$0xff]
      %v566 = vld [vmem:[%s4 + $0x30] sm:$0xff]
      %v567 = vld [vmem:[%s4 + $0x38] sm:$0xff]
      %v568 = vld [vmem:[%s4 + $0x40] sm:$0xff]
      %v569 = vld [vmem:[%s4 + $0x48] sm:$0xff]
      %v570 = vld [vmem:[%s4 + $0x50] sm:$0xff]
      %v571 = vld [vmem:[%s4 + $0x58] sm:$0xff]
      %v572 = vld [vmem:[%s4 + $0x60] sm:$0xff]
      %v573 = vld [vmem:[%s4 + $0x68] sm:$0xff]
      %v574 = vld [vmem:[%s4 + $0x70] sm:$0xff]
      %v575 = vld [vmem:[%s4 + $0x78] sm:$0xff]
      %577 = vset.pattern.permute.xlu0 0
      %578 = vperm.xlu0 %577, %v560
      %v579 = vpop.permute.xlu0 %578
      %582 = vset.pattern.permute.xlu0 0
      %583 = vperm.xlu0 %582, %v561
      %v584 = vpop.permute.xlu0 %583
      %587 = vset.pattern.permute.xlu0 0
      %588 = vperm.xlu0 %587, %v562
      %v589 = vpop.permute.xlu0 %588
      %592 = vset.pattern.permute.xlu0 0
      %593 = vperm.xlu0 %592, %v563
      %v594 = vpop.permute.xlu0 %593
      %597 = vset.pattern.permute.xlu0 0
      %598 = vperm.xlu0 %597, %v564
      %v599 = vpop.permute.xlu0 %598
      %602 = vset.pattern.permute.xlu0 0
      %603 = vperm.xlu0 %602, %v565
      %v604 = vpop.permute.xlu0 %603
      %607 = vset.pattern.permute.xlu0 0
      %608 = vperm.xlu0 %607, %v566
      %v609 = vpop.permute.xlu0 %608
      %612 = vset.pattern.permute.xlu0 0
      %613 = vperm.xlu0 %612, %v567
      %v614 = vpop.permute.xlu0 %613
      %617 = vset.pattern.permute.xlu0 0
      %618 = vperm.xlu0 %617, %v568
      %v619 = vpop.permute.xlu0 %618
      %622 = vset.pattern.permute.xlu0 0
      %623 = vperm.xlu0 %622, %v569
      %v624 = vpop.permute.xlu0 %623
      %627 = vset.pattern.permute.xlu0 0
      %628 = vperm.xlu0 %627, %v570
      %v629 = vpop.permute.xlu0 %628
      %632 = vset.pattern.permute.xlu0 0
      %633 = vperm.xlu0 %632, %v571
      %v634 = vpop.permute.xlu0 %633
      %637 = vset.pattern.permute.xlu0 0
      %638 = vperm.xlu0 %637, %v572
      %v639 = vpop.permute.xlu0 %638
      %642 = vset.pattern.permute.xlu0 0
      %643 = vperm.xlu0 %642, %v573
      %v644 = vpop.permute.xlu0 %643
      %647 = vset.pattern.permute.xlu0 0
      %648 = vperm.xlu0 %647, %v574
      %v649 = vpop.permute.xlu0 %648
      %652 = vset.pattern.permute.xlu0 0
      %653 = vperm.xlu0 %652, %v575
      %v654 = vpop.permute.xlu0 %653
      %v656 = vmul.f32 %v544, %v579
      %v657 = vmul.f32 %v545, %v584
      %v658 = vmul.f32 %v546, %v589
      %v659 = vmul.f32 %v547, %v594
      %v660 = vmul.f32 %v548, %v599
      %v661 = vmul.f32 %v549, %v604
      %v662 = vmul.f32 %v550, %v609
      %v663 = vmul.f32 %v551, %v614
      %v664 = vmul.f32 %v552, %v619
      %v665 = vmul.f32 %v553, %v624
      %v666 = vmul.f32 %v554, %v629
      %v667 = vmul.f32 %v555, %v634
      %v668 = vmul.f32 %v556, %v639
      %v669 = vmul.f32 %v557, %v644
      %v670 = vmul.f32 %v558, %v649
      %v671 = vmul.f32 %v559, %v654
      %v672 = vld [vmem:[%s5] sm:$0xff]
      %v673 = vld [vmem:[%s5 + $0x8] sm:$0xff]
      %v674 = vld [vmem:[%s5 + $0x10] sm:$0xff]
      %v675 = vld [vmem:[%s5 + $0x18] sm:$0xff]
      %v676 = vld [vmem:[%s5 + $0x20] sm:$0xff]
      %v677 = vld [vmem:[%s5 + $0x28] sm:$0xff]
      %v678 = vld [vmem:[%s5 + $0x30] sm:$0xff]
      %v679 = vld [vmem:[%s5 + $0x38] sm:$0xff]
      %v680 = vld [vmem:[%s5 + $0x40] sm:$0xff]
      %v681 = vld [vmem:[%s5 + $0x48] sm:$0xff]
      %v682 = vld [vmem:[%s5 + $0x50] sm:$0xff]
      %v683 = vld [vmem:[%s5 + $0x58] sm:$0xff]
      %v684 = vld [vmem:[%s5 + $0x60] sm:$0xff]
      %v685 = vld [vmem:[%s5 + $0x68] sm:$0xff]
      %v686 = vld [vmem:[%s5 + $0x70] sm:$0xff]
      %v687 = vld [vmem:[%s5 + $0x78] sm:$0xff]
      %689 = vset.pattern.permute.xlu0 0
      %690 = vperm.xlu0 %689, %v672
      %v691 = vpop.permute.xlu0 %690
      %694 = vset.pattern.permute.xlu0 0
      %695 = vperm.xlu0 %694, %v673
      %v696 = vpop.permute.xlu0 %695
      %699 = vset.pattern.permute.xlu0 0
      %700 = vperm.xlu0 %699, %v674
      %v701 = vpop.permute.xlu0 %700
      %704 = vset.pattern.permute.xlu0 0
      %705 = vperm.xlu0 %704, %v675
      %v706 = vpop.permute.xlu0 %705
      %709 = vset.pattern.permute.xlu0 0
      %710 = vperm.xlu0 %709, %v676
      %v711 = vpop.permute.xlu0 %710
      %714 = vset.pattern.permute.xlu0 0
      %715 = vperm.xlu0 %714, %v677
      %v716 = vpop.permute.xlu0 %715
      %719 = vset.pattern.permute.xlu0 0
      %720 = vperm.xlu0 %719, %v678
      %v721 = vpop.permute.xlu0 %720
      %724 = vset.pattern.permute.xlu0 0
      %725 = vperm.xlu0 %724, %v679
      %v726 = vpop.permute.xlu0 %725
      %729 = vset.pattern.permute.xlu0 0
      %730 = vperm.xlu0 %729, %v680
      %v731 = vpop.permute.xlu0 %730
      %734 = vset.pattern.permute.xlu0 0
      %735 = vperm.xlu0 %734, %v681
      %v736 = vpop.permute.xlu0 %735
      %739 = vset.pattern.permute.xlu0 0
      %740 = vperm.xlu0 %739, %v682
      %v741 = vpop.permute.xlu0 %740
      %744 = vset.pattern.permute.xlu0 0
      %745 = vperm.xlu0 %744, %v683
      %v746 = vpop.permute.xlu0 %745
      %749 = vset.pattern.permute.xlu0 0
      %750 = vperm.xlu0 %749, %v684
      %v751 = vpop.permute.xlu0 %750
      %754 = vset.pattern.permute.xlu0 0
      %755 = vperm.xlu0 %754, %v685
      %v756 = vpop.permute.xlu0 %755
      %759 = vset.pattern.permute.xlu0 0
      %760 = vperm.xlu0 %759, %v686
      %v761 = vpop.permute.xlu0 %760
      %764 = vset.pattern.permute.xlu0 0
      %765 = vperm.xlu0 %764, %v687
      %v766 = vpop.permute.xlu0 %765
      %v768 = vadd.f32 %v656, %v691
      %v769 = vadd.f32 %v657, %v696
      %v770 = vadd.f32 %v658, %v701
      %v771 = vadd.f32 %v659, %v706
      %v772 = vadd.f32 %v660, %v711
      %v773 = vadd.f32 %v661, %v716
      %v774 = vadd.f32 %v662, %v721
      %v775 = vadd.f32 %v663, %v726
      %v776 = vadd.f32 %v664, %v731
      %v777 = vadd.f32 %v665, %v736
      %v778 = vadd.f32 %v666, %v741
      %v779 = vadd.f32 %v667, %v746
      %v780 = vadd.f32 %v668, %v751
      %v781 = vadd.f32 %v669, %v756
      %v782 = vadd.f32 %v670, %v761
      %v783 = vadd.f32 %v671, %v766
      %v784 = vadd.f32 %v512, %v768
      %v785 = vadd.f32 %v513, %v769
      %v786 = vadd.f32 %v514, %v770
      %v787 = vadd.f32 %v515, %v771
      %v788 = vadd.f32 %v516, %v772
      %v789 = vadd.f32 %v517, %v773
      %v790 = vadd.f32 %v518, %v774
      %v791 = vadd.f32 %v519, %v775
      %v792 = vadd.f32 %v520, %v776
      %v793 = vadd.f32 %v521, %v777
      %v794 = vadd.f32 %v522, %v778
      %v795 = vadd.f32 %v523, %v779
      %v796 = vadd.f32 %v524, %v780
      %v797 = vadd.f32 %v525, %v781
      %v798 = vadd.f32 %v526, %v782
      %v799 = vadd.f32 %v527, %v783
      %v800 = vmax.f32 %v784, 0.0
      %v801 = vmax.f32 %v785, 0.0
      %v802 = vmax.f32 %v786, 0.0
      %v803 = vmax.f32 %v787, 0.0
      %v804 = vmax.f32 %v788, 0.0
      %v805 = vmax.f32 %v789, 0.0
      %v806 = vmax.f32 %v790, 0.0
      %v807 = vmax.f32 %v791, 0.0
      %v808 = vmax.f32 %v792, 0.0
      %v809 = vmax.f32 %v793, 0.0
      %v810 = vmax.f32 %v794, 0.0
      %v811 = vmax.f32 %v795, 0.0
      %v812 = vmax.f32 %v796, 0.0
      %v813 = vmax.f32 %v797, 0.0
      %v814 = vmax.f32 %v798, 0.0
      %v815 = vmax.f32 %v799, 0.0
      %v816 = vpack.c.bf16 %v801, %v800
      %v817 = vpack.c.bf16 %v803, %v802
      %v818 = vpack.c.bf16 %v805, %v804
      %v819 = vpack.c.bf16 %v807, %v806
      %v820 = vpack.c.bf16 %v809, %v808
      %v821 = vpack.c.bf16 %v811, %v810
      %v822 = vpack.c.bf16 %v813, %v812
      %v823 = vpack.c.bf16 %v815, %v814
      %v832 = vunpack.c.l.b16 %v816
      %v833 = vunpack.c.h.b16 %v816
      %v834 = vunpack.c.l.b16 %v817
      %v835 = vunpack.c.h.b16 %v817
      %v836 = vunpack.c.l.b16 %v818
      %v837 = vunpack.c.h.b16 %v818
      %v838 = vunpack.c.l.b16 %v819
      %v839 = vunpack.c.h.b16 %v819
      %v840 = vunpack.c.l.b16 %v820
      %v841 = vunpack.c.h.b16 %v820
      %v842 = vunpack.c.l.b16 %v821
      %v843 = vunpack.c.h.b16 %v821
      %v844 = vunpack.c.l.b16 %v822
      %v845 = vunpack.c.h.b16 %v822
      %v846 = vunpack.c.l.b16 %v823
      %v847 = vunpack.c.h.b16 %v823
      %v848 = vpack.c.b16 %v832, %v832
      %v849 = vpack.c.b16 %v833, %v833
      %v850 = vpack.c.b16 %v834, %v834
      %v851 = vpack.c.b16 %v835, %v835
      %v852 = vpack.c.b16 %v836, %v836
      %v853 = vpack.c.b16 %v837, %v837
      %v854 = vpack.c.b16 %v838, %v838
      %v855 = vpack.c.b16 %v839, %v839
      %v856 = vpack.c.b16 %v840, %v840
      %v857 = vpack.c.b16 %v841, %v841
      %v858 = vpack.c.b16 %v842, %v842
      %v859 = vpack.c.b16 %v843, %v843
      %v860 = vpack.c.b16 %v844, %v844
      %v861 = vpack.c.b16 %v845, %v845
      %v862 = vpack.c.b16 %v846, %v846
      %v863 = vpack.c.b16 %v847, %v847
      %vm880 = vcmask 125952
      %881 = vst.msk [vmem:[%s271] sm:$0xf] %vm880, %v848
      %882 = vst.msk [vmem:[%s271 + $0x4] sm:$0xf] %vm880, %v849
      %883 = vst.msk [vmem:[%s271 + $0x8] sm:$0xf] %vm880, %v850
      %884 = vst.msk [vmem:[%s271 + $0xc] sm:$0xf] %vm880, %v851
      %885 = vst.msk [vmem:[%s271 + $0x10] sm:$0xf] %vm880, %v852
      %886 = vst.msk [vmem:[%s271 + $0x14] sm:$0xf] %vm880, %v853
      %887 = vst.msk [vmem:[%s271 + $0x18] sm:$0xf] %vm880, %v854
      %888 = vst.msk [vmem:[%s271 + $0x1c] sm:$0xf] %vm880, %v855
      %889 = vst.msk [vmem:[%s271 + $0x20] sm:$0xf] %vm880, %v856
      %890 = vst.msk [vmem:[%s271 + $0x24] sm:$0xf] %vm880, %v857
      %891 = vst.msk [vmem:[%s271 + $0x28] sm:$0xf] %vm880, %v858
      %892 = vst.msk [vmem:[%s271 + $0x2c] sm:$0xf] %vm880, %v859
      %893 = vst.msk [vmem:[%s271 + $0x30] sm:$0xf] %vm880, %v860
      %894 = vst.msk [vmem:[%s271 + $0x34] sm:$0xf] %vm880, %v861
      %895 = vst.msk [vmem:[%s271 + $0x38] sm:$0xf] %vm880, %v862
      %896 = vst.msk [vmem:[%s271 + $0x3c] sm:$0xf] %vm880, %v863
      %p897 = scmp.lt.s32.totalorder %s17, 1
      %s898 = scalar_select %p897, %s17, 1
      %s899 = smul.addr %s898, 16
      %s900 = smul.addr %s899, 4
      %s901 = scalar_lea.vmem %s6, %s900
      // Predicated region
      $region45: #{bottleneck_forward.7} parent=43 // pred_check
        %p902 = pneg %p171
      $region46: #{bottleneck_forward.7} parent=43 // pred_check_branch
        %904 = sbr.rel (%p902) target = $region48
      $region47: #{bottleneck_forward.7} parent=43 // pred_region
        _
      $region48: #{bottleneck_forward.7} parent=43 // pred_fallthru
        _
    $region44: #{bottleneck_forward.7} parent=5 // pred_fallthru
      _
    %p905 = scmp.le.s32.totalorder 2, %s12
    // Predicated region
    $region49: #{bottleneck_forward.7} parent=5 // pred_check
      %p906 = pneg %p905
    $region50: #{bottleneck_forward.7} parent=5 // pred_check_branch
      %908 = sbr.rel (%p906) target = $region52
    $region51: #{bottleneck_forward.7} parent=5 // pred_region
      %s909 = ssub.s32 %s12, 2
      // Predicated region
      $region53: #{bottleneck_forward.7} parent=51 // pred_check
        %p910 = pneg %p177
      $region54: #{bottleneck_forward.7} parent=51 // pred_check_branch
        %912 = sbr.rel (%p910) target = $region56
      $region55: #{bottleneck_forward.7} parent=51 // pred_region
        %p913 = scmp.lt.s32.totalorder %s18, 1
        %s914 = scalar_select %p913, %s18, 1
        %s915 = smul.addr %s914, 16
        %s916 = smul.addr %s915, 4
        %s917 = scalar_lea.vmem %s6, %s916
      $region56: #{bottleneck_forward.7} parent=51 // pred_fallthru
        _
    $region52: #{bottleneck_forward.7} parent=5 // pred_fallthru
      _
  $region6: #{bottleneck_forward.7} parent=0 // loop_footer
    %s16 = sadd.s32 1, %s12
  $region7: #{bottleneck_forward.7} parent=0 // loop_footer_branch
    %11 = sbr.rel target = $region3
  $region8: #{bottleneck_forward.7} parent=0 // loop_exit
    _

// kernel: bottleneck_forward.5
$region0: #{bottleneck_forward.5}
  #allocation0 [shape = 'u32[]', space=smem, size = 0x4, offset = 0x4, fixed_abs, tag = 'smem constant byte address 0x4 - core index']
  #allocation1 [shape = 'u32[144,128]{1,0:T(1,128)}', space=vmem, size = 0x12000, scoped, tag = 'internal scratch']
  %s0 = inlined_call_operand.vmem [shape: bf16[2,128,16], index: 0, kind: input, shape index: {}]
  %s1 = inlined_call_operand.vmem [shape: bf16[3,128,128], index: 1, kind: input, shape index: {}]
  %s2 = inlined_call_operand.vmem [shape: f32[128,1], index: 2, kind: input, shape index: {}]
  %s3 = inlined_call_operand.vmem [shape: f32[128,1], index: 3, kind: input, shape index: {}]
  %s4 = inlined_call_operand.vmem [shape: bf16[2,128,16], index: 4, kind: output, shape index: {0}]
  %s5 = inlined_call_operand.vmem [shape: f32[128,1], index: 5, kind: output, shape index: {1}]
  %s6 = inlined_call_operand.vmem [shape: f32[128,1], index: 6, kind: output, shape index: {2}]
  %7 = xla_tuple %s4, %s5, %s6
  %s8 = sld [smem:[#allocation0]]
  $region69: #{bottleneck_forward.5} parent=0
    _
  %s10 = ssub.s32 1, %s8
  %s11 = scalar_select 0, %s10, %s8
  loop: start=0, step=1, limit=4
  $region2: #{bottleneck_forward.5} parent=0 // loop_pre_header
    _
  $region3: #{bottleneck_forward.5} parent=0 // loop_header
    %s13 = sphi 0, %s17
    %p14 = scmp.ge.s32.totalorder %s13, 4
    %s23 = sphi 0, %s25
    %s26 = sphi 0, %s23
    %s27 = sphi 0, %s26
    %s43 = sphi 0, %s27
    %s47 = sphi 0, %s47
    %s49 = sphi 0, %s47
    %s50 = sphi 0, %s49
    %s64 = sphi 0, %s50
    %s68 = sphi 0, %s68
    %s70 = sphi 0, %s68
    %s71 = sphi 0, %s70
    %s85 = sphi 0, %s71
    %s89 = sphi 0, %s89
    %s91 = sphi 0, %s89
    %s92 = sphi 0, %s91
    %s106 = sphi 0, %s92
    %s112 = sphi 0, %s114
    %s115 = sphi 0, %s112
    %s116 = sphi 0, %s115
    %s132 = sphi 0, %s116
    %s136 = sphi 0, %s136
    %s138 = sphi 0, %s136
    %s139 = sphi 0, %s138
    %s153 = sphi 0, %s139
    %s157 = sphi 0, %s157
    %s159 = sphi 0, %s157
    %s160 = sphi 0, %s159
    %s174 = sphi 0, %s160
  $region4: #{bottleneck_forward.5} parent=0 // loop_header_branch
    %16 = sbr.rel (%p14) target = $region8
  $region5: #{bottleneck_forward.5} parent=0 // loop_body
    %s18 = ssub.s32 %s13, 1
    %s19 = ssub.s32 %s13, 2
    %s20 = sadd.s32 %s13, 1
    %s21 = ssub.s32 %s13, %s20
    %p22 = scmp.eq.s32.totalorder %s21, 0
    %s24 = sadd.s32 %s23, 1
    %s25 = scalar_select %p22, %s23, %s24
    %p28 = pneg %p22
    %p29 = scmp.eq.s32.totalorder %s13, 1
    %p30 = por %p28, %p29
    %p31 = scmp.ne.s32.totalorder %s23, %s26
    %p32 = scmp.eq.s32.totalorder %s13, 0
    %p33 = por %p31, %p32
    %p34 = scmp.ne.s32.totalorder %s23, %s26
    %p35 = scmp.eq.s32.totalorder %s18, 1
    %p36 = por %p34, %p35
    %p37 = scmp.ne.s32.totalorder %s26, %s27
    %p38 = scmp.eq.s32.totalorder %s18, 0
    %p39 = por %p37, %p38
    %p40 = scmp.ne.s32.totalorder %s26, %s27
    %p41 = scmp.eq.s32.totalorder %s19, 1
    %p42 = por %p40, %p41
    %p44 = scmp.ne.s32.totalorder %s27, %s43
    %p45 = scmp.eq.s32.totalorder %s19, 0
    %p46 = por %p44, %p45
    %s48 = sadd.s32 %s47, 1
    %p51 = scmp.eq.s32.totalorder %s13, 1
    %p52 = scmp.ne.s32.totalorder %s47, %s49
    %p53 = scmp.eq.s32.totalorder %s13, 0
    %p54 = por %p52, %p53
    %p55 = scmp.ne.s32.totalorder %s47, %s49
    %p56 = scmp.eq.s32.totalorder %s18, 1
    %p57 = por %p55, %p56
    %p58 = scmp.ne.s32.totalorder %s49, %s50
    %p59 = scmp.eq.s32.totalorder %s18, 0
    %p60 = por %p58, %p59
    %p61 = scmp.ne.s32.totalorder %s49, %s50
    %p62 = scmp.eq.s32.totalorder %s19, 1
    %p63 = por %p61, %p62
    %p65 = scmp.ne.s32.totalorder %s50, %s64
    %p66 = scmp.eq.s32.totalorder %s19, 0
    %p67 = por %p65, %p66
    %s69 = sadd.s32 %s68, 1
    %p72 = scmp.eq.s32.totalorder %s13, 1
    %p73 = scmp.ne.s32.totalorder %s68, %s70
    %p74 = scmp.eq.s32.totalorder %s13, 0
    %p75 = por %p73, %p74
    %p76 = scmp.ne.s32.totalorder %s68, %s70
    %p77 = scmp.eq.s32.totalorder %s18, 1
    %p78 = por %p76, %p77
    %p79 = scmp.ne.s32.totalorder %s70, %s71
    %p80 = scmp.eq.s32.totalorder %s18, 0
    %p81 = por %p79, %p80
    %p82 = scmp.ne.s32.totalorder %s70, %s71
    %p83 = scmp.eq.s32.totalorder %s19, 1
    %p84 = por %p82, %p83
    %p86 = scmp.ne.s32.totalorder %s71, %s85
    %p87 = scmp.eq.s32.totalorder %s19, 0
    %p88 = por %p86, %p87
    %s90 = sadd.s32 %s89, 1
    %p93 = scmp.eq.s32.totalorder %s13, 1
    %p94 = scmp.ne.s32.totalorder %s89, %s91
    %p95 = scmp.eq.s32.totalorder %s13, 0
    %p96 = por %p94, %p95
    %p97 = scmp.ne.s32.totalorder %s89, %s91
    %p98 = scmp.eq.s32.totalorder %s18, 1
    %p99 = por %p97, %p98
    %p100 = scmp.ne.s32.totalorder %s91, %s92
    %p101 = scmp.eq.s32.totalorder %s18, 0
    %p102 = por %p100, %p101
    %p103 = scmp.ne.s32.totalorder %s91, %s92
    %p104 = scmp.eq.s32.totalorder %s19, 1
    %p105 = por %p103, %p104
    %p107 = scmp.ne.s32.totalorder %s92, %s106
    %p108 = scmp.eq.s32.totalorder %s19, 0
    %p109 = por %p107, %p108
    %s110 = ssub.s32 %s13, %s20
    %p111 = scmp.eq.s32.totalorder %s110, 0
    %s113 = sadd.s32 %s112, 1
    %s114 = scalar_select %p111, %s112, %s113
    %p117 = pneg %p111
    %p118 = scmp.eq.s32.totalorder %s13, 1
    %p119 = por %p117, %p118
    %p120 = scmp.ne.s32.totalorder %s112, %s115
    %p121 = scmp.eq.s32.totalorder %s13, 0
    %p122 = por %p120, %p121
    %p123 = scmp.ne.s32.totalorder %s112, %s115
    %p124 = scmp.eq.s32.totalorder %s18, 1
    %p125 = por %p123, %p124
    %p126 = scmp.ne.s32.totalorder %s115, %s116
    %p127 = scmp.eq.s32.totalorder %s18, 0
    %p128 = por %p126, %p127
    %p129 = scmp.ne.s32.totalorder %s115, %s116
    %p130 = scmp.eq.s32.totalorder %s19, 1
    %p131 = por %p129, %p130
    %p133 = scmp.ne.s32.totalorder %s116, %s132
    %p134 = scmp.eq.s32.totalorder %s19, 0
    %p135 = por %p133, %p134
    %s137 = sadd.s32 %s136, 1
    %p140 = scmp.eq.s32.totalorder %s13, 1
    %p141 = scmp.ne.s32.totalorder %s136, %s138
    %p142 = scmp.eq.s32.totalorder %s13, 0
    %p143 = por %p141, %p142
    %p144 = scmp.ne.s32.totalorder %s136, %s138
    %p145 = scmp.eq.s32.totalorder %s18, 1
    %p146 = por %p144, %p145
    %p147 = scmp.ne.s32.totalorder %s138, %s139
    %p148 = scmp.eq.s32.totalorder %s18, 0
    %p149 = por %p147, %p148
    %p150 = scmp.ne.s32.totalorder %s138, %s139
    %p151 = scmp.eq.s32.totalorder %s19, 1
    %p152 = por %p150, %p151
    %p154 = scmp.ne.s32.totalorder %s139, %s153
    %p155 = scmp.eq.s32.totalorder %s19, 0
    %p156 = por %p154, %p155
    %s158 = sadd.s32 %s157, 1
    %p161 = scmp.eq.s32.totalorder %s13, 1
    %p162 = scmp.ne.s32.totalorder %s157, %s159
    %p163 = scmp.eq.s32.totalorder %s13, 0
    %p164 = por %p162, %p163
    %p165 = scmp.ne.s32.totalorder %s157, %s159
    %p166 = scmp.eq.s32.totalorder %s18, 1
    %p167 = por %p165, %p166
    %p168 = scmp.ne.s32.totalorder %s159, %s160
    %p169 = scmp.eq.s32.totalorder %s18, 0
    %p170 = por %p168, %p169
    %p171 = scmp.ne.s32.totalorder %s159, %s160
    %p172 = scmp.eq.s32.totalorder %s19, 1
    %p173 = por %p171, %p172
    %p175 = scmp.ne.s32.totalorder %s160, %s174
    %p176 = scmp.eq.s32.totalorder %s19, 0
    %p177 = por %p175, %p176
    %p178 = scmp.le.s32.totalorder 1, %s13
    %p179 = scmp.lt.s32.totalorder %s13, 3
    %p180 = pnand %p178, %p179
    %p181 = pneg %p180
    // Predicated region
    $region9: #{bottleneck_forward.5} parent=5 // pred_check
      _
    $region10: #{bottleneck_forward.5} parent=5 // pred_check_branch
      %183 = sbr.rel (%p180) target = $region12
    $region11: #{bottleneck_forward.5} parent=5 // pred_region
      %s184 = ssub.s32 %s13, 1
      // Predicated region
      $region13: #{bottleneck_forward.5} parent=11 // pred_check
        %p185 = pneg %p60
      $region14: #{bottleneck_forward.5} parent=11 // pred_check_branch
        %187 = sbr.rel (%p185) target = $region16
      $region15: #{bottleneck_forward.5} parent=11 // pred_region
        _
      $region16: #{bottleneck_forward.5} parent=11 // pred_fallthru
        _
      // Predicated region
      $region17: #{bottleneck_forward.5} parent=11 // pred_check
        %p188 = pneg %p81
      $region18: #{bottleneck_forward.5} parent=11 // pred_check_branch
        %190 = sbr.rel (%p188) target = $region20
      $region19: #{bottleneck_forward.5} parent=11 // pred_region
        _
      $region20: #{bottleneck_forward.5} parent=11 // pred_fallthru
        _
      // Predicated region
      $region21: #{bottleneck_forward.5} parent=11 // pred_check
        %p191 = pneg %p102
      $region22: #{bottleneck_forward.5} parent=11 // pred_check_branch
        %193 = sbr.rel (%p191) target = $region24
      $region23: #{bottleneck_forward.5} parent=11 // pred_region
        _
      $region24: #{bottleneck_forward.5} parent=11 // pred_fallthru
        _
    $region12: #{bottleneck_forward.5} parent=5 // pred_fallthru
      _
    %p194 = scmp.lt.s32.totalorder %s13, 2
    // Predicated region
    $region25: #{bottleneck_forward.5} parent=5 // pred_check
      %p195 = pneg %p194
    $region26: #{bottleneck_forward.5} parent=5 // pred_check_branch
      %197 = sbr.rel (%p195) target = $region28
    $region27: #{bottleneck_forward.5} parent=5 // pred_region
      // Predicated region
      $region29: #{bottleneck_forward.5} parent=27 // pred_check
        %p198 = pneg %p33
      $region30: #{bottleneck_forward.5} parent=27 // pred_check_branch
        %200 = sbr.rel (%p198) target = $region32
      $region31: #{bottleneck_forward.5} parent=27 // pred_region
        %p201 = scmp.lt.s32.totalorder %s13, 1
        %s202 = scalar_select %p201, %s13, 1
        %s203 = smul.addr %s202, 16
        %s204 = smul.addr %s203, 4
        %s205 = scalar_lea.vmem %s0, %s204
      $region32: #{bottleneck_forward.5} parent=27 // pred_fallthru
        _
    $region28: #{bottleneck_forward.5} parent=5 // pred_fallthru
      _
    %p206 = scmp.le.s32.totalorder 1, %s13
    %p207 = scmp.lt.s32.totalorder %s13, 3
    %p208 = pnand %p206, %p207
    %p209 = pneg %p208
    // Predicated region
    $region33: #{bottleneck_forward.5} parent=5 // pred_check
      _
    $region34: #{bottleneck_forward.5} parent=5 // pred_check_branch
      %211 = sbr.rel (%p208) target = $region36
    $region35: #{bottleneck_forward.5} parent=5 // pred_region
      %s212 = ssub.s32 %s13, 1
      %p213 = scmp.lt.s32.totalorder %s18, 1
      %s214 = scalar_select %p213, %s18, 1
      %s215 = smul.addr %s214, 16
      %s216 = smul.addr %s215, 4
      %s217 = scalar_lea.vmem %s0, %s216
      %p218 = pneg %p39
      %p219 = pneg %p36
      %p220 = pneg %p60
      %p221 = pneg %p57
      %p222 = pneg %p81
      %p223 = pneg %p78
      %p224 = pneg %p102
      %p225 = pneg %p99
      %p226 = pneg %p128
      %p227 = pneg %p125
      %p228 = scmp.lt.s32.totalorder %s18, 1
      %s229 = scalar_select %p228, %s18, 1
      %s230 = smul.addr %s229, 16
      %s231 = smul.addr %s230, 4
      %s232 = scalar_lea.vmem %s4, %s231
      %p233 = pneg %p149
      %p234 = pneg %p146
      %p235 = pneg %p170
      %p236 = pneg %p167
      %p237 = scmp.lt.s32.totalorder %s18, 1
      %s238 = scalar_select %p237, %s18, 1
      %s239 = smul.addr %s238, 16
      %s240 = smul.addr %s239, 4
      %s241 = scalar_lea.vmem %s0, %s240
      %p242 = scmp.lt.s32.totalorder %s18, 1
      %s243 = scalar_select %p242, %s18, 1
      %s244 = smul.addr %s243, 16
      %s245 = smul.addr %s244, 4
      %s246 = scalar_lea.vmem %s4, %s245
      %v248 = vld [vmem:[%s241] sm:$0xf]
      %v249 = vld [vmem:[%s241 + $0x4] sm:$0xf]
      %v250 = vld [vmem:[%s241 + $0x8] sm:$0xf]
      %v251 = vld [vmem:[%s241 + $0xc] sm:$0xf]
      %v252 = vld [vmem:[%s241 + $0x10] sm:$0xf]
      %v253 = vld [vmem:[%s241 + $0x14] sm:$0xf]
      %v254 = vld [vmem:[%s241 + $0x18] sm:$0xf]
      %v255 = vld [vmem:[%s241 + $0x1c] sm:$0xf]
      %v256 = vld [vmem:[%s241 + $0x20] sm:$0xf]
      %v257 = vld [vmem:[%s241 + $0x24] sm:$0xf]
      %v258 = vld [vmem:[%s241 + $0x28] sm:$0xf]
      %v259 = vld [vmem:[%s241 + $0x2c] sm:$0xf]
      %v260 = vld [vmem:[%s241 + $0x30] sm:$0xf]
      %v261 = vld [vmem:[%s241 + $0x34] sm:$0xf]
      %v262 = vld [vmem:[%s241 + $0x38] sm:$0xf]
      %v263 = vld [vmem:[%s241 + $0x3c] sm:$0xf]
      %v264 = vunpack.c.l.bf16 %v248
      %v265 = vunpack.c.l.bf16 %v249
      %v266 = vunpack.c.l.bf16 %v250
      %v267 = vunpack.c.l.bf16 %v251
      %v268 = vunpack.c.l.bf16 %v252
      %v269 = vunpack.c.l.bf16 %v253
      %v270 = vunpack.c.l.bf16 %v254
      %v271 = vunpack.c.l.bf16 %v255
      %v272 = vunpack.c.l.bf16 %v256
      %v273 = vunpack.c.l.bf16 %v257
      %v274 = vunpack.c.l.bf16 %v258
      %v275 = vunpack.c.l.bf16 %v259
      %v276 = vunpack.c.l.bf16 %v260
      %v277 = vunpack.c.l.bf16 %v261
      %v278 = vunpack.c.l.bf16 %v262
      %v279 = vunpack.c.l.bf16 %v263
      %v280 = vld [vmem:[%s2] sm:$0xff]
      %v281 = vld [vmem:[%s2 + $0x8] sm:$0xff]
      %v282 = vld [vmem:[%s2 + $0x10] sm:$0xff]
      %v283 = vld [vmem:[%s2 + $0x18] sm:$0xff]
      %v284 = vld [vmem:[%s2 + $0x20] sm:$0xff]
      %v285 = vld [vmem:[%s2 + $0x28] sm:$0xff]
      %v286 = vld [vmem:[%s2 + $0x30] sm:$0xff]
      %v287 = vld [vmem:[%s2 + $0x38] sm:$0xff]
      %v288 = vld [vmem:[%s2 + $0x40] sm:$0xff]
      %v289 = vld [vmem:[%s2 + $0x48] sm:$0xff]
      %v290 = vld [vmem:[%s2 + $0x50] sm:$0xff]
      %v291 = vld [vmem:[%s2 + $0x58] sm:$0xff]
      %v292 = vld [vmem:[%s2 + $0x60] sm:$0xff]
      %v293 = vld [vmem:[%s2 + $0x68] sm:$0xff]
      %v294 = vld [vmem:[%s2 + $0x70] sm:$0xff]
      %v295 = vld [vmem:[%s2 + $0x78] sm:$0xff]
      %297 = vset.pattern.permute.xlu0 0
      %298 = vperm.xlu0 %297, %v280
      %v299 = vpop.permute.xlu0 %298
      %302 = vset.pattern.permute.xlu0 0
      %303 = vperm.xlu0 %302, %v281
      %v304 = vpop.permute.xlu0 %303
      %307 = vset.pattern.permute.xlu0 0
      %308 = vperm.xlu0 %307, %v282
      %v309 = vpop.permute.xlu0 %308
      %312 = vset.pattern.permute.xlu0 0
      %313 = vperm.xlu0 %312, %v283
      %v314 = vpop.permute.xlu0 %313
      %317 = vset.pattern.permute.xlu0 0
      %318 = vperm.xlu0 %317, %v284
      %v319 = vpop.permute.xlu0 %318
      %322 = vset.pattern.permute.xlu0 0
      %323 = vperm.xlu0 %322, %v285
      %v324 = vpop.permute.xlu0 %323
      %327 = vset.pattern.permute.xlu0 0
      %328 = vperm.xlu0 %327, %v286
      %v329 = vpop.permute.xlu0 %328
      %332 = vset.pattern.permute.xlu0 0
      %333 = vperm.xlu0 %332, %v287
      %v334 = vpop.permute.xlu0 %333
      %337 = vset.pattern.permute.xlu0 0
      %338 = vperm.xlu0 %337, %v288
      %v339 = vpop.permute.xlu0 %338
      %342 = vset.pattern.permute.xlu0 0
      %343 = vperm.xlu0 %342, %v289
      %v344 = vpop.permute.xlu0 %343
      %347 = vset.pattern.permute.xlu0 0
      %348 = vperm.xlu0 %347, %v290
      %v349 = vpop.permute.xlu0 %348
      %352 = vset.pattern.permute.xlu0 0
      %353 = vperm.xlu0 %352, %v291
      %v354 = vpop.permute.xlu0 %353
      %357 = vset.pattern.permute.xlu0 0
      %358 = vperm.xlu0 %357, %v292
      %v359 = vpop.permute.xlu0 %358
      %362 = vset.pattern.permute.xlu0 0
      %363 = vperm.xlu0 %362, %v293
      %v364 = vpop.permute.xlu0 %363
      %367 = vset.pattern.permute.xlu0 0
      %368 = vperm.xlu0 %367, %v294
      %v369 = vpop.permute.xlu0 %368
      %372 = vset.pattern.permute.xlu0 0
      %373 = vperm.xlu0 %372, %v295
      %v374 = vpop.permute.xlu0 %373
      %v376 = vmul.f32 %v264, %v299
      %v377 = vmul.f32 %v265, %v304
      %v378 = vmul.f32 %v266, %v309
      %v379 = vmul.f32 %v267, %v314
      %v380 = vmul.f32 %v268, %v319
      %v381 = vmul.f32 %v269, %v324
      %v382 = vmul.f32 %v270, %v329
      %v383 = vmul.f32 %v271, %v334
      %v384 = vmul.f32 %v272, %v339
      %v385 = vmul.f32 %v273, %v344
      %v386 = vmul.f32 %v274, %v349
      %v387 = vmul.f32 %v275, %v354
      %v388 = vmul.f32 %v276, %v359
      %v389 = vmul.f32 %v277, %v364
      %v390 = vmul.f32 %v278, %v369
      %v391 = vmul.f32 %v279, %v374
      %v392 = vld [vmem:[%s3] sm:$0xff]
      %v393 = vld [vmem:[%s3 + $0x8] sm:$0xff]
      %v394 = vld [vmem:[%s3 + $0x10] sm:$0xff]
      %v395 = vld [vmem:[%s3 + $0x18] sm:$0xff]
      %v396 = vld [vmem:[%s3 + $0x20] sm:$0xff]
      %v397 = vld [vmem:[%s3 + $0x28] sm:$0xff]
      %v398 = vld [vmem:[%s3 + $0x30] sm:$0xff]
      %v399 = vld [vmem:[%s3 + $0x38] sm:$0xff]
      %v400 = vld [vmem:[%s3 + $0x40] sm:$0xff]
      %v401 = vld [vmem:[%s3 + $0x48] sm:$0xff]
      %v402 = vld [vmem:[%s3 + $0x50] sm:$0xff]
      %v403 = vld [vmem:[%s3 + $0x58] sm:$0xff]
      %v404 = vld [vmem:[%s3 + $0x60] sm:$0xff]
      %v405 = vld [vmem:[%s3 + $0x68] sm:$0xff]
      %v406 = vld [vmem:[%s3 + $0x70] sm:$0xff]
      %v407 = vld [vmem:[%s3 + $0x78] sm:$0xff]
      %409 = vset.pattern.permute.xlu0 0
      %410 = vperm.xlu0 %409, %v392
      %v411 = vpop.permute.xlu0 %410
      %414 = vset.pattern.permute.xlu0 0
      %415 = vperm.xlu0 %414, %v393
      %v416 = vpop.permute.xlu0 %415
      %419 = vset.pattern.permute.xlu0 0
      %420 = vperm.xlu0 %419, %v394
      %v421 = vpop.permute.xlu0 %420
      %424 = vset.pattern.permute.xlu0 0
      %425 = vperm.xlu0 %424, %v395
      %v426 = vpop.permute.xlu0 %425
      %429 = vset.pattern.permute.xlu0 0
      %430 = vperm.xlu0 %429, %v396
      %v431 = vpop.permute.xlu0 %430
      %434 = vset.pattern.permute.xlu0 0
      %435 = vperm.xlu0 %434, %v397
      %v436 = vpop.permute.xlu0 %435
      %439 = vset.pattern.permute.xlu0 0
      %440 = vperm.xlu0 %439, %v398
      %v441 = vpop.permute.xlu0 %440
      %444 = vset.pattern.permute.xlu0 0
      %445 = vperm.xlu0 %444, %v399
      %v446 = vpop.permute.xlu0 %445
      %449 = vset.pattern.permute.xlu0 0
      %450 = vperm.xlu0 %449, %v400
      %v451 = vpop.permute.xlu0 %450
      %454 = vset.pattern.permute.xlu0 0
      %455 = vperm.xlu0 %454, %v401
      %v456 = vpop.permute.xlu0 %455
      %459 = vset.pattern.permute.xlu0 0
      %460 = vperm.xlu0 %459, %v402
      %v461 = vpop.permute.xlu0 %460
      %464 = vset.pattern.permute.xlu0 0
      %465 = vperm.xlu0 %464, %v403
      %v466 = vpop.permute.xlu0 %465
      %469 = vset.pattern.permute.xlu0 0
      %470 = vperm.xlu0 %469, %v404
      %v471 = vpop.permute.xlu0 %470
      %474 = vset.pattern.permute.xlu0 0
      %475 = vperm.xlu0 %474, %v405
      %v476 = vpop.permute.xlu0 %475
      %479 = vset.pattern.permute.xlu0 0
      %480 = vperm.xlu0 %479, %v406
      %v481 = vpop.permute.xlu0 %480
      %484 = vset.pattern.permute.xlu0 0
      %485 = vperm.xlu0 %484, %v407
      %v486 = vpop.permute.xlu0 %485
      %v488 = vadd.f32 %v376, %v411
      %v489 = vadd.f32 %v377, %v416
      %v490 = vadd.f32 %v378, %v421
      %v491 = vadd.f32 %v379, %v426
      %v492 = vadd.f32 %v380, %v431
      %v493 = vadd.f32 %v381, %v436
      %v494 = vadd.f32 %v382, %v441
      %v495 = vadd.f32 %v383, %v446
      %v496 = vadd.f32 %v384, %v451
      %v497 = vadd.f32 %v385, %v456
      %v498 = vadd.f32 %v386, %v461
      %v499 = vadd.f32 %v387, %v466
      %v500 = vadd.f32 %v388, %v471
      %v501 = vadd.f32 %v389, %v476
      %v502 = vadd.f32 %v390, %v481
      %v503 = vadd.f32 %v391, %v486
      %v504 = vmax.f32 %v488, 0.0
      %v505 = vmax.f32 %v489, 0.0
      %v506 = vmax.f32 %v490, 0.0
      %v507 = vmax.f32 %v491, 0.0
      %v508 = vmax.f32 %v492, 0.0
      %v509 = vmax.f32 %v493, 0.0
      %v510 = vmax.f32 %v494, 0.0
      %v511 = vmax.f32 %v495, 0.0
      %v512 = vmax.f32 %v496, 0.0
      %v513 = vmax.f32 %v497, 0.0
      %v514 = vmax.f32 %v498, 0.0
      %v515 = vmax.f32 %v499, 0.0
      %v516 = vmax.f32 %v500, 0.0
      %v517 = vmax.f32 %v501, 0.0
      %v518 = vmax.f32 %v502, 0.0
      %v519 = vmax.f32 %v503, 0.0
      %v520 = vpack.c.bf16 %v505, %v504
      %v521 = vpack.c.bf16 %v507, %v506
      %v522 = vpack.c.bf16 %v509, %v508
      %v523 = vpack.c.bf16 %v511, %v510
      %v524 = vpack.c.bf16 %v513, %v512
      %v525 = vpack.c.bf16 %v515, %v514
      %v526 = vpack.c.bf16 %v517, %v516
      %v527 = vpack.c.bf16 %v519, %v518
      %536 = vrot.lane.b32.xlu0 %v520, 1
      %v537 = vpop.permute.xlu0 %536
      %538 = vrot.lane.b32.xlu0 %v521, 1
      %v539 = vpop.permute.xlu0 %538
      %540 = vrot.lane.b32.xlu0 %v522, 1
      %v541 = vpop.permute.xlu0 %540
      %542 = vrot.lane.b32.xlu0 %v523, 1
      %v543 = vpop.permute.xlu0 %542
      %544 = vrot.lane.b32.xlu0 %v524, 1
      %v545 = vpop.permute.xlu0 %544
      %546 = vrot.lane.b32.xlu0 %v525, 1
      %v547 = vpop.permute.xlu0 %546
      %548 = vrot.lane.b32.xlu0 %v526, 1
      %v549 = vpop.permute.xlu0 %548
      %550 = vrot.lane.b32.xlu0 %v527, 1
      %v551 = vpop.permute.xlu0 %550
      %vm552 = vcmask 7168
      %v555 = vsel %vm552, 0, %v537
      %v557 = vsel %vm552, 0, %v539
      %v559 = vsel %vm552, 0, %v541
      %v561 = vsel %vm552, 0, %v543
      %v563 = vsel %vm552, 0, %v545
      %v565 = vsel %vm552, 0, %v547
      %v567 = vsel %vm552, 0, %v549
      %v569 = vsel %vm552, 0, %v551
      %vm570 = vcmask 138240
      %v571 = vsel %vm570, %v555, 0
      %v573 = vsel %vm570, %v557, 0
      %v575 = vsel %vm570, %v559, 0
      %v577 = vsel %vm570, %v561, 0
      %v579 = vsel %vm570, %v563, 0
      %v581 = vsel %vm570, %v565, 0
      %v583 = vsel %vm570, %v567, 0
      %v585 = vsel %vm570, %v569, 0
      %v587 = vld [vmem:[%s1] sm:$0xf]
      %v588 = vld [vmem:[%s1 + $0x4] sm:$0xf]
      %v589 = vld [vmem:[%s1 + $0x8] sm:$0xf]
      %v590 = vld [vmem:[%s1 + $0xc] sm:$0xf]
      %v591 = vld [vmem:[%s1 + $0x10] sm:$0xf]
      %v592 = vld [vmem:[%s1 + $0x14] sm:$0xf]
      %v593 = vld [vmem:[%s1 + $0x18] sm:$0xf]
      %v594 = vld [vmem:[%s1 + $0x1c] sm:$0xf]
      %v595 = vld [vmem:[%s1 + $0x20] sm:$0xf]
      %v596 = vld [vmem:[%s1 + $0x24] sm:$0xf]
      %v597 = vld [vmem:[%s1 + $0x28] sm:$0xf]
      %v598 = vld [vmem:[%s1 + $0x2c] sm:$0xf]
      %v599 = vld [vmem:[%s1 + $0x30] sm:$0xf]
      %v600 = vld [vmem:[%s1 + $0x34] sm:$0xf]
      %v601 = vld [vmem:[%s1 + $0x38] sm:$0xf]
      %v602 = vld [vmem:[%s1 + $0x3c] sm:$0xf]
      %s603 = scalar_lea.vmem %s1, 64
      %v604 = vld [vmem:[%s603] sm:$0xf]
      %v605 = vld [vmem:[%s603 + $0x4] sm:$0xf]
      %v606 = vld [vmem:[%s603 + $0x8] sm:$0xf]
      %v607 = vld [vmem:[%s603 + $0xc] sm:$0xf]
      %v608 = vld [vmem:[%s603 + $0x10] sm:$0xf]
      %v609 = vld [vmem:[%s603 + $0x14] sm:$0xf]
      %v610 = vld [vmem:[%s603 + $0x18] sm:$0xf]
      %v611 = vld [vmem:[%s603 + $0x1c] sm:$0xf]
      %v612 = vld [vmem:[%s603 + $0x20] sm:$0xf]
      %v613 = vld [vmem:[%s603 + $0x24] sm:$0xf]
      %v614 = vld [vmem:[%s603 + $0x28] sm:$0xf]
      %v615 = vld [vmem:[%s603 + $0x2c] sm:$0xf]
      %v616 = vld [vmem:[%s603 + $0x30] sm:$0xf]
      %v617 = vld [vmem:[%s603 + $0x34] sm:$0xf]
      %v618 = vld [vmem:[%s603 + $0x38] sm:$0xf]
      %v619 = vld [vmem:[%s603 + $0x3c] sm:$0xf]
      %v636 = vunpack.c.l.b16 %v604
      %v637 = vunpack.c.l.b16 %v605
      %v638 = vunpack.c.l.b16 %v606
      %v639 = vunpack.c.l.b16 %v607
      %v640 = vunpack.c.l.b16 %v608
      %v641 = vunpack.c.l.b16 %v609
      %v642 = vunpack.c.l.b16 %v610
      %v643 = vunpack.c.l.b16 %v611
      %v644 = vunpack.c.l.b16 %v612
      %v645 = vunpack.c.l.b16 %v613
      %v646 = vunpack.c.l.b16 %v614
      %v647 = vunpack.c.l.b16 %v615
      %v648 = vunpack.c.l.b16 %v616
      %v649 = vunpack.c.l.b16 %v617
      %v650 = vunpack.c.l.b16 %v618
      %v651 = vunpack.c.l.b16 %v619
      %v652 = vpack.c.b16 %v637, %v636
      %v653 = vpack.c.b16 %v639, %v638
      %v654 = vpack.c.b16 %v641, %v640
      %v655 = vpack.c.b16 %v643, %v642
      %v656 = vpack.c.b16 %v645, %v644
      %v657 = vpack.c.b16 %v647, %v646
      %v658 = vpack.c.b16 %v649, %v648
      %v659 = vpack.c.b16 %v651, %v650
      %668 = vmatprep.subr.bf16.mxu0 0
      %669 = vmatpush1.bf16.msra.mxu0 %v520
      %670 = vmatprep.subr.bf16.mxu0 0
      %671 = vmatpush1.bf16.msra.mxu0 %v521
      %672 = vmatprep.subr.bf16.mxu0 0
      %673 = vmatpush1.bf16.msra.mxu0 %v522
      %674 = vmatprep.subr.bf16.mxu0 0
      %675 = vmatpush1.bf16.msra.mxu0 %v523
      %676 = vmatprep.subr.bf16.mxu0 0
      %677 = vmatpush1.bf16.msra.mxu0 %v524
      %678 = vmatprep.subr.bf16.mxu0 0
      %679 = vmatpush1.bf16.msra.mxu0 %v525
      %680 = vmatprep.subr.bf16.mxu0 0
      %681 = vmatpush1.bf16.msra.mxu0 %v526
      %682 = vmatprep.subr.bf16.mxu0 0
      %683 = vmatpush1.bf16.msra.mxu0 %v527
      %684 = vmatprep.subr.bf16.mxu0 0
      %685 = vmatpush1.bf16.msra.mxu0 0
      %686 = vmatprep.subr.bf16.mxu0 0
      %687 = vmatpush1.bf16.msra.mxu0 0
      %688 = vmatprep.subr.bf16.mxu0 0
      %689 = vmatpush1.bf16.msra.mxu0 0
      %690 = vmatprep.subr.bf16.mxu0 0
      %691 = vmatpush1.bf16.msra.mxu0 0
      %692 = vmatprep.subr.bf16.mxu0 0
      %693 = vmatpush1.bf16.msra.mxu0 0
      %694 = vmatprep.subr.bf16.mxu0 0
      %695 = vmatpush1.bf16.msra.mxu0 0
      %696 = vmatprep.subr.bf16.mxu0 0
      %697 = vmatpush1.bf16.msra.mxu0 0
      %698 = vmatprep.subr.bf16.mxu0 0
      %699 = vmatpush1.bf16.msra.mxu0 0
      %700 = vmatprep.mubr.bf16.mxu0 0
      %701 = vmatmul.mubr.bf16.gmra.mrb[0].mxu0 %v652
      %v702 = vpop.f32.mrb[0].mxu0
      %v703 = vadd.f32 0.0, %v702
      %v704 = vpop.f32.mrb[0].mxu0
      %v705 = vpop.f32.mrb[0].mxu0
      %v706 = vadd.f32 0.0, %v705
      %v707 = vpop.f32.mrb[0].mxu0
      %708 = vmatprep.mubr.bf16.mxu0 0
      %709 = vmatmul.mubr.bf16.gmra.mrb[0].mxu0 %v653
      %v710 = vpop.f32.mrb[0].mxu0
      %v711 = vadd.f32 0.0, %v710
      %v712 = vpop.f32.mrb[0].mxu0
      %v713 = vpop.f32.mrb[0].mxu0
      %v714 = vadd.f32 0.0, %v713
      %v715 = vpop.f32.mrb[0].mxu0
      %716 = vmatprep.mubr.bf16.mxu0 0
      %717 = vmatmul.mubr.bf16.gmra.mrb[0].mxu0 %v654
      %v718 = vpop.f32.mrb[0].mxu0
      %v719 = vadd.f32 0.0, %v718
      %v720 = vpop.f32.mrb[0].mxu0
      %v721 = vpop.f32.mrb[0].mxu0
      %v722 = vadd.f32 0.0, %v721
      %v723 = vpop.f32.mrb[0].mxu0
      %724 = vmatprep.mubr.bf16.mxu0 0
      %725 = vmatmul.mubr.bf16.gmra.mrb[0].mxu0 %v655
      %v726 = vpop.f32.mrb[0].mxu0
      %v727 = vadd.f32 0.0, %v726
      %v728 = vpop.f32.mrb[0].mxu0
      %v729 = vpop.f32.mrb[0].mxu0
      %v730 = vadd.f32 0.0, %v729
      %v731 = vpop.f32.mrb[0].mxu0
      %732 = vmatprep.mubr.bf16.mxu0 0
      %733 = vmatmul.mubr.bf16.gmra.mrb[0].mxu0 %v656
      %v734 = vpop.f32.mrb[0].mxu0
      %v735 = vadd.f32 0.0, %v734
      %v736 = vpop.f32.mrb[0].mxu0
      %v737 = vpop.f32.mrb[0].mxu0
      %v738 = vadd.f32 0.0, %v737
      %v739 = vpop.f32.mrb[0].mxu0
      %740 = vmatprep.mubr.bf16.mxu0 0
      %741 = vmatmul.mubr.bf16.gmra.mrb[0].mxu0 %v657
      %v742 = vpop.f32.mrb[0].mxu0
      %v743 = vadd.f32 0.0, %v742
      %v744 = vpop.f32.mrb[0].mxu0
      %v745 = vpop.f32.mrb[0].mxu0
      %v746 = vadd.f32 0.0, %v745
      %v747 = vpop.f32.mrb[0].mxu0
      %748 = vmatprep.mubr.bf16.mxu0 0
      %749 = vmatmul.mubr.bf16.gmra.mrb[0].mxu0 %v658
      %v750 = vpop.f32.mrb[0].mxu0
      %v751 = vadd.f32 0.0, %v750
      %v752 = vpop.f32.mrb[0].mxu0
      %v753 = vpop.f32.mrb[0].mxu0
      %v754 = vadd.f32 0.0, %v753
      %v755 = vpop.f32.mrb[0].mxu0
      %756 = vmatprep.mubr.bf16.mxu0 0
      %757 = vmatmul.mubr.bf16.gmra.mrb[0].mxu0 %v659
      %v758 = vpop.f32.mrb[0].mxu0
      %v759 = vadd.f32 0.0, %v758
      %v760 = vpop.f32.mrb[0].mxu0
      %v761 = vpop.f32.mrb[0].mxu0
      %v762 = vadd.f32 0.0, %v761
      %v763 = vpop.f32.mrb[0].mxu0
      %764 = vdwg.mxu0
      %v781 = vunpack.c.l.b16 %v587
      %v782 = vunpack.c.l.b16 %v588
      %v783 = vunpack.c.l.b16 %v589
      %v784 = vunpack.c.l.b16 %v590
      %v785 = vunpack.c.l.b16 %v591
      %v786 = vunpack.c.l.b16 %v592
      %v787 = vunpack.c.l.b16 %v593
      %v788 = vunpack.c.l.b16 %v594
      %v789 = vunpack.c.l.b16 %v595
      %v790 = vunpack.c.l.b16 %v596
      %v791 = vunpack.c.l.b16 %v597
      %v792 = vunpack.c.l.b16 %v598
      %v793 = vunpack.c.l.b16 %v599
      %v794 = vunpack.c.l.b16 %v600
      %v795 = vunpack.c.l.b16 %v601
      %v796 = vunpack.c.l.b16 %v602
      %v797 = vpack.c.b16 %v782, %v781
      %v798 = vpack.c.b16 %v784, %v783
      %v799 = vpack.c.b16 %v786, %v785
      %v800 = vpack.c.b16 %v788, %v787
      %v801 = vpack.c.b16 %v790, %v789
      %v802 = vpack.c.b16 %v792, %v791
      %v803 = vpack.c.b16 %v794, %v793
      %v804 = vpack.c.b16 %v796, %v795
      %813 = vmatprep.subr.bf16.mxu0 0
      %814 = vmatpush1.bf16.msra.mxu0 %v571
      %815 = vmatprep.subr.bf16.mxu0 0
      %816 = vmatpush1.bf16.msra.mxu0 %v573
      %817 = vmatprep.subr.bf16.mxu0 0
      %818 = vmatpush1.bf16.msra.mxu0 %v575
      %819 = vmatprep.subr.bf16.mxu0 0
      %820 = vmatpush1.bf16.msra.mxu0 %v577
      %821 = vmatprep.subr.bf16.mxu0 0
      %822 = vmatpush1.bf16.msra.mxu0 %v579
      %823 = vmatprep.subr.bf16.mxu0 0
      %824 = vmatpush1.bf16.msra.mxu0 %v581
      %825 = vmatprep.subr.bf16.mxu0 0
      %826 = vmatpush1.bf16.msra.mxu0 %v583
      %827 = vmatprep.subr.bf16.mxu0 0
      %828 = vmatpush1.bf16.msra.mxu0 %v585
      %829 = vmatprep.subr.bf16.mxu0 0
      %830 = vmatpush1.bf16.msra.mxu0 0
      %831 = vmatprep.subr.bf16.mxu0 0
      %832 = vmatpush1.bf16.msra.mxu0 0
      %833 = vmatprep.subr.bf16.mxu0 0
      %834 = vmatpush1.bf16.msra.mxu0 0
      %835 = vmatprep.subr.bf16.mxu0 0
      %836 = vmatpush1.bf16.msra.mxu0 0
      %837 = vmatprep.subr.bf16.mxu0 0
      %838 = vmatpush1.bf16.msra.mxu0 0
      %839 = vmatprep.subr.bf16.mxu0 0
      %840 = vmatpush1.bf16.msra.mxu0 0
      %841 = vmatprep.subr.bf16.mxu0 0
      %842 = vmatpush1.bf16.msra.mxu0 0
      %843 = vmatprep.subr.bf16.mxu0 0
      %844 = vmatpush1.bf16.msra.mxu0 0
      %845 = vmatprep.mubr.bf16.mxu0 0
      %846 = vmatmul.mubr.bf16.gmra.mrb[0].mxu0 %v797
      %v847 = vpop.f32.mrb[0].mxu0
      %v848 = vadd.f32 %v703, %v847
      %v849 = vpop.f32.mrb[0].mxu0
      %v850 = vpop.f32.mrb[0].mxu0
      %v851 = vadd.f32 %v706, %v850
      %v852 = vpop.f32.mrb[0].mxu0
      %853 = vmatprep.mubr.bf16.mxu0 0
      %854 = vmatmul.mubr.bf16.gmra.mrb[0].mxu0 %v798
      %v855 = vpop.f32.mrb[0].mxu0
      %v856 = vadd.f32 %v711, %v855
      %v857 = vpop.f32.mrb[0].mxu0
      %v858 = vpop.f32.mrb[0].mxu0
      %v859 = vadd.f32 %v714, %v858
      %v860 = vpop.f32.mrb[0].mxu0
      %861 = vmatprep.mubr.bf16.mxu0 0
      %862 = vmatmul.mubr.bf16.gmra.mrb[0].mxu0 %v799
      %v863 = vpop.f32.mrb[0].mxu0
      %v864 = vadd.f32 %v719, %v863
      %v865 = vpop.f32.mrb[0].mxu0
      %v866 = vpop.f32.mrb[0].mxu0
      %v867 = vadd.f32 %v722, %v866
      %v868 = vpop.f32.mrb[0].mxu0
      %869 = vmatprep.mubr.bf16.mxu0 0
      %870 = vmatmul.mubr.bf16.gmra.mrb[0].mxu0 %v800
      %v871 = vpop.f32.mrb[0].mxu0
      %v872 = vadd.f32 %v727, %v871
      %v873 = vpop.f32.mrb[0].mxu0
      %v874 = vpop.f32.mrb[0].mxu0
      %v875 = vadd.f32 %v730, %v874
      %v876 = vpop.f32.mrb[0].mxu0
      %877 = vmatprep.mubr.bf16.mxu0 0
      %878 = vmatmul.mubr.bf16.gmra.mrb[0].mxu0 %v801
      %v879 = vpop.f32.mrb[0].mxu0
      %v880 = vadd.f32 %v735, %v879
      %v881 = vpop.f32.mrb[0].mxu0
      %v882 = vpop.f32.mrb[0].mxu0
      %v883 = vadd.f32 %v738, %v882
      %v884 = vpop.f32.mrb[0].mxu0
      %885 = vmatprep.mubr.bf16.mxu0 0
      %886 = vmatmul.mubr.bf16.gmra.mrb[0].mxu0 %v802
      %v887 = vpop.f32.mrb[0].mxu0
      %v888 = vadd.f32 %v743, %v887
      %v889 = vpop.f32.mrb[0].mxu0
      %v890 = vpop.f32.mrb[0].mxu0
      %v891 = vadd.f32 %v746, %v890
      %v892 = vpop.f32.mrb[0].mxu0
      %893 = vmatprep.mubr.bf16.mxu0 0
      %894 = vmatmul.mubr.bf16.gmra.mrb[0].mxu0 %v803
      %v895 = vpop.f32.mrb[0].mxu0
      %v896 = vadd.f32 %v751, %v895
      %v897 = vpop.f32.mrb[0].mxu0
      %v898 = vpop.f32.mrb[0].mxu0
      %v899 = vadd.f32 %v754, %v898
      %v900 = vpop.f32.mrb[0].mxu0
      %901 = vmatprep.mubr.bf16.mxu0 0
      %902 = vmatmul.mubr.bf16.gmra.mrb[0].mxu0 %v804
      %v903 = vpop.f32.mrb[0].mxu0
      %v904 = vadd.f32 %v759, %v903
      %v905 = vpop.f32.mrb[0].mxu0
      %v906 = vpop.f32.mrb[0].mxu0
      %v907 = vadd.f32 %v762, %v906
      %v908 = vpop.f32.mrb[0].mxu0
      %909 = vdwg.mxu0
      %s910 = scalar_lea.vmem %s1, 128
      %v911 = vld [vmem:[%s910] sm:$0xf]
      %v912 = vld [vmem:[%s910 + $0x4] sm:$0xf]
      %v913 = vld [vmem:[%s910 + $0x8] sm:$0xf]
      %v914 = vld [vmem:[%s910 + $0xc] sm:$0xf]
      %v915 = vld [vmem:[%s910 + $0x10] sm:$0xf]
      %v916 = vld [vmem:[%s910 + $0x14] sm:$0xf]
      %v917 = vld [vmem:[%s910 + $0x18] sm:$0xf]
      %v918 = vld [vmem:[%s910 + $0x1c] sm:$0xf]
      %v919 = vld [vmem:[%s910 + $0x20] sm:$0xf]
      %v920 = vld [vmem:[%s910 + $0x24] sm:$0xf]
      %v921 = vld [vmem:[%s910 + $0x28] sm:$0xf]
      %v922 = vld [vmem:[%s910 + $0x2c] sm:$0xf]
      %v923 = vld [vmem:[%s910 + $0x30] sm:$0xf]
      %v924 = vld [vmem:[%s910 + $0x34] sm:$0xf]
      %v925 = vld [vmem:[%s910 + $0x38] sm:$0xf]
      %v926 = vld [vmem:[%s910 + $0x3c] sm:$0xf]
      %v943 = vunpack.c.l.b16 %v911
      %v944 = vunpack.c.l.b16 %v912
      %v945 = vunpack.c.l.b16 %v913
      %v946 = vunpack.c.l.b16 %v914
      %v947 = vunpack.c.l.b16 %v915
      %v948 = vunpack.c.l.b16 %v916
      %v949 = vunpack.c.l.b16 %v917
      %v950 = vunpack.c.l.b16 %v918
      %v951 = vunpack.c.l.b16 %v919
      %v952 = vunpack.c.l.b16 %v920
      %v953 = vunpack.c.l.b16 %v921
      %v954 = vunpack.c.l.b16 %v922
      %v955 = vunpack.c.l.b16 %v923
      %v956 = vunpack.c.l.b16 %v924
      %v957 = vunpack.c.l.b16 %v925
      %v958 = vunpack.c.l.b16 %v926
      %v959 = vpack.c.b16 %v944, %v943
      %v960 = vpack.c.b16 %v946, %v945
      %v961 = vpack.c.b16 %v948, %v947
      %v962 = vpack.c.b16 %v950, %v949
      %v963 = vpack.c.b16 %v952, %v951
      %v964 = vpack.c.b16 %v954, %v953
      %v965 = vpack.c.b16 %v956, %v955
      %v966 = vpack.c.b16 %v958, %v957
      %983 = vrot.lane.b32.xlu0 %v571, 126
      %v984 = vpop.permute.xlu0 %983
      %985 = vrot.lane.b32.xlu0 %v573, 126
      %v986 = vpop.permute.xlu0 %985
      %987 = vrot.lane.b32.xlu0 %v575, 126
      %v988 = vpop.permute.xlu0 %987
      %989 = vrot.lane.b32.xlu0 %v577, 126
      %v990 = vpop.permute.xlu0 %989
      %991 = vrot.lane.b32.xlu0 %v579, 126
      %v992 = vpop.permute.xlu0 %991
      %993 = vrot.lane.b32.xlu0 %v581, 126
      %v994 = vpop.permute.xlu0 %993
      %995 = vrot.lane.b32.xlu0 %v583, 126
      %v996 = vpop.permute.xlu0 %995
      %997 = vrot.lane.b32.xlu0 %v585, 126
      %v998 = vpop.permute.xlu0 %997
      %1007 = vmatprep.subr.bf16.mxu0 0
      %1008 = vmatpush1.bf16.msra.mxu0 %v984
      %1009 = vmatprep.subr.bf16.mxu0 0
      %1010 = vmatpush1.bf16.msra.mxu0 %v986
      %1011 = vmatprep.subr.bf16.mxu0 0
      %1012 = vmatpush1.bf16.msra.mxu0 %v988
      %1013 = vmatprep.subr.bf16.mxu0 0
      %1014 = vmatpush1.bf16.msra.mxu0 %v990
      %1015 = vmatprep.subr.bf16.mxu0 0
      %1016 = vmatpush1.bf16.msra.mxu0 %v992
      %1017 = vmatprep.subr.bf16.mxu0 0
      %1018 = vmatpush1.bf16.msra.mxu0 %v994
      %1019 = vmatprep.subr.bf16.mxu0 0
      %1020 = vmatpush1.bf16.msra.mxu0 %v996
      %1021 = vmatprep.subr.bf16.mxu0 0
      %1022 = vmatpush1.bf16.msra.mxu0 %v998
      %1023 = vmatprep.subr.bf16.mxu0 0
      %1024 = vmatpush1.bf16.msra.mxu0 0
      %1025 = vmatprep.subr.bf16.mxu0 0
      %1026 = vmatpush1.bf16.msra.mxu0 0
      %1027 = vmatprep.subr.bf16.mxu0 0
      %1028 = vmatpush1.bf16.msra.mxu0 0
      %1029 = vmatprep.subr.bf16.mxu0 0
      %1030 = vmatpush1.bf16.msra.mxu0 0
      %1031 = vmatprep.subr.bf16.mxu0 0
      %1032 = vmatpush1.bf16.msra.mxu0 0
      %1033 = vmatprep.subr.bf16.mxu0 0
      %1034 = vmatpush1.bf16.msra.mxu0 0
      %1035 = vmatprep.subr.bf16.mxu0 0
      %1036 = vmatpush1.bf16.msra.mxu0 0
      %1037 = vmatprep.subr.bf16.mxu0 0
      %1038 = vmatpush1.bf16.msra.mxu0 0
      %1039 = vmatprep.mubr.bf16.mxu0 0
      %1040 = vmatmul.mubr.bf16.gmra.mrb[0].mxu0 %v959
      %v1041 = vpop.f32.mrb[0].mxu0
      %v1042 = vadd.f32 0.0, %v1041
      %v1043 = vpop.f32.mrb[0].mxu0
      %v1044 = vpop.f32.mrb[0].mxu0
      %v1045 = vadd.f32 0.0, %v1044
      %v1046 = vpop.f32.mrb[0].mxu0
      %1047 = vmatprep.mubr.bf16.mxu0 0
      %1048 = vmatmul.mubr.bf16.gmra.mrb[0].mxu0 %v960
      %v1049 = vpop.f32.mrb[0].mxu0
      %v1050 = vadd.f32 0.0, %v1049
      %v1051 = vpop.f32.mrb[0].mxu0
      %v1052 = vpop.f32.mrb[0].mxu0
      %v1053 = vadd.f32 0.0, %v1052
      %v1054 = vpop.f32.mrb[0].mxu0
      %1055 = vmatprep.mubr.bf16.mxu0 0
      %1056 = vmatmul.mubr.bf16.gmra.mrb[0].mxu0 %v961
      %v1057 = vpop.f32.mrb[0].mxu0
      %v1058 = vadd.f32 0.0, %v1057
      %v1059 = vpop.f32.mrb[0].mxu0
      %v1060 = vpop.f32.mrb[0].mxu0
      %v1061 = vadd.f32 0.0, %v1060
      %v1062 = vpop.f32.mrb[0].mxu0
      %1063 = vmatprep.mubr.bf16.mxu0 0
      %1064 = vmatmul.mubr.bf16.gmra.mrb[0].mxu0 %v962
      %v1065 = vpop.f32.mrb[0].mxu0
      %v1066 = vadd.f32 0.0, %v1065
      %v1067 = vpop.f32.mrb[0].mxu0
      %v1068 = vpop.f32.mrb[0].mxu0
      %v1069 = vadd.f32 0.0, %v1068
      %v1070 = vpop.f32.mrb[0].mxu0
      %1071 = vmatprep.mubr.bf16.mxu0 0
      %1072 = vmatmul.mubr.bf16.gmra.mrb[0].mxu0 %v963
      %v1073 = vpop.f32.mrb[0].mxu0
      %v1074 = vadd.f32 0.0, %v1073
      %v1075 = vpop.f32.mrb[0].mxu0
      %v1076 = vpop.f32.mrb[0].mxu0
      %v1077 = vadd.f32 0.0, %v1076
      %v1078 = vpop.f32.mrb[0].mxu0
      %1079 = vmatprep.mubr.bf16.mxu0 0
      %1080 = vmatmul.mubr.bf16.gmra.mrb[0].mxu0 %v964
      %v1081 = vpop.f32.mrb[0].mxu0
      %v1082 = vadd.f32 0.0, %v1081
      %v1083 = vpop.f32.mrb[0].mxu0
      %v1084 = vpop.f32.mrb[0].mxu0
      %v1085 = vadd.f32 0.0, %v1084
      %v1086 = vpop.f32.mrb[0].mxu0
      %1087 = vmatprep.mubr.bf16.mxu0 0
      %1088 = vmatmul.mubr.bf16.gmra.mrb[0].mxu0 %v965
      %v1089 = vpop.f32.mrb[0].mxu0
      %v1090 = vadd.f32 0.0, %v1089
      %v1091 = vpop.f32.mrb[0].mxu0
      %v1092 = vpop.f32.mrb[0].mxu0
      %v1093 = vadd.f32 0.0, %v1092
      %v1094 = vpop.f32.mrb[0].mxu0
      %1095 = vmatprep.mubr.bf16.mxu0 0
      %1096 = vmatmul.mubr.bf16.gmra.mrb[0].mxu0 %v966
      %v1097 = vpop.f32.mrb[0].mxu0
      %v1098 = vadd.f32 0.0, %v1097
      %v1099 = vpop.f32.mrb[0].mxu0
      %v1100 = vpop.f32.mrb[0].mxu0
      %v1101 = vadd.f32 0.0, %v1100
      %v1102 = vpop.f32.mrb[0].mxu0
      %1103 = vdwg.mxu0
      %v1104 = vadd.f32 %v848, %v1042
      %v1105 = vadd.f32 %v851, %v1045
      %v1106 = vadd.f32 %v856, %v1050
      %v1107 = vadd.f32 %v859, %v1053
      %v1108 = vadd.f32 %v864, %v1058
      %v1109 = vadd.f32 %v867, %v1061
      %v1110 = vadd.f32 %v872, %v1066
      %v1111 = vadd.f32 %v875, %v1069
      %v1112 = vadd.f32 %v880, %v1074
      %v1113 = vadd.f32 %v883, %v1077
      %v1114 = vadd.f32 %v888, %v1082
      %v1115 = vadd.f32 %v891, %v1085
      %v1116 = vadd.f32 %v896, %v1090
      %v1117 = vadd.f32 %v899, %v1093
      %v1118 = vadd.f32 %v904, %v1098
      %v1119 = vadd.f32 %v907, %v1101
      %v1120 = vpack.c.bf16 %v1105, %v1104
      %v1121 = vpack.c.bf16 %v1107, %v1106
      %v1122 = vpack.c.bf16 %v1109, %v1108
      %v1123 = vpack.c.bf16 %v1111, %v1110
      %v1124 = vpack.c.bf16 %v1113, %v1112
      %v1125 = vpack.c.bf16 %v1115, %v1114
      %v1126 = vpack.c.bf16 %v1117, %v1116
      %v1127 = vpack.c.bf16 %v1119, %v1118
      %v1136 = vunpack.c.l.b16 %v1120
      %v1137 = vunpack.c.h.b16 %v1120
      %v1138 = vunpack.c.l.b16 %v1121
      %v1139 = vunpack.c.h.b16 %v1121
      %v1140 = vunpack.c.l.b16 %v1122
      %v1141 = vunpack.c.h.b16 %v1122
      %v1142 = vunpack.c.l.b16 %v1123
      %v1143 = vunpack.c.h.b16 %v1123
      %v1144 = vunpack.c.l.b16 %v1124
      %v1145 = vunpack.c.h.b16 %v1124
      %v1146 = vunpack.c.l.b16 %v1125
      %v1147 = vunpack.c.h.b16 %v1125
      %v1148 = vunpack.c.l.b16 %v1126
      %v1149 = vunpack.c.h.b16 %v1126
      %v1150 = vunpack.c.l.b16 %v1127
      %v1151 = vunpack.c.h.b16 %v1127
      %v1152 = vpack.c.b16 %v1136, %v1136
      %v1153 = vpack.c.b16 %v1137, %v1137
      %v1154 = vpack.c.b16 %v1138, %v1138
      %v1155 = vpack.c.b16 %v1139, %v1139
      %v1156 = vpack.c.b16 %v1140, %v1140
      %v1157 = vpack.c.b16 %v1141, %v1141
      %v1158 = vpack.c.b16 %v1142, %v1142
      %v1159 = vpack.c.b16 %v1143, %v1143
      %v1160 = vpack.c.b16 %v1144, %v1144
      %v1161 = vpack.c.b16 %v1145, %v1145
      %v1162 = vpack.c.b16 %v1146, %v1146
      %v1163 = vpack.c.b16 %v1147, %v1147
      %v1164 = vpack.c.b16 %v1148, %v1148
      %v1165 = vpack.c.b16 %v1149, %v1149
      %v1166 = vpack.c.b16 %v1150, %v1150
      %v1167 = vpack.c.b16 %v1151, %v1151
      %vm1184 = vcmask 125952
      %1185 = vst.msk [vmem:[%s246] sm:$0xf] %vm1184, %v1152
      %1186 = vst.msk [vmem:[%s246 + $0x4] sm:$0xf] %vm1184, %v1153
      %1187 = vst.msk [vmem:[%s246 + $0x8] sm:$0xf] %vm1184, %v1154
      %1188 = vst.msk [vmem:[%s246 + $0xc] sm:$0xf] %vm1184, %v1155
      %1189 = vst.msk [vmem:[%s246 + $0x10] sm:$0xf] %vm1184, %v1156
      %1190 = vst.msk [vmem:[%s246 + $0x14] sm:$0xf] %vm1184, %v1157
      %1191 = vst.msk [vmem:[%s246 + $0x18] sm:$0xf] %vm1184, %v1158
      %1192 = vst.msk [vmem:[%s246 + $0x1c] sm:$0xf] %vm1184, %v1159
      %1193 = vst.msk [vmem:[%s246 + $0x20] sm:$0xf] %vm1184, %v1160
      %1194 = vst.msk [vmem:[%s246 + $0x24] sm:$0xf] %vm1184, %v1161
      %1195 = vst.msk [vmem:[%s246 + $0x28] sm:$0xf] %vm1184, %v1162
      %1196 = vst.msk [vmem:[%s246 + $0x2c] sm:$0xf] %vm1184, %v1163
      %1197 = vst.msk [vmem:[%s246 + $0x30] sm:$0xf] %vm1184, %v1164
      %1198 = vst.msk [vmem:[%s246 + $0x34] sm:$0xf] %vm1184, %v1165
      %1199 = vst.msk [vmem:[%s246 + $0x38] sm:$0xf] %vm1184, %v1166
      %1200 = vst.msk [vmem:[%s246 + $0x3c] sm:$0xf] %vm1184, %v1167
      %p1201 = scmp.eq.s32.totalorder %s18, 0
      // Predicated region
      $region37: #{bottleneck_forward.5} parent=35 // pred_check
        %p1202 = pneg %p1201
      $region38: #{bottleneck_forward.5} parent=35 // pred_check_branch
        %1204 = sbr.rel (%p1202) target = $region40
      $region39: #{bottleneck_forward.5} parent=35 // pred_region
        %1205 = vst.msk [vmem:[%s5] sm:$0xff] %vm552, 0.0
        %1206 = vst.msk [vmem:[%s5 + $0x8] sm:$0xff] %vm552, 0.0
        %1207 = vst.msk [vmem:[%s5 + $0x10] sm:$0xff] %vm552, 0.0
        %1208 = vst.msk [vmem:[%s5 + $0x18] sm:$0xff] %vm552, 0.0
        %1209 = vst.msk [vmem:[%s5 + $0x20] sm:$0xff] %vm552, 0.0
        %1210 = vst.msk [vmem:[%s5 + $0x28] sm:$0xff] %vm552, 0.0
        %1211 = vst.msk [vmem:[%s5 + $0x30] sm:$0xff] %vm552, 0.0
        %1212 = vst.msk [vmem:[%s5 + $0x38] sm:$0xff] %vm552, 0.0
        %1213 = vst.msk [vmem:[%s5 + $0x40] sm:$0xff] %vm552, 0.0
        %1214 = vst.msk [vmem:[%s5 + $0x48] sm:$0xff] %vm552, 0.0
        %1215 = vst.msk [vmem:[%s5 + $0x50] sm:$0xff] %vm552, 0.0
        %1216 = vst.msk [vmem:[%s5 + $0x58] sm:$0xff] %vm552, 0.0
        %1217 = vst.msk [vmem:[%s5 + $0x60] sm:$0xff] %vm552, 0.0
        %1218 = vst.msk [vmem:[%s5 + $0x68] sm:$0xff] %vm552, 0.0
        %1219 = vst.msk [vmem:[%s5 + $0x70] sm:$0xff] %vm552, 0.0
        %1220 = vst.msk [vmem:[%s5 + $0x78] sm:$0xff] %vm552, 0.0
        %1221 = vst.msk [vmem:[%s6] sm:$0xff] %vm552, 0.0
        %1222 = vst.msk [vmem:[%s6 + $0x8] sm:$0xff] %vm552, 0.0
        %1223 = vst.msk [vmem:[%s6 + $0x10] sm:$0xff] %vm552, 0.0
        %1224 = vst.msk [vmem:[%s6 + $0x18] sm:$0xff] %vm552, 0.0
        %1225 = vst.msk [vmem:[%s6 + $0x20] sm:$0xff] %vm552, 0.0
        %1226 = vst.msk [vmem:[%s6 + $0x28] sm:$0xff] %vm552, 0.0
        %1227 = vst.msk [vmem:[%s6 + $0x30] sm:$0xff] %vm552, 0.0
        %1228 = vst.msk [vmem:[%s6 + $0x38] sm:$0xff] %vm552, 0.0
        %1229 = vst.msk [vmem:[%s6 + $0x40] sm:$0xff] %vm552, 0.0
        %1230 = vst.msk [vmem:[%s6 + $0x48] sm:$0xff] %vm552, 0.0
        %1231 = vst.msk [vmem:[%s6 + $0x50] sm:$0xff] %vm552, 0.0
        %1232 = vst.msk [vmem:[%s6 + $0x58] sm:$0xff] %vm552, 0.0
        %1233 = vst.msk [vmem:[%s6 + $0x60] sm:$0xff] %vm552, 0.0
        %1234 = vst.msk [vmem:[%s6 + $0x68] sm:$0xff] %vm552, 0.0
        %1235 = vst.msk [vmem:[%s6 + $0x70] sm:$0xff] %vm552, 0.0
        %1236 = vst.msk [vmem:[%s6 + $0x78] sm:$0xff] %vm552, 0.0
      $region40: #{bottleneck_forward.5} parent=35 // pred_fallthru
        _
      %v1237 = vld [vmem:[%s5] sm:$0xff]
      %v1238 = vld [vmem:[%s5 + $0x8] sm:$0xff]
      %v1239 = vld [vmem:[%s5 + $0x10] sm:$0xff]
      %v1240 = vld [vmem:[%s5 + $0x18] sm:$0xff]
      %v1241 = vld [vmem:[%s5 + $0x20] sm:$0xff]
      %v1242 = vld [vmem:[%s5 + $0x28] sm:$0xff]
      %v1243 = vld [vmem:[%s5 + $0x30] sm:$0xff]
      %v1244 = vld [vmem:[%s5 + $0x38] sm:$0xff]
      %v1245 = vld [vmem:[%s5 + $0x40] sm:$0xff]
      %v1246 = vld [vmem:[%s5 + $0x48] sm:$0xff]
      %v1247 = vld [vmem:[%s5 + $0x50] sm:$0xff]
      %v1248 = vld [vmem:[%s5 + $0x58] sm:$0xff]
      %v1249 = vld [vmem:[%s5 + $0x60] sm:$0xff]
      %v1250 = vld [vmem:[%s5 + $0x68] sm:$0xff]
      %v1251 = vld [vmem:[%s5 + $0x70] sm:$0xff]
      %v1252 = vld [vmem:[%s5 + $0x78] sm:$0xff]
      %vm1253 = vcmask 130048
      %v1254 = vsel %vm1253, %v1104, 0.0
      %1255 = vadd.xlane.f32.xlu0 %v1254
      %v1256 = vpop.xlane.xlu0 %1255
      %v1257 = vsel %vm1253, %v1105, 0.0
      %1258 = vadd.xlane.f32.xlu0 %v1257
      %v1259 = vpop.xlane.xlu0 %1258
      %v1260 = vsel %vm1253, %v1106, 0.0
      %1261 = vadd.xlane.f32.xlu0 %v1260
      %v1262 = vpop.xlane.xlu0 %1261
      %v1263 = vsel %vm1253, %v1107, 0.0
      %1264 = vadd.xlane.f32.xlu0 %v1263
      %v1265 = vpop.xlane.xlu0 %1264
      %v1266 = vsel %vm1253, %v1108, 0.0
      %1267 = vadd.xlane.f32.xlu0 %v1266
      %v1268 = vpop.xlane.xlu0 %1267
      %v1269 = vsel %vm1253, %v1109, 0.0
      %1270 = vadd.xlane.f32.xlu0 %v1269
      %v1271 = vpop.xlane.xlu0 %1270
      %v1272 = vsel %vm1253, %v1110, 0.0
      %1273 = vadd.xlane.f32.xlu0 %v1272
      %v1274 = vpop.xlane.xlu0 %1273
      %v1275 = vsel %vm1253, %v1111, 0.0
      %1276 = vadd.xlane.f32.xlu0 %v1275
      %v1277 = vpop.xlane.xlu0 %1276
      %v1278 = vsel %vm1253, %v1112, 0.0
      %1279 = vadd.xlane.f32.xlu0 %v1278
      %v1280 = vpop.xlane.xlu0 %1279
      %v1281 = vsel %vm1253, %v1113, 0.0
      %1282 = vadd.xlane.f32.xlu0 %v1281
      %v1283 = vpop.xlane.xlu0 %1282
      %v1284 = vsel %vm1253, %v1114, 0.0
      %1285 = vadd.xlane.f32.xlu0 %v1284
      %v1286 = vpop.xlane.xlu0 %1285
      %v1287 = vsel %vm1253, %v1115, 0.0
      %1288 = vadd.xlane.f32.xlu0 %v1287
      %v1289 = vpop.xlane.xlu0 %1288
      %v1290 = vsel %vm1253, %v1116, 0.0
      %1291 = vadd.xlane.f32.xlu0 %v1290
      %v1292 = vpop.xlane.xlu0 %1291
      %v1293 = vsel %vm1253, %v1117, 0.0
      %1294 = vadd.xlane.f32.xlu0 %v1293
      %v1295 = vpop.xlane.xlu0 %1294
      %v1296 = vsel %vm1253, %v1118, 0.0
      %1297 = vadd.xlane.f32.xlu0 %v1296
      %v1298 = vpop.xlane.xlu0 %1297
      %v1299 = vsel %vm1253, %v1119, 0.0
      %1300 = vadd.xlane.f32.xlu0 %v1299
      %v1301 = vpop.xlane.xlu0 %1300
      %v1302 = vadd.f32 %v1237, %v1256
      %v1303 = vadd.f32 %v1238, %v1259
      %v1304 = vadd.f32 %v1239, %v1262
      %v1305 = vadd.f32 %v1240, %v1265
      %v1306 = vadd.f32 %v1241, %v1268
      %v1307 = vadd.f32 %v1242, %v1271
      %v1308 = vadd.f32 %v1243, %v1274
      %v1309 = vadd.f32 %v1244, %v1277
      %v1310 = vadd.f32 %v1245, %v1280
      %v1311 = vadd.f32 %v1246, %v1283
      %v1312 = vadd.f32 %v1247, %v1286
      %v1313 = vadd.f32 %v1248, %v1289
      %v1314 = vadd.f32 %v1249, %v1292
      %v1315 = vadd.f32 %v1250, %v1295
      %v1316 = vadd.f32 %v1251, %v1298
      %v1317 = vadd.f32 %v1252, %v1301
      %1318 = vst.msk [vmem:[%s5] sm:$0xff] %vm552, %v1302
      %1319 = vst.msk [vmem:[%s5 + $0x8] sm:$0xff] %vm552, %v1303
      %1320 = vst.msk [vmem:[%s5 + $0x10] sm:$0xff] %vm552, %v1304
      %1321 = vst.msk [vmem:[%s5 + $0x18] sm:$0xff] %vm552, %v1305
      %1322 = vst.msk [vmem:[%s5 + $0x20] sm:$0xff] %vm552, %v1306
      %1323 = vst.msk [vmem:[%s5 + $0x28] sm:$0xff] %vm552, %v1307
      %1324 = vst.msk [vmem:[%s5 + $0x30] sm:$0xff] %vm552, %v1308
      %1325 = vst.msk [vmem:[%s5 + $0x38] sm:$0xff] %vm552, %v1309
      %1326 = vst.msk [vmem:[%s5 + $0x40] sm:$0xff] %vm552, %v1310
      %1327 = vst.msk [vmem:[%s5 + $0x48] sm:$0xff] %vm552, %v1311
      %1328 = vst.msk [vmem:[%s5 + $0x50] sm:$0xff] %vm552, %v1312
      %1329 = vst.msk [vmem:[%s5 + $0x58] sm:$0xff] %vm552, %v1313
      %1330 = vst.msk [vmem:[%s5 + $0x60] sm:$0xff] %vm552, %v1314
      %1331 = vst.msk [vmem:[%s5 + $0x68] sm:$0xff] %vm552, %v1315
      %1332 = vst.msk [vmem:[%s5 + $0x70] sm:$0xff] %vm552, %v1316
      %1333 = vst.msk [vmem:[%s5 + $0x78] sm:$0xff] %vm552, %v1317
      %v1334 = vld [vmem:[%s6] sm:$0xff]
      %v1335 = vld [vmem:[%s6 + $0x8] sm:$0xff]
      %v1336 = vld [vmem:[%s6 + $0x10] sm:$0xff]
      %v1337 = vld [vmem:[%s6 + $0x18] sm:$0xff]
      %v1338 = vld [vmem:[%s6 + $0x20] sm:$0xff]
      %v1339 = vld [vmem:[%s6 + $0x28] sm:$0xff]
      %v1340 = vld [vmem:[%s6 + $0x30] sm:$0xff]
      %v1341 = vld [vmem:[%s6 + $0x38] sm:$0xff]
      %v1342 = vld [vmem:[%s6 + $0x40] sm:$0xff]
      %v1343 = vld [vmem:[%s6 + $0x48] sm:$0xff]
      %v1344 = vld [vmem:[%s6 + $0x50] sm:$0xff]
      %v1345 = vld [vmem:[%s6 + $0x58] sm:$0xff]
      %v1346 = vld [vmem:[%s6 + $0x60] sm:$0xff]
      %v1347 = vld [vmem:[%s6 + $0x68] sm:$0xff]
      %v1348 = vld [vmem:[%s6 + $0x70] sm:$0xff]
      %v1349 = vld [vmem:[%s6 + $0x78] sm:$0xff]
      %v1350 = vmul.f32 %v1104, %v1104
      %v1351 = vmul.f32 %v1105, %v1105
      %v1352 = vmul.f32 %v1106, %v1106
      %v1353 = vmul.f32 %v1107, %v1107
      %v1354 = vmul.f32 %v1108, %v1108
      %v1355 = vmul.f32 %v1109, %v1109
      %v1356 = vmul.f32 %v1110, %v1110
      %v1357 = vmul.f32 %v1111, %v1111
      %v1358 = vmul.f32 %v1112, %v1112
      %v1359 = vmul.f32 %v1113, %v1113
      %v1360 = vmul.f32 %v1114, %v1114
      %v1361 = vmul.f32 %v1115, %v1115
      %v1362 = vmul.f32 %v1116, %v1116
      %v1363 = vmul.f32 %v1117, %v1117
      %v1364 = vmul.f32 %v1118, %v1118
      %v1365 = vmul.f32 %v1119, %v1119
      %v1366 = vsel %vm1253, %v1350, 0.0
      %1367 = vadd.xlane.f32.xlu0 %v1366
      %v1368 = vpop.xlane.xlu0 %1367
      %v1369 = vsel %vm1253, %v1351, 0.0
      %1370 = vadd.xlane.f32.xlu0 %v1369
      %v1371 = vpop.xlane.xlu0 %1370
      %v1372 = vsel %vm1253, %v1352, 0.0
      %1373 = vadd.xlane.f32.xlu0 %v1372
      %v1374 = vpop.xlane.xlu0 %1373
      %v1375 = vsel %vm1253, %v1353, 0.0
      %1376 = vadd.xlane.f32.xlu0 %v1375
      %v1377 = vpop.xlane.xlu0 %1376
      %v1378 = vsel %vm1253, %v1354, 0.0
      %1379 = vadd.xlane.f32.xlu0 %v1378
      %v1380 = vpop.xlane.xlu0 %1379
      %v1381 = vsel %vm1253, %v1355, 0.0
      %1382 = vadd.xlane.f32.xlu0 %v1381
      %v1383 = vpop.xlane.xlu0 %1382
      %v1384 = vsel %vm1253, %v1356, 0.0
      %1385 = vadd.xlane.f32.xlu0 %v1384
      %v1386 = vpop.xlane.xlu0 %1385
      %v1387 = vsel %vm1253, %v1357, 0.0
      %1388 = vadd.xlane.f32.xlu0 %v1387
      %v1389 = vpop.xlane.xlu0 %1388
      %v1390 = vsel %vm1253, %v1358, 0.0
      %1391 = vadd.xlane.f32.xlu0 %v1390
      %v1392 = vpop.xlane.xlu0 %1391
      %v1393 = vsel %vm1253, %v1359, 0.0
      %1394 = vadd.xlane.f32.xlu0 %v1393
      %v1395 = vpop.xlane.xlu0 %1394
      %v1396 = vsel %vm1253, %v1360, 0.0
      %1397 = vadd.xlane.f32.xlu0 %v1396
      %v1398 = vpop.xlane.xlu0 %1397
      %v1399 = vsel %vm1253, %v1361, 0.0
      %1400 = vadd.xlane.f32.xlu0 %v1399
      %v1401 = vpop.xlane.xlu0 %1400
      %v1402 = vsel %vm1253, %v1362, 0.0
      %1403 = vadd.xlane.f32.xlu0 %v1402
      %v1404 = vpop.xlane.xlu0 %1403
      %v1405 = vsel %vm1253, %v1363, 0.0
      %1406 = vadd.xlane.f32.xlu0 %v1405
      %v1407 = vpop.xlane.xlu0 %1406
      %v1408 = vsel %vm1253, %v1364, 0.0
      %1409 = vadd.xlane.f32.xlu0 %v1408
      %v1410 = vpop.xlane.xlu0 %1409
      %v1411 = vsel %vm1253, %v1365, 0.0
      %1412 = vadd.xlane.f32.xlu0 %v1411
      %v1413 = vpop.xlane.xlu0 %1412
      %v1414 = vadd.f32 %v1334, %v1368
      %v1415 = vadd.f32 %v1335, %v1371
      %v1416 = vadd.f32 %v1336, %v1374
      %v1417 = vadd.f32 %v1337, %v1377
      %v1418 = vadd.f32 %v1338, %v1380
      %v1419 = vadd.f32 %v1339, %v1383
      %v1420 = vadd.f32 %v1340, %v1386
      %v1421 = vadd.f32 %v1341, %v1389
      %v1422 = vadd.f32 %v1342, %v1392
      %v1423 = vadd.f32 %v1343, %v1395
      %v1424 = vadd.f32 %v1344, %v1398
      %v1425 = vadd.f32 %v1345, %v1401
      %v1426 = vadd.f32 %v1346, %v1404
      %v1427 = vadd.f32 %v1347, %v1407
      %v1428 = vadd.f32 %v1348, %v1410
      %v1429 = vadd.f32 %v1349, %v1413
      %1430 = vst.msk [vmem:[%s6] sm:$0xff] %vm552, %v1414
      %1431 = vst.msk [vmem:[%s6 + $0x8] sm:$0xff] %vm552, %v1415
      %1432 = vst.msk [vmem:[%s6 + $0x10] sm:$0xff] %vm552, %v1416
      %1433 = vst.msk [vmem:[%s6 + $0x18] sm:$0xff] %vm552, %v1417
      %1434 = vst.msk [vmem:[%s6 + $0x20] sm:$0xff] %vm552, %v1418
      %1435 = vst.msk [vmem:[%s6 + $0x28] sm:$0xff] %vm552, %v1419
      %1436 = vst.msk [vmem:[%s6 + $0x30] sm:$0xff] %vm552, %v1420
      %1437 = vst.msk [vmem:[%s6 + $0x38] sm:$0xff] %vm552, %v1421
      %1438 = vst.msk [vmem:[%s6 + $0x40] sm:$0xff] %vm552, %v1422
      %1439 = vst.msk [vmem:[%s6 + $0x48] sm:$0xff] %vm552, %v1423
      %1440 = vst.msk [vmem:[%s6 + $0x50] sm:$0xff] %vm552, %v1424
      %1441 = vst.msk [vmem:[%s6 + $0x58] sm:$0xff] %vm552, %v1425
      %1442 = vst.msk [vmem:[%s6 + $0x60] sm:$0xff] %vm552, %v1426
      %1443 = vst.msk [vmem:[%s6 + $0x68] sm:$0xff] %vm552, %v1427
      %1444 = vst.msk [vmem:[%s6 + $0x70] sm:$0xff] %vm552, %v1428
      %1445 = vst.msk [vmem:[%s6 + $0x78] sm:$0xff] %vm552, %v1429
      %p1446 = scmp.lt.s32.totalorder %s18, 1
      %s1447 = scalar_select %p1446, %s18, 1
      %s1448 = smul.addr %s1447, 16
      %s1449 = smul.addr %s1448, 4
      %s1450 = scalar_lea.vmem %s4, %s1449
      // Predicated region
      $region41: #{bottleneck_forward.5} parent=35 // pred_check
        %p1451 = pneg %p125
      $region42: #{bottleneck_forward.5} parent=35 // pred_check_branch
        %1453 = sbr.rel (%p1451) target = $region44
      $region43: #{bottleneck_forward.5} parent=35 // pred_region
        _
      $region44: #{bottleneck_forward.5} parent=35 // pred_fallthru
        _
      // Predicated region
      $region45: #{bottleneck_forward.5} parent=35 // pred_check
        %p1454 = pneg %p146
      $region46: #{bottleneck_forward.5} parent=35 // pred_check_branch
        %1456 = sbr.rel (%p1454) target = $region48
      $region47: #{bottleneck_forward.5} parent=35 // pred_region
        _
      $region48: #{bottleneck_forward.5} parent=35 // pred_fallthru
        _
      // Predicated region
      $region49: #{bottleneck_forward.5} parent=35 // pred_check
        %p1457 = pneg %p167
      $region50: #{bottleneck_forward.5} parent=35 // pred_check_branch
        %1459 = sbr.rel (%p1457) target = $region52
      $region51: #{bottleneck_forward.5} parent=35 // pred_region
        _
      $region52: #{bottleneck_forward.5} parent=35 // pred_fallthru
        _
      // Predicated region
      $region53: #{bottleneck_forward.5} parent=35 // pred_check
        %p1460 = pneg %p146
      $region54: #{bottleneck_forward.5} parent=35 // pred_check_branch
        %1462 = sbr.rel (%p1460) target = $region56
      $region55: #{bottleneck_forward.5} parent=35 // pred_region
        _
      $region56: #{bottleneck_forward.5} parent=35 // pred_fallthru
        _
      // Predicated region
      $region57: #{bottleneck_forward.5} parent=35 // pred_check
        %p1463 = pneg %p167
      $region58: #{bottleneck_forward.5} parent=35 // pred_check_branch
        %1465 = sbr.rel (%p1463) target = $region60
      $region59: #{bottleneck_forward.5} parent=35 // pred_region
        _
      $region60: #{bottleneck_forward.5} parent=35 // pred_fallthru
        _
    $region36: #{bottleneck_forward.5} parent=5 // pred_fallthru
      _
    %p1466 = scmp.le.s32.totalorder 2, %s13
    // Predicated region
    $region61: #{bottleneck_forward.5} parent=5 // pred_check
      %p1467 = pneg %p1466
    $region62: #{bottleneck_forward.5} parent=5 // pred_check_branch
      %1469 = sbr.rel (%p1467) target = $region64
    $region63: #{bottleneck_forward.5} parent=5 // pred_region
      %s1470 = ssub.s32 %s13, 2
      // Predicated region
      $region65: #{bottleneck_forward.5} parent=63 // pred_check
        %p1471 = pneg %p131
      $region66: #{bottleneck_forward.5} parent=63 // pred_check_branch
        %1473 = sbr.rel (%p1471) target = $region68
      $region67: #{bottleneck_forward.5} parent=63 // pred_region
        %p1474 = scmp.lt.s32.totalorder %s19, 1
        %s1475 = scalar_select %p1474, %s19, 1
        %s1476 = smul.addr %s1475, 16
        %s1477 = smul.addr %s1476, 4
        %s1478 = scalar_lea.vmem %s4, %s1477
      $region68: #{bottleneck_forward.5} parent=63 // pred_fallthru
        _
    $region64: #{bottleneck_forward.5} parent=5 // pred_fallthru
      _
  $region6: #{bottleneck_forward.5} parent=0 // loop_footer
    %s17 = sadd.s32 1, %s13
  $region7: #{bottleneck_forward.5} parent=0 // loop_footer_branch
    %12 = sbr.rel target = $region3
  $region8: #{bottleneck_forward.5} parent=0 // loop_exit
    _

// kernel: bottleneck_forward.6
$region0: #{bottleneck_forward.6}
  #allocation0 [shape = 'u32[]', space=smem, size = 0x4, offset = 0x4, fixed_abs, tag = 'smem constant byte address 0x4 - core index']
  #allocation1 [shape = 'u32[144,128]{1,0:T(1,128)}', space=vmem, size = 0x12000, scoped, tag = 'internal scratch']
  %s0 = inlined_call_operand.vmem [shape: bf16[2,128,16], index: 0, kind: input, shape index: {}]
  %s1 = inlined_call_operand.vmem [shape: bf16[128,128], index: 1, kind: input, shape index: {}]
  %s2 = inlined_call_operand.vmem [shape: f32[128,1], index: 2, kind: input, shape index: {}]
  %s3 = inlined_call_operand.vmem [shape: f32[128,1], index: 3, kind: input, shape index: {}]
  %s4 = inlined_call_operand.vmem [shape: bf16[2,128,16], index: 4, kind: output, shape index: {0}]
  %s5 = inlined_call_operand.vmem [shape: f32[128,1], index: 5, kind: output, shape index: {1}]
  %s6 = inlined_call_operand.vmem [shape: f32[128,1], index: 6, kind: output, shape index: {2}]
  %7 = xla_tuple %s4, %s5, %s6
  %s8 = sld [smem:[#allocation0]]
  $region69: #{bottleneck_forward.6} parent=0
    _
  %s10 = ssub.s32 1, %s8
  %s11 = scalar_select 0, %s10, %s8
  loop: start=0, step=1, limit=4
  $region2: #{bottleneck_forward.6} parent=0 // loop_pre_header
    _
  $region3: #{bottleneck_forward.6} parent=0 // loop_header
    %s13 = sphi 0, %s17
    %p14 = scmp.ge.s32.totalorder %s13, 4
    %s23 = sphi 0, %s25
    %s26 = sphi 0, %s23
    %s27 = sphi 0, %s26
    %s43 = sphi 0, %s27
    %s47 = sphi 0, %s47
    %s49 = sphi 0, %s47
    %s50 = sphi 0, %s49
    %s64 = sphi 0, %s50
    %s68 = sphi 0, %s68
    %s70 = sphi 0, %s68
    %s71 = sphi 0, %s70
    %s85 = sphi 0, %s71
    %s89 = sphi 0, %s89
    %s91 = sphi 0, %s89
    %s92 = sphi 0, %s91
    %s106 = sphi 0, %s92
    %s112 = sphi 0, %s114
    %s115 = sphi 0, %s112
    %s116 = sphi 0, %s115
    %s132 = sphi 0, %s116
    %s136 = sphi 0, %s136
    %s138 = sphi 0, %s136
    %s139 = sphi 0, %s138
    %s153 = sphi 0, %s139
    %s157 = sphi 0, %s157
    %s159 = sphi 0, %s157
    %s160 = sphi 0, %s159
    %s174 = sphi 0, %s160
  $region4: #{bottleneck_forward.6} parent=0 // loop_header_branch
    %16 = sbr.rel (%p14) target = $region8
  $region5: #{bottleneck_forward.6} parent=0 // loop_body
    %s18 = ssub.s32 %s13, 1
    %s19 = ssub.s32 %s13, 2
    %s20 = sadd.s32 %s13, 1
    %s21 = ssub.s32 %s13, %s20
    %p22 = scmp.eq.s32.totalorder %s21, 0
    %s24 = sadd.s32 %s23, 1
    %s25 = scalar_select %p22, %s23, %s24
    %p28 = pneg %p22
    %p29 = scmp.eq.s32.totalorder %s13, 1
    %p30 = por %p28, %p29
    %p31 = scmp.ne.s32.totalorder %s23, %s26
    %p32 = scmp.eq.s32.totalorder %s13, 0
    %p33 = por %p31, %p32
    %p34 = scmp.ne.s32.totalorder %s23, %s26
    %p35 = scmp.eq.s32.totalorder %s18, 1
    %p36 = por %p34, %p35
    %p37 = scmp.ne.s32.totalorder %s26, %s27
    %p38 = scmp.eq.s32.totalorder %s18, 0
    %p39 = por %p37, %p38
    %p40 = scmp.ne.s32.totalorder %s26, %s27
    %p41 = scmp.eq.s32.totalorder %s19, 1
    %p42 = por %p40, %p41
    %p44 = scmp.ne.s32.totalorder %s27, %s43
    %p45 = scmp.eq.s32.totalorder %s19, 0
    %p46 = por %p44, %p45
    %s48 = sadd.s32 %s47, 1
    %p51 = scmp.eq.s32.totalorder %s13, 1
    %p52 = scmp.ne.s32.totalorder %s47, %s49
    %p53 = scmp.eq.s32.totalorder %s13, 0
    %p54 = por %p52, %p53
    %p55 = scmp.ne.s32.totalorder %s47, %s49
    %p56 = scmp.eq.s32.totalorder %s18, 1
    %p57 = por %p55, %p56
    %p58 = scmp.ne.s32.totalorder %s49, %s50
    %p59 = scmp.eq.s32.totalorder %s18, 0
    %p60 = por %p58, %p59
    %p61 = scmp.ne.s32.totalorder %s49, %s50
    %p62 = scmp.eq.s32.totalorder %s19, 1
    %p63 = por %p61, %p62
    %p65 = scmp.ne.s32.totalorder %s50, %s64
    %p66 = scmp.eq.s32.totalorder %s19, 0
    %p67 = por %p65, %p66
    %s69 = sadd.s32 %s68, 1
    %p72 = scmp.eq.s32.totalorder %s13, 1
    %p73 = scmp.ne.s32.totalorder %s68, %s70
    %p74 = scmp.eq.s32.totalorder %s13, 0
    %p75 = por %p73, %p74
    %p76 = scmp.ne.s32.totalorder %s68, %s70
    %p77 = scmp.eq.s32.totalorder %s18, 1
    %p78 = por %p76, %p77
    %p79 = scmp.ne.s32.totalorder %s70, %s71
    %p80 = scmp.eq.s32.totalorder %s18, 0
    %p81 = por %p79, %p80
    %p82 = scmp.ne.s32.totalorder %s70, %s71
    %p83 = scmp.eq.s32.totalorder %s19, 1
    %p84 = por %p82, %p83
    %p86 = scmp.ne.s32.totalorder %s71, %s85
    %p87 = scmp.eq.s32.totalorder %s19, 0
    %p88 = por %p86, %p87
    %s90 = sadd.s32 %s89, 1
    %p93 = scmp.eq.s32.totalorder %s13, 1
    %p94 = scmp.ne.s32.totalorder %s89, %s91
    %p95 = scmp.eq.s32.totalorder %s13, 0
    %p96 = por %p94, %p95
    %p97 = scmp.ne.s32.totalorder %s89, %s91
    %p98 = scmp.eq.s32.totalorder %s18, 1
    %p99 = por %p97, %p98
    %p100 = scmp.ne.s32.totalorder %s91, %s92
    %p101 = scmp.eq.s32.totalorder %s18, 0
    %p102 = por %p100, %p101
    %p103 = scmp.ne.s32.totalorder %s91, %s92
    %p104 = scmp.eq.s32.totalorder %s19, 1
    %p105 = por %p103, %p104
    %p107 = scmp.ne.s32.totalorder %s92, %s106
    %p108 = scmp.eq.s32.totalorder %s19, 0
    %p109 = por %p107, %p108
    %s110 = ssub.s32 %s13, %s20
    %p111 = scmp.eq.s32.totalorder %s110, 0
    %s113 = sadd.s32 %s112, 1
    %s114 = scalar_select %p111, %s112, %s113
    %p117 = pneg %p111
    %p118 = scmp.eq.s32.totalorder %s13, 1
    %p119 = por %p117, %p118
    %p120 = scmp.ne.s32.totalorder %s112, %s115
    %p121 = scmp.eq.s32.totalorder %s13, 0
    %p122 = por %p120, %p121
    %p123 = scmp.ne.s32.totalorder %s112, %s115
    %p124 = scmp.eq.s32.totalorder %s18, 1
    %p125 = por %p123, %p124
    %p126 = scmp.ne.s32.totalorder %s115, %s116
    %p127 = scmp.eq.s32.totalorder %s18, 0
    %p128 = por %p126, %p127
    %p129 = scmp.ne.s32.totalorder %s115, %s116
    %p130 = scmp.eq.s32.totalorder %s19, 1
    %p131 = por %p129, %p130
    %p133 = scmp.ne.s32.totalorder %s116, %s132
    %p134 = scmp.eq.s32.totalorder %s19, 0
    %p135 = por %p133, %p134
    %s137 = sadd.s32 %s136, 1
    %p140 = scmp.eq.s32.totalorder %s13, 1
    %p141 = scmp.ne.s32.totalorder %s136, %s138
    %p142 = scmp.eq.s32.totalorder %s13, 0
    %p143 = por %p141, %p142
    %p144 = scmp.ne.s32.totalorder %s136, %s138
    %p145 = scmp.eq.s32.totalorder %s18, 1
    %p146 = por %p144, %p145
    %p147 = scmp.ne.s32.totalorder %s138, %s139
    %p148 = scmp.eq.s32.totalorder %s18, 0
    %p149 = por %p147, %p148
    %p150 = scmp.ne.s32.totalorder %s138, %s139
    %p151 = scmp.eq.s32.totalorder %s19, 1
    %p152 = por %p150, %p151
    %p154 = scmp.ne.s32.totalorder %s139, %s153
    %p155 = scmp.eq.s32.totalorder %s19, 0
    %p156 = por %p154, %p155
    %s158 = sadd.s32 %s157, 1
    %p161 = scmp.eq.s32.totalorder %s13, 1
    %p162 = scmp.ne.s32.totalorder %s157, %s159
    %p163 = scmp.eq.s32.totalorder %s13, 0
    %p164 = por %p162, %p163
    %p165 = scmp.ne.s32.totalorder %s157, %s159
    %p166 = scmp.eq.s32.totalorder %s18, 1
    %p167 = por %p165, %p166
    %p168 = scmp.ne.s32.totalorder %s159, %s160
    %p169 = scmp.eq.s32.totalorder %s18, 0
    %p170 = por %p168, %p169
    %p171 = scmp.ne.s32.totalorder %s159, %s160
    %p172 = scmp.eq.s32.totalorder %s19, 1
    %p173 = por %p171, %p172
    %p175 = scmp.ne.s32.totalorder %s160, %s174
    %p176 = scmp.eq.s32.totalorder %s19, 0
    %p177 = por %p175, %p176
    %p178 = scmp.le.s32.totalorder 1, %s13
    %p179 = scmp.lt.s32.totalorder %s13, 3
    %p180 = pnand %p178, %p179
    %p181 = pneg %p180
    // Predicated region
    $region9: #{bottleneck_forward.6} parent=5 // pred_check
      _
    $region10: #{bottleneck_forward.6} parent=5 // pred_check_branch
      %183 = sbr.rel (%p180) target = $region12
    $region11: #{bottleneck_forward.6} parent=5 // pred_region
      %s184 = ssub.s32 %s13, 1
      // Predicated region
      $region13: #{bottleneck_forward.6} parent=11 // pred_check
        %p185 = pneg %p60
      $region14: #{bottleneck_forward.6} parent=11 // pred_check_branch
        %187 = sbr.rel (%p185) target = $region16
      $region15: #{bottleneck_forward.6} parent=11 // pred_region
        _
      $region16: #{bottleneck_forward.6} parent=11 // pred_fallthru
        _
      // Predicated region
      $region17: #{bottleneck_forward.6} parent=11 // pred_check
        %p188 = pneg %p81
      $region18: #{bottleneck_forward.6} parent=11 // pred_check_branch
        %190 = sbr.rel (%p188) target = $region20
      $region19: #{bottleneck_forward.6} parent=11 // pred_region
        _
      $region20: #{bottleneck_forward.6} parent=11 // pred_fallthru
        _
      // Predicated region
      $region21: #{bottleneck_forward.6} parent=11 // pred_check
        %p191 = pneg %p102
      $region22: #{bottleneck_forward.6} parent=11 // pred_check_branch
        %193 = sbr.rel (%p191) target = $region24
      $region23: #{bottleneck_forward.6} parent=11 // pred_region
        _
      $region24: #{bottleneck_forward.6} parent=11 // pred_fallthru
        _
    $region12: #{bottleneck_forward.6} parent=5 // pred_fallthru
      _
    %p194 = scmp.lt.s32.totalorder %s13, 2
    // Predicated region
    $region25: #{bottleneck_forward.6} parent=5 // pred_check
      %p195 = pneg %p194
    $region26: #{bottleneck_forward.6} parent=5 // pred_check_branch
      %197 = sbr.rel (%p195) target = $region28
    $region27: #{bottleneck_forward.6} parent=5 // pred_region
      // Predicated region
      $region29: #{bottleneck_forward.6} parent=27 // pred_check
        %p198 = pneg %p33
      $region30: #{bottleneck_forward.6} parent=27 // pred_check_branch
        %200 = sbr.rel (%p198) target = $region32
      $region31: #{bottleneck_forward.6} parent=27 // pred_region
        %p201 = scmp.lt.s32.totalorder %s13, 1
        %s202 = scalar_select %p201, %s13, 1
        %s203 = smul.addr %s202, 16
        %s204 = smul.addr %s203, 4
        %s205 = scalar_lea.vmem %s0, %s204
      $region32: #{bottleneck_forward.6} parent=27 // pred_fallthru
        _
    $region28: #{bottleneck_forward.6} parent=5 // pred_fallthru
      _
    %p206 = scmp.le.s32.totalorder 1, %s13
    %p207 = scmp.lt.s32.totalorder %s13, 3
    %p208 = pnand %p206, %p207
    %p209 = pneg %p208
    // Predicated region
    $region33: #{bottleneck_forward.6} parent=5 // pred_check
      _
    $region34: #{bottleneck_forward.6} parent=5 // pred_check_branch
      %211 = sbr.rel (%p208) target = $region36
    $region35: #{bottleneck_forward.6} parent=5 // pred_region
      %s212 = ssub.s32 %s13, 1
      %p213 = scmp.lt.s32.totalorder %s18, 1
      %s214 = scalar_select %p213, %s18, 1
      %s215 = smul.addr %s214, 16
      %s216 = smul.addr %s215, 4
      %s217 = scalar_lea.vmem %s0, %s216
      %p218 = pneg %p39
      %p219 = pneg %p36
      %p220 = pneg %p60
      %p221 = pneg %p57
      %p222 = pneg %p81
      %p223 = pneg %p78
      %p224 = pneg %p102
      %p225 = pneg %p99
      %p226 = pneg %p128
      %p227 = pneg %p125
      %p228 = scmp.lt.s32.totalorder %s18, 1
      %s229 = scalar_select %p228, %s18, 1
      %s230 = smul.addr %s229, 16
      %s231 = smul.addr %s230, 4
      %s232 = scalar_lea.vmem %s4, %s231
      %p233 = pneg %p149
      %p234 = pneg %p146
      %p235 = pneg %p170
      %p236 = pneg %p167
      %p237 = scmp.lt.s32.totalorder %s18, 1
      %s238 = scalar_select %p237, %s18, 1
      %s239 = smul.addr %s238, 16
      %s240 = smul.addr %s239, 4
      %s241 = scalar_lea.vmem %s0, %s240
      %p242 = scmp.lt.s32.totalorder %s18, 1
      %s243 = scalar_select %p242, %s18, 1
      %s244 = smul.addr %s243, 16
      %s245 = smul.addr %s244, 4
      %s246 = scalar_lea.vmem %s4, %s245
      %v248 = vld [vmem:[%s241] sm:$0xf]
      %v249 = vld [vmem:[%s241 + $0x4] sm:$0xf]
      %v250 = vld [vmem:[%s241 + $0x8] sm:$0xf]
      %v251 = vld [vmem:[%s241 + $0xc] sm:$0xf]
      %v252 = vld [vmem:[%s241 + $0x10] sm:$0xf]
      %v253 = vld [vmem:[%s241 + $0x14] sm:$0xf]
      %v254 = vld [vmem:[%s241 + $0x18] sm:$0xf]
      %v255 = vld [vmem:[%s241 + $0x1c] sm:$0xf]
      %v256 = vld [vmem:[%s241 + $0x20] sm:$0xf]
      %v257 = vld [vmem:[%s241 + $0x24] sm:$0xf]
      %v258 = vld [vmem:[%s241 + $0x28] sm:$0xf]
      %v259 = vld [vmem:[%s241 + $0x2c] sm:$0xf]
      %v260 = vld [vmem:[%s241 + $0x30] sm:$0xf]
      %v261 = vld [vmem:[%s241 + $0x34] sm:$0xf]
      %v262 = vld [vmem:[%s241 + $0x38] sm:$0xf]
      %v263 = vld [vmem:[%s241 + $0x3c] sm:$0xf]
      %v264 = vunpack.c.l.bf16 %v248
      %v265 = vunpack.c.l.bf16 %v249
      %v266 = vunpack.c.l.bf16 %v250
      %v267 = vunpack.c.l.bf16 %v251
      %v268 = vunpack.c.l.bf16 %v252
      %v269 = vunpack.c.l.bf16 %v253
      %v270 = vunpack.c.l.bf16 %v254
      %v271 = vunpack.c.l.bf16 %v255
      %v272 = vunpack.c.l.bf16 %v256
      %v273 = vunpack.c.l.bf16 %v257
      %v274 = vunpack.c.l.bf16 %v258
      %v275 = vunpack.c.l.bf16 %v259
      %v276 = vunpack.c.l.bf16 %v260
      %v277 = vunpack.c.l.bf16 %v261
      %v278 = vunpack.c.l.bf16 %v262
      %v279 = vunpack.c.l.bf16 %v263
      %v280 = vld [vmem:[%s2] sm:$0xff]
      %v281 = vld [vmem:[%s2 + $0x8] sm:$0xff]
      %v282 = vld [vmem:[%s2 + $0x10] sm:$0xff]
      %v283 = vld [vmem:[%s2 + $0x18] sm:$0xff]
      %v284 = vld [vmem:[%s2 + $0x20] sm:$0xff]
      %v285 = vld [vmem:[%s2 + $0x28] sm:$0xff]
      %v286 = vld [vmem:[%s2 + $0x30] sm:$0xff]
      %v287 = vld [vmem:[%s2 + $0x38] sm:$0xff]
      %v288 = vld [vmem:[%s2 + $0x40] sm:$0xff]
      %v289 = vld [vmem:[%s2 + $0x48] sm:$0xff]
      %v290 = vld [vmem:[%s2 + $0x50] sm:$0xff]
      %v291 = vld [vmem:[%s2 + $0x58] sm:$0xff]
      %v292 = vld [vmem:[%s2 + $0x60] sm:$0xff]
      %v293 = vld [vmem:[%s2 + $0x68] sm:$0xff]
      %v294 = vld [vmem:[%s2 + $0x70] sm:$0xff]
      %v295 = vld [vmem:[%s2 + $0x78] sm:$0xff]
      %297 = vset.pattern.permute.xlu0 0
      %298 = vperm.xlu0 %297, %v280
      %v299 = vpop.permute.xlu0 %298
      %302 = vset.pattern.permute.xlu0 0
      %303 = vperm.xlu0 %302, %v281
      %v304 = vpop.permute.xlu0 %303
      %307 = vset.pattern.permute.xlu0 0
      %308 = vperm.xlu0 %307, %v282
      %v309 = vpop.permute.xlu0 %308
      %312 = vset.pattern.permute.xlu0 0
      %313 = vperm.xlu0 %312, %v283
      %v314 = vpop.permute.xlu0 %313
      %317 = vset.pattern.permute.xlu0 0
      %318 = vperm.xlu0 %317, %v284
      %v319 = vpop.permute.xlu0 %318
      %322 = vset.pattern.permute.xlu0 0
      %323 = vperm.xlu0 %322, %v285
      %v324 = vpop.permute.xlu0 %323
      %327 = vset.pattern.permute.xlu0 0
      %328 = vperm.xlu0 %327, %v286
      %v329 = vpop.permute.xlu0 %328
      %332 = vset.pattern.permute.xlu0 0
      %333 = vperm.xlu0 %332, %v287
      %v334 = vpop.permute.xlu0 %333
      %337 = vset.pattern.permute.xlu0 0
      %338 = vperm.xlu0 %337, %v288
      %v339 = vpop.permute.xlu0 %338
      %342 = vset.pattern.permute.xlu0 0
      %343 = vperm.xlu0 %342, %v289
      %v344 = vpop.permute.xlu0 %343
      %347 = vset.pattern.permute.xlu0 0
      %348 = vperm.xlu0 %347, %v290
      %v349 = vpop.permute.xlu0 %348
      %352 = vset.pattern.permute.xlu0 0
      %353 = vperm.xlu0 %352, %v291
      %v354 = vpop.permute.xlu0 %353
      %357 = vset.pattern.permute.xlu0 0
      %358 = vperm.xlu0 %357, %v292
      %v359 = vpop.permute.xlu0 %358
      %362 = vset.pattern.permute.xlu0 0
      %363 = vperm.xlu0 %362, %v293
      %v364 = vpop.permute.xlu0 %363
      %367 = vset.pattern.permute.xlu0 0
      %368 = vperm.xlu0 %367, %v294
      %v369 = vpop.permute.xlu0 %368
      %372 = vset.pattern.permute.xlu0 0
      %373 = vperm.xlu0 %372, %v295
      %v374 = vpop.permute.xlu0 %373
      %v376 = vmul.f32 %v264, %v299
      %v377 = vmul.f32 %v265, %v304
      %v378 = vmul.f32 %v266, %v309
      %v379 = vmul.f32 %v267, %v314
      %v380 = vmul.f32 %v268, %v319
      %v381 = vmul.f32 %v269, %v324
      %v382 = vmul.f32 %v270, %v329
      %v383 = vmul.f32 %v271, %v334
      %v384 = vmul.f32 %v272, %v339
      %v385 = vmul.f32 %v273, %v344
      %v386 = vmul.f32 %v274, %v349
      %v387 = vmul.f32 %v275, %v354
      %v388 = vmul.f32 %v276, %v359
      %v389 = vmul.f32 %v277, %v364
      %v390 = vmul.f32 %v278, %v369
      %v391 = vmul.f32 %v279, %v374
      %v392 = vld [vmem:[%s3] sm:$0xff]
      %v393 = vld [vmem:[%s3 + $0x8] sm:$0xff]
      %v394 = vld [vmem:[%s3 + $0x10] sm:$0xff]
      %v395 = vld [vmem:[%s3 + $0x18] sm:$0xff]
      %v396 = vld [vmem:[%s3 + $0x20] sm:$0xff]
      %v397 = vld [vmem:[%s3 + $0x28] sm:$0xff]
      %v398 = vld [vmem:[%s3 + $0x30] sm:$0xff]
      %v399 = vld [vmem:[%s3 + $0x38] sm:$0xff]
      %v400 = vld [vmem:[%s3 + $0x40] sm:$0xff]
      %v401 = vld [vmem:[%s3 + $0x48] sm:$0xff]
      %v402 = vld [vmem:[%s3 + $0x50] sm:$0xff]
      %v403 = vld [vmem:[%s3 + $0x58] sm:$0xff]
      %v404 = vld [vmem:[%s3 + $0x60] sm:$0xff]
      %v405 = vld [vmem:[%s3 + $0x68] sm:$0xff]
      %v406 = vld [vmem:[%s3 + $0x70] sm:$0xff]
      %v407 = vld [vmem:[%s3 + $0x78] sm:$0xff]
      %409 = vset.pattern.permute.xlu0 0
      %410 = vperm.xlu0 %409, %v392
      %v411 = vpop.permute.xlu0 %410
      %414 = vset.pattern.permute.xlu0 0
      %415 = vperm.xlu0 %414, %v393
      %v416 = vpop.permute.xlu0 %415
      %419 = vset.pattern.permute.xlu0 0
      %420 = vperm.xlu0 %419, %v394
      %v421 = vpop.permute.xlu0 %420
      %424 = vset.pattern.permute.xlu0 0
      %425 = vperm.xlu0 %424, %v395
      %v426 = vpop.permute.xlu0 %425
      %429 = vset.pattern.permute.xlu0 0
      %430 = vperm.xlu0 %429, %v396
      %v431 = vpop.permute.xlu0 %430
      %434 = vset.pattern.permute.xlu0 0
      %435 = vperm.xlu0 %434, %v397
      %v436 = vpop.permute.xlu0 %435
      %439 = vset.pattern.permute.xlu0 0
      %440 = vperm.xlu0 %439, %v398
      %v441 = vpop.permute.xlu0 %440
      %444 = vset.pattern.permute.xlu0 0
      %445 = vperm.xlu0 %444, %v399
      %v446 = vpop.permute.xlu0 %445
      %449 = vset.pattern.permute.xlu0 0
      %450 = vperm.xlu0 %449, %v400
      %v451 = vpop.permute.xlu0 %450
      %454 = vset.pattern.permute.xlu0 0
      %455 = vperm.xlu0 %454, %v401
      %v456 = vpop.permute.xlu0 %455
      %459 = vset.pattern.permute.xlu0 0
      %460 = vperm.xlu0 %459, %v402
      %v461 = vpop.permute.xlu0 %460
      %464 = vset.pattern.permute.xlu0 0
      %465 = vperm.xlu0 %464, %v403
      %v466 = vpop.permute.xlu0 %465
      %469 = vset.pattern.permute.xlu0 0
      %470 = vperm.xlu0 %469, %v404
      %v471 = vpop.permute.xlu0 %470
      %474 = vset.pattern.permute.xlu0 0
      %475 = vperm.xlu0 %474, %v405
      %v476 = vpop.permute.xlu0 %475
      %479 = vset.pattern.permute.xlu0 0
      %480 = vperm.xlu0 %479, %v406
      %v481 = vpop.permute.xlu0 %480
      %484 = vset.pattern.permute.xlu0 0
      %485 = vperm.xlu0 %484, %v407
      %v486 = vpop.permute.xlu0 %485
      %v488 = vadd.f32 %v376, %v411
      %v489 = vadd.f32 %v377, %v416
      %v490 = vadd.f32 %v378, %v421
      %v491 = vadd.f32 %v379, %v426
      %v492 = vadd.f32 %v380, %v431
      %v493 = vadd.f32 %v381, %v436
      %v494 = vadd.f32 %v382, %v441
      %v495 = vadd.f32 %v383, %v446
      %v496 = vadd.f32 %v384, %v451
      %v497 = vadd.f32 %v385, %v456
      %v498 = vadd.f32 %v386, %v461
      %v499 = vadd.f32 %v387, %v466
      %v500 = vadd.f32 %v388, %v471
      %v501 = vadd.f32 %v389, %v476
      %v502 = vadd.f32 %v390, %v481
      %v503 = vadd.f32 %v391, %v486
      %v504 = vmax.f32 %v488, 0.0
      %v505 = vmax.f32 %v489, 0.0
      %v506 = vmax.f32 %v490, 0.0
      %v507 = vmax.f32 %v491, 0.0
      %v508 = vmax.f32 %v492, 0.0
      %v509 = vmax.f32 %v493, 0.0
      %v510 = vmax.f32 %v494, 0.0
      %v511 = vmax.f32 %v495, 0.0
      %v512 = vmax.f32 %v496, 0.0
      %v513 = vmax.f32 %v497, 0.0
      %v514 = vmax.f32 %v498, 0.0
      %v515 = vmax.f32 %v499, 0.0
      %v516 = vmax.f32 %v500, 0.0
      %v517 = vmax.f32 %v501, 0.0
      %v518 = vmax.f32 %v502, 0.0
      %v519 = vmax.f32 %v503, 0.0
      %v520 = vpack.c.bf16 %v505, %v504
      %v521 = vpack.c.bf16 %v507, %v506
      %v522 = vpack.c.bf16 %v509, %v508
      %v523 = vpack.c.bf16 %v511, %v510
      %v524 = vpack.c.bf16 %v513, %v512
      %v525 = vpack.c.bf16 %v515, %v514
      %v526 = vpack.c.bf16 %v517, %v516
      %v527 = vpack.c.bf16 %v519, %v518
      %v528 = vld [vmem:[%s1] sm:$0xf]
      %v529 = vld [vmem:[%s1 + $0x4] sm:$0xf]
      %v530 = vld [vmem:[%s1 + $0x8] sm:$0xf]
      %v531 = vld [vmem:[%s1 + $0xc] sm:$0xf]
      %v532 = vld [vmem:[%s1 + $0x10] sm:$0xf]
      %v533 = vld [vmem:[%s1 + $0x14] sm:$0xf]
      %v534 = vld [vmem:[%s1 + $0x18] sm:$0xf]
      %v535 = vld [vmem:[%s1 + $0x1c] sm:$0xf]
      %v536 = vld [vmem:[%s1 + $0x20] sm:$0xf]
      %v537 = vld [vmem:[%s1 + $0x24] sm:$0xf]
      %v538 = vld [vmem:[%s1 + $0x28] sm:$0xf]
      %v539 = vld [vmem:[%s1 + $0x2c] sm:$0xf]
      %v540 = vld [vmem:[%s1 + $0x30] sm:$0xf]
      %v541 = vld [vmem:[%s1 + $0x34] sm:$0xf]
      %v542 = vld [vmem:[%s1 + $0x38] sm:$0xf]
      %v543 = vld [vmem:[%s1 + $0x3c] sm:$0xf]
      %v560 = vunpack.c.l.b16 %v528
      %v561 = vunpack.c.l.b16 %v529
      %v562 = vunpack.c.l.b16 %v530
      %v563 = vunpack.c.l.b16 %v531
      %v564 = vunpack.c.l.b16 %v532
      %v565 = vunpack.c.l.b16 %v533
      %v566 = vunpack.c.l.b16 %v534
      %v567 = vunpack.c.l.b16 %v535
      %v568 = vunpack.c.l.b16 %v536
      %v569 = vunpack.c.l.b16 %v537
      %v570 = vunpack.c.l.b16 %v538
      %v571 = vunpack.c.l.b16 %v539
      %v572 = vunpack.c.l.b16 %v540
      %v573 = vunpack.c.l.b16 %v541
      %v574 = vunpack.c.l.b16 %v542
      %v575 = vunpack.c.l.b16 %v543
      %v576 = vpack.c.b16 %v561, %v560
      %v577 = vpack.c.b16 %v563, %v562
      %v578 = vpack.c.b16 %v565, %v564
      %v579 = vpack.c.b16 %v567, %v566
      %v580 = vpack.c.b16 %v569, %v568
      %v581 = vpack.c.b16 %v571, %v570
      %v582 = vpack.c.b16 %v573, %v572
      %v583 = vpack.c.b16 %v575, %v574
      %592 = vmatprep.subr.bf16.mxu0 0
      %593 = vmatpush1.bf16.msra.mxu0 %v520
      %594 = vmatprep.subr.bf16.mxu0 0
      %595 = vmatpush1.bf16.msra.mxu0 %v521
      %596 = vmatprep.subr.bf16.mxu0 0
      %597 = vmatpush1.bf16.msra.mxu0 %v522
      %598 = vmatprep.subr.bf16.mxu0 0
      %599 = vmatpush1.bf16.msra.mxu0 %v523
      %600 = vmatprep.subr.bf16.mxu0 0
      %601 = vmatpush1.bf16.msra.mxu0 %v524
      %602 = vmatprep.subr.bf16.mxu0 0
      %603 = vmatpush1.bf16.msra.mxu0 %v525
      %604 = vmatprep.subr.bf16.mxu0 0
      %605 = vmatpush1.bf16.msra.mxu0 %v526
      %606 = vmatprep.subr.bf16.mxu0 0
      %607 = vmatpush1.bf16.msra.mxu0 %v527
      %608 = vmatprep.subr.bf16.mxu0 0
      %609 = vmatpush1.bf16.msra.mxu0 0
      %610 = vmatprep.subr.bf16.mxu0 0
      %611 = vmatpush1.bf16.msra.mxu0 0
      %612 = vmatprep.subr.bf16.mxu0 0
      %613 = vmatpush1.bf16.msra.mxu0 0
      %614 = vmatprep.subr.bf16.mxu0 0
      %615 = vmatpush1.bf16.msra.mxu0 0
      %616 = vmatprep.subr.bf16.mxu0 0
      %617 = vmatpush1.bf16.msra.mxu0 0
      %618 = vmatprep.subr.bf16.mxu0 0
      %619 = vmatpush1.bf16.msra.mxu0 0
      %620 = vmatprep.subr.bf16.mxu0 0
      %621 = vmatpush1.bf16.msra.mxu0 0
      %622 = vmatprep.subr.bf16.mxu0 0
      %623 = vmatpush1.bf16.msra.mxu0 0
      %624 = vmatprep.mubr.bf16.mxu0 0
      %625 = vmatmul.mubr.bf16.gmra.mrb[0].mxu0 %v576
      %v626 = vpop.f32.mrb[0].mxu0
      %v627 = vadd.f32 0.0, %v626
      %v628 = vpop.f32.mrb[0].mxu0
      %v629 = vpop.f32.mrb[0].mxu0
      %v630 = vadd.f32 0.0, %v629
      %v631 = vpop.f32.mrb[0].mxu0
      %632 = vmatprep.mubr.bf16.mxu0 0
      %633 = vmatmul.mubr.bf16.gmra.mrb[0].mxu0 %v577
      %v634 = vpop.f32.mrb[0].mxu0
      %v635 = vadd.f32 0.0, %v634
      %v636 = vpop.f32.mrb[0].mxu0
      %v637 = vpop.f32.mrb[0].mxu0
      %v638 = vadd.f32 0.0, %v637
      %v639 = vpop.f32.mrb[0].mxu0
      %640 = vmatprep.mubr.bf16.mxu0 0
      %641 = vmatmul.mubr.bf16.gmra.mrb[0].mxu0 %v578
      %v642 = vpop.f32.mrb[0].mxu0
      %v643 = vadd.f32 0.0, %v642
      %v644 = vpop.f32.mrb[0].mxu0
      %v645 = vpop.f32.mrb[0].mxu0
      %v646 = vadd.f32 0.0, %v645
      %v647 = vpop.f32.mrb[0].mxu0
      %648 = vmatprep.mubr.bf16.mxu0 0
      %649 = vmatmul.mubr.bf16.gmra.mrb[0].mxu0 %v579
      %v650 = vpop.f32.mrb[0].mxu0
      %v651 = vadd.f32 0.0, %v650
      %v652 = vpop.f32.mrb[0].mxu0
      %v653 = vpop.f32.mrb[0].mxu0
      %v654 = vadd.f32 0.0, %v653
      %v655 = vpop.f32.mrb[0].mxu0
      %656 = vmatprep.mubr.bf16.mxu0 0
      %657 = vmatmul.mubr.bf16.gmra.mrb[0].mxu0 %v580
      %v658 = vpop.f32.mrb[0].mxu0
      %v659 = vadd.f32 0.0, %v658
      %v660 = vpop.f32.mrb[0].mxu0
      %v661 = vpop.f32.mrb[0].mxu0
      %v662 = vadd.f32 0.0, %v661
      %v663 = vpop.f32.mrb[0].mxu0
      %664 = vmatprep.mubr.bf16.mxu0 0
      %665 = vmatmul.mubr.bf16.gmra.mrb[0].mxu0 %v581
      %v666 = vpop.f32.mrb[0].mxu0
      %v667 = vadd.f32 0.0, %v666
      %v668 = vpop.f32.mrb[0].mxu0
      %v669 = vpop.f32.mrb[0].mxu0
      %v670 = vadd.f32 0.0, %v669
      %v671 = vpop.f32.mrb[0].mxu0
      %672 = vmatprep.mubr.bf16.mxu0 0
      %673 = vmatmul.mubr.bf16.gmra.mrb[0].mxu0 %v582
      %v674 = vpop.f32.mrb[0].mxu0
      %v675 = vadd.f32 0.0, %v674
      %v676 = vpop.f32.mrb[0].mxu0
      %v677 = vpop.f32.mrb[0].mxu0
      %v678 = vadd.f32 0.0, %v677
      %v679 = vpop.f32.mrb[0].mxu0
      %680 = vmatprep.mubr.bf16.mxu0 0
      %681 = vmatmul.mubr.bf16.gmra.mrb[0].mxu0 %v583
      %v682 = vpop.f32.mrb[0].mxu0
      %v683 = vadd.f32 0.0, %v682
      %v684 = vpop.f32.mrb[0].mxu0
      %v685 = vpop.f32.mrb[0].mxu0
      %v686 = vadd.f32 0.0, %v685
      %v687 = vpop.f32.mrb[0].mxu0
      %688 = vdwg.mxu0
      %v689 = vpack.c.bf16 %v630, %v627
      %v690 = vpack.c.bf16 %v638, %v635
      %v691 = vpack.c.bf16 %v646, %v643
      %v692 = vpack.c.bf16 %v654, %v651
      %v693 = vpack.c.bf16 %v662, %v659
      %v694 = vpack.c.bf16 %v670, %v667
      %v695 = vpack.c.bf16 %v678, %v675
      %v696 = vpack.c.bf16 %v686, %v683
      %v705 = vunpack.c.l.b16 %v689
      %v706 = vunpack.c.h.b16 %v689
      %v707 = vunpack.c.l.b16 %v690
      %v708 = vunpack.c.h.b16 %v690
      %v709 = vunpack.c.l.b16 %v691
      %v710 = vunpack.c.h.b16 %v691
      %v711 = vunpack.c.l.b16 %v692
      %v712 = vunpack.c.h.b16 %v692
      %v713 = vunpack.c.l.b16 %v693
      %v714 = vunpack.c.h.b16 %v693
      %v715 = vunpack.c.l.b16 %v694
      %v716 = vunpack.c.h.b16 %v694
      %v717 = vunpack.c.l.b16 %v695
      %v718 = vunpack.c.h.b16 %v695
      %v719 = vunpack.c.l.b16 %v696
      %v720 = vunpack.c.h.b16 %v696
      %v721 = vpack.c.b16 %v705, %v705
      %v722 = vpack.c.b16 %v706, %v706
      %v723 = vpack.c.b16 %v707, %v707
      %v724 = vpack.c.b16 %v708, %v708
      %v725 = vpack.c.b16 %v709, %v709
      %v726 = vpack.c.b16 %v710, %v710
      %v727 = vpack.c.b16 %v711, %v711
      %v728 = vpack.c.b16 %v712, %v712
      %v729 = vpack.c.b16 %v713, %v713
      %v730 = vpack.c.b16 %v714, %v714
      %v731 = vpack.c.b16 %v715, %v715
      %v732 = vpack.c.b16 %v716, %v716
      %v733 = vpack.c.b16 %v717, %v717
      %v734 = vpack.c.b16 %v718, %v718
      %v735 = vpack.c.b16 %v719, %v719
      %v736 = vpack.c.b16 %v720, %v720
      %vm753 = vcmask 125952
      %754 = vst.msk [vmem:[%s246] sm:$0xf] %vm753, %v721
      %755 = vst.msk [vmem:[%s246 + $0x4] sm:$0xf] %vm753, %v722
      %756 = vst.msk [vmem:[%s246 + $0x8] sm:$0xf] %vm753, %v723
      %757 = vst.msk [vmem:[%s246 + $0xc] sm:$0xf] %vm753, %v724
      %758 = vst.msk [vmem:[%s246 + $0x10] sm:$0xf] %vm753, %v725
      %759 = vst.msk [vmem:[%s246 + $0x14] sm:$0xf] %vm753, %v726
      %760 = vst.msk [vmem:[%s246 + $0x18] sm:$0xf] %vm753, %v727
      %761 = vst.msk [vmem:[%s246 + $0x1c] sm:$0xf] %vm753, %v728
      %762 = vst.msk [vmem:[%s246 + $0x20] sm:$0xf] %vm753, %v729
      %763 = vst.msk [vmem:[%s246 + $0x24] sm:$0xf] %vm753, %v730
      %764 = vst.msk [vmem:[%s246 + $0x28] sm:$0xf] %vm753, %v731
      %765 = vst.msk [vmem:[%s246 + $0x2c] sm:$0xf] %vm753, %v732
      %766 = vst.msk [vmem:[%s246 + $0x30] sm:$0xf] %vm753, %v733
      %767 = vst.msk [vmem:[%s246 + $0x34] sm:$0xf] %vm753, %v734
      %768 = vst.msk [vmem:[%s246 + $0x38] sm:$0xf] %vm753, %v735
      %769 = vst.msk [vmem:[%s246 + $0x3c] sm:$0xf] %vm753, %v736
      %p770 = scmp.eq.s32.totalorder %s18, 0
      // Predicated region
      $region37: #{bottleneck_forward.6} parent=35 // pred_check
        %p771 = pneg %p770
      $region38: #{bottleneck_forward.6} parent=35 // pred_check_branch
        %773 = sbr.rel (%p771) target = $region40
      $region39: #{bottleneck_forward.6} parent=35 // pred_region
        %vm774 = vcmask 7168
        %775 = vst.msk [vmem:[%s5] sm:$0xff] %vm774, 0.0
        %776 = vst.msk [vmem:[%s5 + $0x8] sm:$0xff] %vm774, 0.0
        %777 = vst.msk [vmem:[%s5 + $0x10] sm:$0xff] %vm774, 0.0
        %778 = vst.msk [vmem:[%s5 + $0x18] sm:$0xff] %vm774, 0.0
        %779 = vst.msk [vmem:[%s5 + $0x20] sm:$0xff] %vm774, 0.0
        %780 = vst.msk [vmem:[%s5 + $0x28] sm:$0xff] %vm774, 0.0
        %781 = vst.msk [vmem:[%s5 + $0x30] sm:$0xff] %vm774, 0.0
        %782 = vst.msk [vmem:[%s5 + $0x38] sm:$0xff] %vm774, 0.0
        %783 = vst.msk [vmem:[%s5 + $0x40] sm:$0xff] %vm774, 0.0
        %784 = vst.msk [vmem:[%s5 + $0x48] sm:$0xff] %vm774, 0.0
        %785 = vst.msk [vmem:[%s5 + $0x50] sm:$0xff] %vm774, 0.0
        %786 = vst.msk [vmem:[%s5 + $0x58] sm:$0xff] %vm774, 0.0
        %787 = vst.msk [vmem:[%s5 + $0x60] sm:$0xff] %vm774, 0.0
        %788 = vst.msk [vmem:[%s5 + $0x68] sm:$0xff] %vm774, 0.0
        %789 = vst.msk [vmem:[%s5 + $0x70] sm:$0xff] %vm774, 0.0
        %790 = vst.msk [vmem:[%s5 + $0x78] sm:$0xff] %vm774, 0.0
        %791 = vst.msk [vmem:[%s6] sm:$0xff] %vm774, 0.0
        %792 = vst.msk [vmem:[%s6 + $0x8] sm:$0xff] %vm774, 0.0
        %793 = vst.msk [vmem:[%s6 + $0x10] sm:$0xff] %vm774, 0.0
        %794 = vst.msk [vmem:[%s6 + $0x18] sm:$0xff] %vm774, 0.0
        %795 = vst.msk [vmem:[%s6 + $0x20] sm:$0xff] %vm774, 0.0
        %796 = vst.msk [vmem:[%s6 + $0x28] sm:$0xff] %vm774, 0.0
        %797 = vst.msk [vmem:[%s6 + $0x30] sm:$0xff] %vm774, 0.0
        %798 = vst.msk [vmem:[%s6 + $0x38] sm:$0xff] %vm774, 0.0
        %799 = vst.msk [vmem:[%s6 + $0x40] sm:$0xff] %vm774, 0.0
        %800 = vst.msk [vmem:[%s6 + $0x48] sm:$0xff] %vm774, 0.0
        %801 = vst.msk [vmem:[%s6 + $0x50] sm:$0xff] %vm774, 0.0
        %802 = vst.msk [vmem:[%s6 + $0x58] sm:$0xff] %vm774, 0.0
        %803 = vst.msk [vmem:[%s6 + $0x60] sm:$0xff] %vm774, 0.0
        %804 = vst.msk [vmem:[%s6 + $0x68] sm:$0xff] %vm774, 0.0
        %805 = vst.msk [vmem:[%s6 + $0x70] sm:$0xff] %vm774, 0.0
        %806 = vst.msk [vmem:[%s6 + $0x78] sm:$0xff] %vm774, 0.0
      $region40: #{bottleneck_forward.6} parent=35 // pred_fallthru
        _
      %v807 = vld [vmem:[%s5] sm:$0xff]
      %v808 = vld [vmem:[%s5 + $0x8] sm:$0xff]
      %v809 = vld [vmem:[%s5 + $0x10] sm:$0xff]
      %v810 = vld [vmem:[%s5 + $0x18] sm:$0xff]
      %v811 = vld [vmem:[%s5 + $0x20] sm:$0xff]
      %v812 = vld [vmem:[%s5 + $0x28] sm:$0xff]
      %v813 = vld [vmem:[%s5 + $0x30] sm:$0xff]
      %v814 = vld [vmem:[%s5 + $0x38] sm:$0xff]
      %v815 = vld [vmem:[%s5 + $0x40] sm:$0xff]
      %v816 = vld [vmem:[%s5 + $0x48] sm:$0xff]
      %v817 = vld [vmem:[%s5 + $0x50] sm:$0xff]
      %v818 = vld [vmem:[%s5 + $0x58] sm:$0xff]
      %v819 = vld [vmem:[%s5 + $0x60] sm:$0xff]
      %v820 = vld [vmem:[%s5 + $0x68] sm:$0xff]
      %v821 = vld [vmem:[%s5 + $0x70] sm:$0xff]
      %v822 = vld [vmem:[%s5 + $0x78] sm:$0xff]
      %vm823 = vcmask 130048
      %v824 = vsel %vm823, %v627, 0.0
      %825 = vadd.xlane.f32.xlu0 %v824
      %v826 = vpop.xlane.xlu0 %825
      %v827 = vsel %vm823, %v630, 0.0
      %828 = vadd.xlane.f32.xlu0 %v827
      %v829 = vpop.xlane.xlu0 %828
      %v830 = vsel %vm823, %v635, 0.0
      %831 = vadd.xlane.f32.xlu0 %v830
      %v832 = vpop.xlane.xlu0 %831
      %v833 = vsel %vm823, %v638, 0.0
      %834 = vadd.xlane.f32.xlu0 %v833
      %v835 = vpop.xlane.xlu0 %834
      %v836 = vsel %vm823, %v643, 0.0
      %837 = vadd.xlane.f32.xlu0 %v836
      %v838 = vpop.xlane.xlu0 %837
      %v839 = vsel %vm823, %v646, 0.0
      %840 = vadd.xlane.f32.xlu0 %v839
      %v841 = vpop.xlane.xlu0 %840
      %v842 = vsel %vm823, %v651, 0.0
      %843 = vadd.xlane.f32.xlu0 %v842
      %v844 = vpop.xlane.xlu0 %843
      %v845 = vsel %vm823, %v654, 0.0
      %846 = vadd.xlane.f32.xlu0 %v845
      %v847 = vpop.xlane.xlu0 %846
      %v848 = vsel %vm823, %v659, 0.0
      %849 = vadd.xlane.f32.xlu0 %v848
      %v850 = vpop.xlane.xlu0 %849
      %v851 = vsel %vm823, %v662, 0.0
      %852 = vadd.xlane.f32.xlu0 %v851
      %v853 = vpop.xlane.xlu0 %852
      %v854 = vsel %vm823, %v667, 0.0
      %855 = vadd.xlane.f32.xlu0 %v854
      %v856 = vpop.xlane.xlu0 %855
      %v857 = vsel %vm823, %v670, 0.0
      %858 = vadd.xlane.f32.xlu0 %v857
      %v859 = vpop.xlane.xlu0 %858
      %v860 = vsel %vm823, %v675, 0.0
      %861 = vadd.xlane.f32.xlu0 %v860
      %v862 = vpop.xlane.xlu0 %861
      %v863 = vsel %vm823, %v678, 0.0
      %864 = vadd.xlane.f32.xlu0 %v863
      %v865 = vpop.xlane.xlu0 %864
      %v866 = vsel %vm823, %v683, 0.0
      %867 = vadd.xlane.f32.xlu0 %v866
      %v868 = vpop.xlane.xlu0 %867
      %v869 = vsel %vm823, %v686, 0.0
      %870 = vadd.xlane.f32.xlu0 %v869
      %v871 = vpop.xlane.xlu0 %870
      %v872 = vadd.f32 %v807, %v826
      %v873 = vadd.f32 %v808, %v829
      %v874 = vadd.f32 %v809, %v832
      %v875 = vadd.f32 %v810, %v835
      %v876 = vadd.f32 %v811, %v838
      %v877 = vadd.f32 %v812, %v841
      %v878 = vadd.f32 %v813, %v844
      %v879 = vadd.f32 %v814, %v847
      %v880 = vadd.f32 %v815, %v850
      %v881 = vadd.f32 %v816, %v853
      %v882 = vadd.f32 %v817, %v856
      %v883 = vadd.f32 %v818, %v859
      %v884 = vadd.f32 %v819, %v862
      %v885 = vadd.f32 %v820, %v865
      %v886 = vadd.f32 %v821, %v868
      %v887 = vadd.f32 %v822, %v871
      %vm888 = vcmask 7168
      %889 = vst.msk [vmem:[%s5] sm:$0xff] %vm888, %v872
      %890 = vst.msk [vmem:[%s5 + $0x8] sm:$0xff] %vm888, %v873
      %891 = vst.msk [vmem:[%s5 + $0x10] sm:$0xff] %vm888, %v874
      %892 = vst.msk [vmem:[%s5 + $0x18] sm:$0xff] %vm888, %v875
      %893 = vst.msk [vmem:[%s5 + $0x20] sm:$0xff] %vm888, %v876
      %894 = vst.msk [vmem:[%s5 + $0x28] sm:$0xff] %vm888, %v877
      %895 = vst.msk [vmem:[%s5 + $0x30] sm:$0xff] %vm888, %v878
      %896 = vst.msk [vmem:[%s5 + $0x38] sm:$0xff] %vm888, %v879
      %897 = vst.msk [vmem:[%s5 + $0x40] sm:$0xff] %vm888, %v880
      %898 = vst.msk [vmem:[%s5 + $0x48] sm:$0xff] %vm888, %v881
      %899 = vst.msk [vmem:[%s5 + $0x50] sm:$0xff] %vm888, %v882
      %900 = vst.msk [vmem:[%s5 + $0x58] sm:$0xff] %vm888, %v883
      %901 = vst.msk [vmem:[%s5 + $0x60] sm:$0xff] %vm888, %v884
      %902 = vst.msk [vmem:[%s5 + $0x68] sm:$0xff] %vm888, %v885
      %903 = vst.msk [vmem:[%s5 + $0x70] sm:$0xff] %vm888, %v886
      %904 = vst.msk [vmem:[%s5 + $0x78] sm:$0xff] %vm888, %v887
      %v905 = vld [vmem:[%s6] sm:$0xff]
      %v906 = vld [vmem:[%s6 + $0x8] sm:$0xff]
      %v907 = vld [vmem:[%s6 + $0x10] sm:$0xff]
      %v908 = vld [vmem:[%s6 + $0x18] sm:$0xff]
      %v909 = vld [vmem:[%s6 + $0x20] sm:$0xff]
      %v910 = vld [vmem:[%s6 + $0x28] sm:$0xff]
      %v911 = vld [vmem:[%s6 + $0x30] sm:$0xff]
      %v912 = vld [vmem:[%s6 + $0x38] sm:$0xff]
      %v913 = vld [vmem:[%s6 + $0x40] sm:$0xff]
      %v914 = vld [vmem:[%s6 + $0x48] sm:$0xff]
      %v915 = vld [vmem:[%s6 + $0x50] sm:$0xff]
      %v916 = vld [vmem:[%s6 + $0x58] sm:$0xff]
      %v917 = vld [vmem:[%s6 + $0x60] sm:$0xff]
      %v918 = vld [vmem:[%s6 + $0x68] sm:$0xff]
      %v919 = vld [vmem:[%s6 + $0x70] sm:$0xff]
      %v920 = vld [vmem:[%s6 + $0x78] sm:$0xff]
      %v921 = vmul.f32 %v627, %v627
      %v922 = vmul.f32 %v630, %v630
      %v923 = vmul.f32 %v635, %v635
      %v924 = vmul.f32 %v638, %v638
      %v925 = vmul.f32 %v643, %v643
      %v926 = vmul.f32 %v646, %v646
      %v927 = vmul.f32 %v651, %v651
      %v928 = vmul.f32 %v654, %v654
      %v929 = vmul.f32 %v659, %v659
      %v930 = vmul.f32 %v662, %v662
      %v931 = vmul.f32 %v667, %v667
      %v932 = vmul.f32 %v670, %v670
      %v933 = vmul.f32 %v675, %v675
      %v934 = vmul.f32 %v678, %v678
      %v935 = vmul.f32 %v683, %v683
      %v936 = vmul.f32 %v686, %v686
      %v937 = vsel %vm823, %v921, 0.0
      %938 = vadd.xlane.f32.xlu0 %v937
      %v939 = vpop.xlane.xlu0 %938
      %v940 = vsel %vm823, %v922, 0.0
      %941 = vadd.xlane.f32.xlu0 %v940
      %v942 = vpop.xlane.xlu0 %941
      %v943 = vsel %vm823, %v923, 0.0
      %944 = vadd.xlane.f32.xlu0 %v943
      %v945 = vpop.xlane.xlu0 %944
      %v946 = vsel %vm823, %v924, 0.0
      %947 = vadd.xlane.f32.xlu0 %v946
      %v948 = vpop.xlane.xlu0 %947
      %v949 = vsel %vm823, %v925, 0.0
      %950 = vadd.xlane.f32.xlu0 %v949
      %v951 = vpop.xlane.xlu0 %950
      %v952 = vsel %vm823, %v926, 0.0
      %953 = vadd.xlane.f32.xlu0 %v952
      %v954 = vpop.xlane.xlu0 %953
      %v955 = vsel %vm823, %v927, 0.0
      %956 = vadd.xlane.f32.xlu0 %v955
      %v957 = vpop.xlane.xlu0 %956
      %v958 = vsel %vm823, %v928, 0.0
      %959 = vadd.xlane.f32.xlu0 %v958
      %v960 = vpop.xlane.xlu0 %959
      %v961 = vsel %vm823, %v929, 0.0
      %962 = vadd.xlane.f32.xlu0 %v961
      %v963 = vpop.xlane.xlu0 %962
      %v964 = vsel %vm823, %v930, 0.0
      %965 = vadd.xlane.f32.xlu0 %v964
      %v966 = vpop.xlane.xlu0 %965
      %v967 = vsel %vm823, %v931, 0.0
      %968 = vadd.xlane.f32.xlu0 %v967
      %v969 = vpop.xlane.xlu0 %968
      %v970 = vsel %vm823, %v932, 0.0
      %971 = vadd.xlane.f32.xlu0 %v970
      %v972 = vpop.xlane.xlu0 %971
      %v973 = vsel %vm823, %v933, 0.0
      %974 = vadd.xlane.f32.xlu0 %v973
      %v975 = vpop.xlane.xlu0 %974
      %v976 = vsel %vm823, %v934, 0.0
      %977 = vadd.xlane.f32.xlu0 %v976
      %v978 = vpop.xlane.xlu0 %977
      %v979 = vsel %vm823, %v935, 0.0
      %980 = vadd.xlane.f32.xlu0 %v979
      %v981 = vpop.xlane.xlu0 %980
      %v982 = vsel %vm823, %v936, 0.0
      %983 = vadd.xlane.f32.xlu0 %v982
      %v984 = vpop.xlane.xlu0 %983
      %v985 = vadd.f32 %v905, %v939
      %v986 = vadd.f32 %v906, %v942
      %v987 = vadd.f32 %v907, %v945
      %v988 = vadd.f32 %v908, %v948
      %v989 = vadd.f32 %v909, %v951
      %v990 = vadd.f32 %v910, %v954
      %v991 = vadd.f32 %v911, %v957
      %v992 = vadd.f32 %v912, %v960
      %v993 = vadd.f32 %v913, %v963
      %v994 = vadd.f32 %v914, %v966
      %v995 = vadd.f32 %v915, %v969
      %v996 = vadd.f32 %v916, %v972
      %v997 = vadd.f32 %v917, %v975
      %v998 = vadd.f32 %v918, %v978
      %v999 = vadd.f32 %v919, %v981
      %v1000 = vadd.f32 %v920, %v984
      %1001 = vst.msk [vmem:[%s6] sm:$0xff] %vm888, %v985
      %1002 = vst.msk [vmem:[%s6 + $0x8] sm:$0xff] %vm888, %v986
      %1003 = vst.msk [vmem:[%s6 + $0x10] sm:$0xff] %vm888, %v987
      %1004 = vst.msk [vmem:[%s6 + $0x18] sm:$0xff] %vm888, %v988
      %1005 = vst.msk [vmem:[%s6 + $0x20] sm:$0xff] %vm888, %v989
      %1006 = vst.msk [vmem:[%s6 + $0x28] sm:$0xff] %vm888, %v990
      %1007 = vst.msk [vmem:[%s6 + $0x30] sm:$0xff] %vm888, %v991
      %1008 = vst.msk [vmem:[%s6 + $0x38] sm:$0xff] %vm888, %v992
      %1009 = vst.msk [vmem:[%s6 + $0x40] sm:$0xff] %vm888, %v993
      %1010 = vst.msk [vmem:[%s6 + $0x48] sm:$0xff] %vm888, %v994
      %1011 = vst.msk [vmem:[%s6 + $0x50] sm:$0xff] %vm888, %v995
      %1012 = vst.msk [vmem:[%s6 + $0x58] sm:$0xff] %vm888, %v996
      %1013 = vst.msk [vmem:[%s6 + $0x60] sm:$0xff] %vm888, %v997
      %1014 = vst.msk [vmem:[%s6 + $0x68] sm:$0xff] %vm888, %v998
      %1015 = vst.msk [vmem:[%s6 + $0x70] sm:$0xff] %vm888, %v999
      %1016 = vst.msk [vmem:[%s6 + $0x78] sm:$0xff] %vm888, %v1000
      %p1017 = scmp.lt.s32.totalorder %s18, 1
      %s1018 = scalar_select %p1017, %s18, 1
      %s1019 = smul.addr %s1018, 16
      %s1020 = smul.addr %s1019, 4
      %s1021 = scalar_lea.vmem %s4, %s1020
      // Predicated region
      $region41: #{bottleneck_forward.6} parent=35 // pred_check
        %p1022 = pneg %p125
      $region42: #{bottleneck_forward.6} parent=35 // pred_check_branch
        %1024 = sbr.rel (%p1022) target = $region44
      $region43: #{bottleneck_forward.6} parent=35 // pred_region
        _
      $region44: #{bottleneck_forward.6} parent=35 // pred_fallthru
        _
      // Predicated region
      $region45: #{bottleneck_forward.6} parent=35 // pred_check
        %p1025 = pneg %p146
      $region46: #{bottleneck_forward.6} parent=35 // pred_check_branch
        %1027 = sbr.rel (%p1025) target = $region48
      $region47: #{bottleneck_forward.6} parent=35 // pred_region
        _
      $region48: #{bottleneck_forward.6} parent=35 // pred_fallthru
        _
      // Predicated region
      $region49: #{bottleneck_forward.6} parent=35 // pred_check
        %p1028 = pneg %p167
      $region50: #{bottleneck_forward.6} parent=35 // pred_check_branch
        %1030 = sbr.rel (%p1028) target = $region52
      $region51: #{bottleneck_forward.6} parent=35 // pred_region
        _
      $region52: #{bottleneck_forward.6} parent=35 // pred_fallthru
        _
      // Predicated region
      $region53: #{bottleneck_forward.6} parent=35 // pred_check
        %p1031 = pneg %p146
      $region54: #{bottleneck_forward.6} parent=35 // pred_check_branch
        %1033 = sbr.rel (%p1031) target = $region56
      $region55: #{bottleneck_forward.6} parent=35 // pred_region
        _
      $region56: #{bottleneck_forward.6} parent=35 // pred_fallthru
        _
      // Predicated region
      $region57: #{bottleneck_forward.6} parent=35 // pred_check
        %p1034 = pneg %p167
      $region58: #{bottleneck_forward.6} parent=35 // pred_check_branch
        %1036 = sbr.rel (%p1034) target = $region60
      $region59: #{bottleneck_forward.6} parent=35 // pred_region
        _
      $region60: #{bottleneck_forward.6} parent=35 // pred_fallthru
        _
    $region36: #{bottleneck_forward.6} parent=5 // pred_fallthru
      _
    %p1037 = scmp.le.s32.totalorder 2, %s13
    // Predicated region
    $region61: #{bottleneck_forward.6} parent=5 // pred_check
      %p1038 = pneg %p1037
    $region62: #{bottleneck_forward.6} parent=5 // pred_check_branch
      %1040 = sbr.rel (%p1038) target = $region64
    $region63: #{bottleneck_forward.6} parent=5 // pred_region
      %s1041 = ssub.s32 %s13, 2
      // Predicated region
      $region65: #{bottleneck_forward.6} parent=63 // pred_check
        %p1042 = pneg %p131
      $region66: #{bottleneck_forward.6} parent=63 // pred_check_branch
        %1044 = sbr.rel (%p1042) target = $region68
      $region67: #{bottleneck_forward.6} parent=63 // pred_region
        %p1045 = scmp.lt.s32.totalorder %s19, 1
        %s1046 = scalar_select %p1045, %s19, 1
        %s1047 = smul.addr %s1046, 16
        %s1048 = smul.addr %s1047, 4
        %s1049 = scalar_lea.vmem %s4, %s1048
      $region68: #{bottleneck_forward.6} parent=63 // pred_fallthru
        _
    $region64: #{bottleneck_forward.6} parent=5 // pred_fallthru
      _
  $region6: #{bottleneck_forward.6} parent=0 // loop_footer
    %s17 = sadd.s32 1, %s13
  $region7: #{bottleneck_forward.6} parent=0 // loop_footer_branch
    %12 = sbr.rel target = $region3
  $region8: #{bottleneck_forward.6} parent=0 // loop_exit
    _

</llo_original>
